<compile_context>
chip_gen: v7x
topology: tpu7x:2x2x1
jax: 0.10.0
libtpu: 0.0.40
codegen_flags: <defaults>
</compile_context>

<pallas_src>
import math
import functools

import jax
import jax.numpy as jnp
from jax.experimental import pallas as pl
from jax.experimental.pallas import tpu as pltpu

EPS = 1e-5                      # nn.LayerNorm default
INV_SQRT2 = 1.0 / math.sqrt(2.0)
GELU_C = math.sqrt(2.0 / math.pi)


def encoder_block_kernel(src_ref, bias_ref,
                         wqkv_ref, bqkv_ref,
                         wo_ref, bo_ref,
                         g1_ref, be1_ref,
                         w1_ref, b1_ref, w2_ref, b2_ref,
                         g2_ref, be2_ref,
                         out_ref, *, heads):
    f32 = jnp.float32
    bf16 = jnp.bfloat16

    Bt, S, D = src_ref.shape
    rows = Bt * S
    dk = D // heads

    x = src_ref[...].reshape(rows, D)                 # (rows, D) f32
    xb = x.astype(bf16)

    # --- fused QKV projection: one lane-dense matmul; 1/sqrt(dk) pre-folded --
    qkv = jnp.dot(xb, wqkv_ref[...], preferred_element_type=f32) + bqkv_ref[...]
    qkv = qkv.astype(bf16).reshape(Bt, S, 3 * D)      # (Bt, S, 3D)

    # --- split heads once: (Bt, S, 3D) -> three (heads*Bt, S, dk) operands ---
    def split(which):
        cols = [qkv[:, :, (which * heads + h) * dk:(which * heads + h + 1) * dk]
                for h in range(heads)]                # each (Bt, S, dk)
        return jnp.stack(cols, axis=0).reshape(heads * Bt, S, dk)

    q = split(0)
    k = split(1)
    v = split(2)

    # --- attention, batched over the single leading (heads*Bt) axis ----------
    s = jnp.einsum('bqd,bkd->bqk', q, k, preferred_element_type=f32)
    s = s.reshape(heads, Bt, S, S) + bias_ref[...].astype(f32)[None]
    s = s.reshape(heads * Bt, S, S)
    m = jnp.max(s, axis=-1, keepdims=True)
    e = jnp.exp(s - m)
    p = e * pl.reciprocal(jnp.sum(e, axis=-1, keepdims=True), approx=True)

    o = jnp.einsum('bqk,bkd->bqd', p.astype(bf16), v,
                   preferred_element_type=f32)        # (heads*Bt, S, dk)
    o = o.reshape(heads, Bt, S, dk)

    # --- concat heads, single full-contraction-depth output projection ------
    o_cat = jnp.concatenate([o[h] for h in range(heads)], axis=-1)   # (Bt,S,D)
    att = jnp.dot(o_cat.reshape(rows, D).astype(bf16), wo_ref[...],
                  preferred_element_type=f32) + bo_ref[...]          # (rows,D)

    # --- residual + LayerNorm 1 (f32) ----------------------------------------
    xr = att + x
    mu = jnp.mean(xr, axis=-1, keepdims=True)
    var = jnp.mean(jnp.square(xr - mu), axis=-1, keepdims=True)
    n1 = (xr - mu) * jax.lax.rsqrt(var + EPS) * g1_ref[...] + be1_ref[...]

    # --- MLP: Linear -> GELU (tanh approx, EUP) -> Linear --------------------
    h1 = jnp.dot(n1.astype(bf16), w1_ref[...],
                 preferred_element_type=f32) + b1_ref[...]
    h1 = 0.5 * h1 * (1.0 + jnp.tanh(GELU_C * (h1 + 0.044715 * h1 * h1 * h1)))
    mlp = jnp.dot(h1.astype(bf16), w2_ref[...],
                  preferred_element_type=f32) + b2_ref[...]

    # --- residual + LayerNorm 2 (f32) ----------------------------------------
    y = mlp + n1
    mu2 = jnp.mean(y, axis=-1, keepdims=True)
    var2 = jnp.mean(jnp.square(y - mu2), axis=-1, keepdims=True)
    out = (y - mu2) * jax.lax.rsqrt(var2 + EPS) * g2_ref[...] + be2_ref[...]

    out_ref[...] = out.reshape(Bt, S, D)


def _pick_block_b(B, S, heads, target_rows=256, score_budget=8 << 20):
    """Batch elements folded per grid step: fill >=256 MXU rows if possible,
    otherwise collapse the grid (small B*S: per-step overhead dominates),
    subject to a rough VMEM budget for the f32 score matrix."""
    divisors = [d for d in range(1, B + 1) if B % d == 0]
    fits = [d for d in divisors if heads * d * S * S * 4 <= score_budget] or [1]
    full = [d for d in fits if d * S >= target_rows]
    return min(full) if full else max(fits)


def encoder_block(src, mask, params, *, heads, block_b=None):
    B, S, D = src.shape
    H = params["w1"].shape[-1]
    assert D % heads == 0
    dk = D // heads
    scale = 1.0 / math.sqrt(dk)
    bf16 = jnp.bfloat16
    f32 = jnp.float32

    if block_b is None:
        block_b = _pick_block_b(B, S, heads)
    assert B % block_b == 0
    nb = B // block_b

    # ---- pre-process params: fused bf16 QKV weight, scale folded into Wq ----
    wqkv = jnp.concatenate(
        [params["wq"] * scale, params["wk"], params["wv"]], axis=1).astype(bf16)
    bqkv = jnp.concatenate(
        [params["bq"] * scale, params["bk"], params["bv"]], axis=1).astype(f32)
    wo = params["wo"].astype(bf16)
    w1 = params["w1"].astype(bf16)
    w2 = params["w2"].astype(bf16)

    # Additive attention bias precomputed in bf16 (half the mask DMA / VMEM).
    bias = jnp.where(mask == 0.0, -1e30, 0.0).astype(bf16)           # (B, S, S)

    flat = [wqkv, bqkv, wo, params["bo"],
            params["g1"], params["be1"],
            w1, params["b1"], w2, params["b2"],
            params["g2"], params["be2"]]

    def rep(shape):
        zeros = (0,) * len(shape)
        # Constant index_map -> single buffer (double buffering is VMEM waste).
        return pl.BlockSpec(shape, lambda b, z=zeros: z,
                            pipeline_mode=pl.Buffered(1))

    in_specs = [
        pl.BlockSpec((block_b, S, D), lambda b: (b, 0, 0)),   # src
        pl.BlockSpec((block_b, S, S), lambda b: (b, 0, 0)),   # additive bias
        rep((D, 3 * D)), rep((1, 3 * D)),                     # W_qkv, b_qkv
        rep((D, D)), rep((1, D)),                             # W_o, b_o
        rep((1, D)), rep((1, D)),                             # ln1 gamma, beta
        rep((D, H)), rep((1, H)),                             # mlp W1, b1
        rep((H, D)), rep((1, D)),                             # mlp W2, b2
        rep((1, D)), rep((1, D)),                             # ln2 gamma, beta
    ]

    # ---- derive a per-chip VMEM limit (<= ~62.5% of physical VMEM) ----------
    def nbytes(a):
        return a.size * a.dtype.itemsize

    rows = block_b * S
    weight_bytes = sum(nbytes(a) for a in flat)
    block_bytes = 2 * (rows * D * 4 + block_b * S * S * 2 + rows * D * 4)
    act_bytes = (rows * 3 * D * 6                      # qkv f32 + bf16 copy
                 + 3 * heads * rows * dk * 2           # split q/k/v bf16
                 + 3 * heads * block_b * S * S * 4     # s / e / p f32
                 + rows * (8 * D + 8 * H))             # LN / MLP intermediates
    needed = int(1.5 * (weight_bytes + block_bytes + act_bytes))
    try:
        phys = pltpu.get_tpu_info().vmem_capacity_bytes
    except Exception:                                  # pragma: no cover
        phys = 64 * 1024 * 1024                        # assume v7x (smallest)
    vmem_limit = max(32 * 1024 * 1024, min(needed, int(phys * 0.625)))

    return pl.pallas_call(
        functools.partial(encoder_block_kernel, heads=heads),
        out_shape=jax.ShapeDtypeStruct((B, S, D), f32),
        grid_spec=pltpu.PrefetchScalarGridSpec(
            num_scalar_prefetch=0,
            grid=(nb,),
            in_specs=in_specs,
            out_specs=pl.BlockSpec((block_b, S, D), lambda b: (b, 0, 0)),
        ),
        compiler_params=pltpu.CompilerParams(
            dimension_semantics=("parallel",),
            vmem_limit_bytes=vmem_limit,
        ),
    )(src, bias, *flat)


# --------------------------- pure-JAX reference (f32) ---------------------
def ref_forward(src, mask, P, heads):
    B, S, D = src.shape
    dk = D // heads

    def split(x):
        return x.reshape(B, S, heads, dk).transpose(0, 2, 1, 3)

    q = split(src @ P["wq"] + P["bq"])
    k = split(src @ P["wk"] + P["bk"])
    v = split(src @ P["wv"] + P["bv"])
    s = jnp.einsum("bhqd,bhkd->bhqk", q, k) / math.sqrt(dk)
    s = jnp.where(mask[:, None, :, :] == 0, -jnp.inf, s)
    a = jax.nn.softmax(s, axis=-1)
    o = jnp.einsum("bhqk,bhkd->bhqd", a, v).transpose(0, 2, 1, 3).reshape(B, S, D)
    o = o @ P["wo"] + P["bo"]

    def ln(x, g, b):
        mu = x.mean(-1, keepdims=True)
        var = ((x - mu) ** 2).mean(-1, keepdims=True)
        return (x - mu) / jnp.sqrt(var + EPS) * g + b

    n1 = ln(o + src, P["g1"], P["be1"])
    h = n1 @ P["w1"] + P["b1"]
    h = 0.5 * h * (1.0 + jax.lax.erf(h * INV_SQRT2))   # exact GELU (module spec)
    m = h @ P["w2"] + P["b2"]
    return ln(m + n1, P["g2"], P["be2"])


def init_params(key, d_model, hidden):
    ks = jax.random.split(key, 16)

    def w(k, fi, fo):
        return jax.random.normal(k, (fi, fo), jnp.float32) / math.sqrt(fi)

    def b(k, n):
        return 0.02 * jax.random.normal(k, (1, n), jnp.float32)

    return dict(
        wq=w(ks[0], d_model, d_model), bq=b(ks[1], d_model),
        wk=w(ks[2], d_model, d_model), bk=b(ks[3], d_model),
        wv=w(ks[4], d_model, d_model), bv=b(ks[5], d_model),
        wo=w(ks[6], d_model, d_model), bo=b(ks[7], d_model),
        g1=jnp.ones((1, d_model), jnp.float32) + 0.05 * jax.random.normal(ks[8], (1, d_model)),
        be1=b(ks[9], d_model),
        w1=w(ks[10], d_model, hidden), b1=b(ks[11], hidden),
        w2=w(ks[12], hidden, d_model), b2=b(ks[13], d_model),
        g2=jnp.ones((1, d_model), jnp.float32) + 0.05 * jax.random.normal(ks[14], (1, d_model)),
        be2=b(ks[15], d_model),
    )


if __name__ == "__main__":
    # Small shapes consistent with the module (d_model=256, heads=4).
    B, S, D, HEADS, HIDDEN = 2, 8, 256, 4, 512

    key = jax.random.PRNGKey(0)
    k_src, k_mask, k_par = jax.random.split(key, 3)

    src = jax.random.normal(k_src, (B, S, D), jnp.float32)
    mask = (jax.random.uniform(k_mask, (B, S, S)) > 0.3).astype(jnp.float32)
    mask = mask.at[:, jnp.arange(S), jnp.arange(S)].set(1.0)  # keep rows non-empty

    params = init_params(k_par, D, HIDDEN)

    out = encoder_block(src, mask, params, heads=HEADS)
    out = jax.block_until_ready(out)

    ref = ref_forward(src, mask, params, HEADS)
    assert out.shape == (B, S, D)
    # bf16 matmul operands (f32 accumulation) + tanh-GELU -> loose tolerance
    # vs the exact f32 reference.
    assert bool(jnp.allclose(out, ref, atol=1e-1, rtol=5e-2)), \
        "mismatch vs JAX reference"

    print("KERNEL_OK")
</pallas_src>

<mosaic_0001>
module attributes {stable_mosaic.version = 11 : i64} {
  func.func @encoder_block_kernel(%arg0: i32, %arg1: memref<2x8x256xf32, #tpu.memory_space<vmem>>, %arg2: memref<2x8x8xbf16, #tpu.memory_space<vmem>>, %arg3: memref<256x768xbf16, #tpu.memory_space<vmem>>, %arg4: memref<1x768xf32, #tpu.memory_space<vmem>>, %arg5: memref<256x256xbf16, #tpu.memory_space<vmem>>, %arg6: memref<1x256xf32, #tpu.memory_space<vmem>>, %arg7: memref<1x256xf32, #tpu.memory_space<vmem>>, %arg8: memref<1x256xf32, #tpu.memory_space<vmem>>, %arg9: memref<256x512xbf16, #tpu.memory_space<vmem>>, %arg10: memref<1x512xf32, #tpu.memory_space<vmem>>, %arg11: memref<512x256xbf16, #tpu.memory_space<vmem>>, %arg12: memref<1x256xf32, #tpu.memory_space<vmem>>, %arg13: memref<1x256xf32, #tpu.memory_space<vmem>>, %arg14: memref<1x256xf32, #tpu.memory_space<vmem>>, %arg15: memref<2x8x256xf32, #tpu.memory_space<vmem>>) attributes {dimension_semantics = [#tpu.dimension_semantics<parallel>], iteration_bounds = array<i64: 1>, scalar_prefetch = 0 : i64, scratch_operands = 0 : i64, tpu.core_type = #tpu.core_type<tc>, window_params = [{transform_indices = @transform_0, window_bounds = array<i64: 2, 8, 256>}, {transform_indices = @transform_1, window_bounds = array<i64: 2, 8, 8>}, {pipeline_mode = #tpu.pipeline_mode<synchronous>, transform_indices = @transform_2, window_bounds = array<i64: 256, 768>}, {pipeline_mode = #tpu.pipeline_mode<synchronous>, transform_indices = @transform_3, window_bounds = array<i64: 1, 768>}, {pipeline_mode = #tpu.pipeline_mode<synchronous>, transform_indices = @transform_4, window_bounds = array<i64: 256, 256>}, {pipeline_mode = #tpu.pipeline_mode<synchronous>, transform_indices = @transform_5, window_bounds = array<i64: 1, 256>}, {pipeline_mode = #tpu.pipeline_mode<synchronous>, transform_indices = @transform_6, window_bounds = array<i64: 1, 256>}, {pipeline_mode = #tpu.pipeline_mode<synchronous>, transform_indices = @transform_7, window_bounds = array<i64: 1, 256>}, {pipeline_mode = #tpu.pipeline_mode<synchronous>, transform_indices = @transform_8, window_bounds = array<i64: 256, 512>}, {pipeline_mode = #tpu.pipeline_mode<synchronous>, transform_indices = @transform_9, window_bounds = array<i64: 1, 512>}, {pipeline_mode = #tpu.pipeline_mode<synchronous>, transform_indices = @transform_10, window_bounds = array<i64: 512, 256>}, {pipeline_mode = #tpu.pipeline_mode<synchronous>, transform_indices = @transform_11, window_bounds = array<i64: 1, 256>}, {pipeline_mode = #tpu.pipeline_mode<synchronous>, transform_indices = @transform_12, window_bounds = array<i64: 1, 256>}, {pipeline_mode = #tpu.pipeline_mode<synchronous>, transform_indices = @transform_13, window_bounds = array<i64: 1, 256>}, {transform_indices = @transform_14, window_bounds = array<i64: 2, 8, 256>}]} {
    %c0 = arith.constant 0 : index
    %c0_0 = arith.constant 0 : index
    %c0_1 = arith.constant 0 : index
    %0 = vector.load %arg1[%c0, %c0_0, %c0_1] : memref<2x8x256xf32, #tpu.memory_space<vmem>>, vector<2x8x256xf32>
    %1 = vector.shape_cast %0 : vector<2x8x256xf32> to vector<16x256xf32>
    %2 = arith.truncf %1 : vector<16x256xf32> to vector<16x256xbf16>
    %c0_2 = arith.constant 0 : index
    %c0_3 = arith.constant 0 : index
    %3 = vector.load %arg3[%c0_2, %c0_3] : memref<256x768xbf16, #tpu.memory_space<vmem>>, vector<256x768xbf16>
    %cst = arith.constant dense<0.000000e+00> : vector<16x768xf32>
    %4 = tpu.matmul %2, %3, %cst {dimension_numbers = #tpu.dot_dimension_numbers<[1], [0], [0], [1], [0, 0, 1, 1], [], []>} : vector<16x256xbf16>, vector<256x768xbf16>, vector<16x768xf32> -> vector<16x768xf32>
    %c0_4 = arith.constant 0 : index
    %c0_5 = arith.constant 0 : index
    %5 = vector.load %arg4[%c0_4, %c0_5] : memref<1x768xf32, #tpu.memory_space<vmem>>, vector<1x768xf32>
    %6 = vector.broadcast %5 : vector<1x768xf32> to vector<16x768xf32>
    %7 = arith.addf %4, %6 : vector<16x768xf32>
    %8 = arith.truncf %7 : vector<16x768xf32> to vector<16x768xbf16>
    %9 = vector.shape_cast %8 : vector<16x768xbf16> to vector<2x8x768xbf16>
    %10 = vector.extract_strided_slice %9 {offsets = [0, 0, 0], sizes = [2, 8, 64], strides = [1, 1, 1]} : vector<2x8x768xbf16> to vector<2x8x64xbf16>
    %11 = vector.extract_strided_slice %9 {offsets = [0, 0, 64], sizes = [2, 8, 64], strides = [1, 1, 1]} : vector<2x8x768xbf16> to vector<2x8x64xbf16>
    %12 = vector.extract_strided_slice %9 {offsets = [0, 0, 128], sizes = [2, 8, 64], strides = [1, 1, 1]} : vector<2x8x768xbf16> to vector<2x8x64xbf16>
    %13 = vector.extract_strided_slice %9 {offsets = [0, 0, 192], sizes = [2, 8, 64], strides = [1, 1, 1]} : vector<2x8x768xbf16> to vector<2x8x64xbf16>
    %14 = vector.shape_cast %10 : vector<2x8x64xbf16> to vector<1x2x8x64xbf16>
    %15 = vector.shape_cast %11 : vector<2x8x64xbf16> to vector<1x2x8x64xbf16>
    %16 = vector.shape_cast %12 : vector<2x8x64xbf16> to vector<1x2x8x64xbf16>
    %17 = vector.shape_cast %13 : vector<2x8x64xbf16> to vector<1x2x8x64xbf16>
    %18 = tpu.concatenate %14, %15, %16, %17 in 0 : vector<1x2x8x64xbf16>, vector<1x2x8x64xbf16>, vector<1x2x8x64xbf16>, vector<1x2x8x64xbf16> -> vector<4x2x8x64xbf16>
    %19 = vector.shape_cast %18 : vector<4x2x8x64xbf16> to vector<8x8x64xbf16>
    %20 = vector.extract_strided_slice %9 {offsets = [0, 0, 256], sizes = [2, 8, 64], strides = [1, 1, 1]} : vector<2x8x768xbf16> to vector<2x8x64xbf16>
    %21 = vector.extract_strided_slice %9 {offsets = [0, 0, 320], sizes = [2, 8, 64], strides = [1, 1, 1]} : vector<2x8x768xbf16> to vector<2x8x64xbf16>
    %22 = vector.extract_strided_slice %9 {offsets = [0, 0, 384], sizes = [2, 8, 64], strides = [1, 1, 1]} : vector<2x8x768xbf16> to vector<2x8x64xbf16>
    %23 = vector.extract_strided_slice %9 {offsets = [0, 0, 448], sizes = [2, 8, 64], strides = [1, 1, 1]} : vector<2x8x768xbf16> to vector<2x8x64xbf16>
    %24 = vector.shape_cast %20 : vector<2x8x64xbf16> to vector<1x2x8x64xbf16>
    %25 = vector.shape_cast %21 : vector<2x8x64xbf16> to vector<1x2x8x64xbf16>
    %26 = vector.shape_cast %22 : vector<2x8x64xbf16> to vector<1x2x8x64xbf16>
    %27 = vector.shape_cast %23 : vector<2x8x64xbf16> to vector<1x2x8x64xbf16>
    %28 = tpu.concatenate %24, %25, %26, %27 in 0 : vector<1x2x8x64xbf16>, vector<1x2x8x64xbf16>, vector<1x2x8x64xbf16>, vector<1x2x8x64xbf16> -> vector<4x2x8x64xbf16>
    %29 = vector.shape_cast %28 : vector<4x2x8x64xbf16> to vector<8x8x64xbf16>
    %30 = vector.extract_strided_slice %9 {offsets = [0, 0, 512], sizes = [2, 8, 64], strides = [1, 1, 1]} : vector<2x8x768xbf16> to vector<2x8x64xbf16>
    %31 = vector.extract_strided_slice %9 {offsets = [0, 0, 576], sizes = [2, 8, 64], strides = [1, 1, 1]} : vector<2x8x768xbf16> to vector<2x8x64xbf16>
    %32 = vector.extract_strided_slice %9 {offsets = [0, 0, 640], sizes = [2, 8, 64], strides = [1, 1, 1]} : vector<2x8x768xbf16> to vector<2x8x64xbf16>
    %33 = vector.extract_strided_slice %9 {offsets = [0, 0, 704], sizes = [2, 8, 64], strides = [1, 1, 1]} : vector<2x8x768xbf16> to vector<2x8x64xbf16>
    %34 = vector.shape_cast %30 : vector<2x8x64xbf16> to vector<1x2x8x64xbf16>
    %35 = vector.shape_cast %31 : vector<2x8x64xbf16> to vector<1x2x8x64xbf16>
    %36 = vector.shape_cast %32 : vector<2x8x64xbf16> to vector<1x2x8x64xbf16>
    %37 = vector.shape_cast %33 : vector<2x8x64xbf16> to vector<1x2x8x64xbf16>
    %38 = tpu.concatenate %34, %35, %36, %37 in 0 : vector<1x2x8x64xbf16>, vector<1x2x8x64xbf16>, vector<1x2x8x64xbf16>, vector<1x2x8x64xbf16> -> vector<4x2x8x64xbf16>
    %39 = vector.shape_cast %38 : vector<4x2x8x64xbf16> to vector<8x8x64xbf16>
    "tpu.trace_start"() <{level = 10 : i32, message = "bqd,bkd->bqk"}> : () -> ()
    %cst_6 = arith.constant dense<0.000000e+00> : vector<8x8x8xf32>
    %40 = tpu.matmul %19, %29, %cst_6 {dimension_numbers = #tpu.dot_dimension_numbers<[2], [2], [1], [1], [0, 0, 0, 1, 1, 1], [0], [0]>} : vector<8x8x64xbf16>, vector<8x8x64xbf16>, vector<8x8x8xf32> -> vector<8x8x8xf32>
    "tpu.trace_stop"() : () -> ()
    %41 = vector.shape_cast %40 : vector<8x8x8xf32> to vector<4x2x8x8xf32>
    %c0_7 = arith.constant 0 : index
    %c0_8 = arith.constant 0 : index
    %c0_9 = arith.constant 0 : index
    %42 = vector.load %arg2[%c0_7, %c0_8, %c0_9] : memref<2x8x8xbf16, #tpu.memory_space<vmem>>, vector<2x8x8xbf16>
    %43 = arith.extf %42 : vector<2x8x8xbf16> to vector<2x8x8xf32>
    %44 = vector.shape_cast %43 : vector<2x8x8xf32> to vector<1x2x8x8xf32>
    %45 = vector.broadcast %44 : vector<1x2x8x8xf32> to vector<4x2x8x8xf32>
    %46 = arith.addf %41, %45 : vector<4x2x8x8xf32>
    %47 = vector.shape_cast %46 : vector<4x2x8x8xf32> to vector<8x8x8xf32>
    %cst_10 = arith.constant dense<0xFF800000> : vector<8x8xf32>
    %48 = vector.multi_reduction <maximumf>, %47, %cst_10 [2] : vector<8x8x8xf32> to vector<8x8xf32>
    %49 = vector.shape_cast %48 : vector<8x8xf32> to vector<8x8x1xf32>
    %50 = vector.broadcast %49 : vector<8x8x1xf32> to vector<8x8x8xf32>
    %51 = arith.subf %47, %50 : vector<8x8x8xf32>
    %52 = math.exp %51 : vector<8x8x8xf32>
    %cst_11 = arith.constant dense<0.000000e+00> : vector<8x8xf32>
    %53 = vector.multi_reduction <add>, %52, %cst_11 [2] : vector<8x8x8xf32> to vector<8x8xf32>
    %54 = vector.shape_cast %53 : vector<8x8xf32> to vector<8x8x1xf32>
    %55 = tpu.reciprocal %54 {approx = true} : vector<8x8x1xf32> -> vector<8x8x1xf32>
    %56 = vector.broadcast %55 : vector<8x8x1xf32> to vector<8x8x8xf32>
    %57 = arith.mulf %52, %56 : vector<8x8x8xf32>
    %58 = arith.truncf %57 : vector<8x8x8xf32> to vector<8x8x8xbf16>
    "tpu.trace_start"() <{level = 10 : i32, message = "bqk,bkd->bqd"}> : () -> ()
    %cst_12 = arith.constant dense<0.000000e+00> : vector<8x8x64xf32>
    %59 = tpu.matmul %58, %39, %cst_12 {dimension_numbers = #tpu.dot_dimension_numbers<[2], [1], [1], [2], [0, 0, 0, 1, 1, 2], [0], [0]>} : vector<8x8x8xbf16>, vector<8x8x64xbf16>, vector<8x8x64xf32> -> vector<8x8x64xf32>
    "tpu.trace_stop"() : () -> ()
    %60 = vector.shape_cast %59 : vector<8x8x64xf32> to vector<4x2x8x64xf32>
    %61 = vector.extract_strided_slice %60 {offsets = [0, 0, 0, 0], sizes = [1, 2, 8, 64], strides = [1, 1, 1, 1]} : vector<4x2x8x64xf32> to vector<1x2x8x64xf32>
    %62 = vector.shape_cast %61 : vector<1x2x8x64xf32> to vector<2x8x64xf32>
    %63 = vector.extract_strided_slice %60 {offsets = [1, 0, 0, 0], sizes = [1, 2, 8, 64], strides = [1, 1, 1, 1]} : vector<4x2x8x64xf32> to vector<1x2x8x64xf32>
    %64 = vector.shape_cast %63 : vector<1x2x8x64xf32> to vector<2x8x64xf32>
    %65 = vector.extract_strided_slice %60 {offsets = [2, 0, 0, 0], sizes = [1, 2, 8, 64], strides = [1, 1, 1, 1]} : vector<4x2x8x64xf32> to vector<1x2x8x64xf32>
    %66 = vector.shape_cast %65 : vector<1x2x8x64xf32> to vector<2x8x64xf32>
    %67 = vector.extract_strided_slice %60 {offsets = [3, 0, 0, 0], sizes = [1, 2, 8, 64], strides = [1, 1, 1, 1]} : vector<4x2x8x64xf32> to vector<1x2x8x64xf32>
    %68 = vector.shape_cast %67 : vector<1x2x8x64xf32> to vector<2x8x64xf32>
    %69 = tpu.concatenate %62, %64, %66, %68 in 2 : vector<2x8x64xf32>, vector<2x8x64xf32>, vector<2x8x64xf32>, vector<2x8x64xf32> -> vector<2x8x256xf32>
    %70 = vector.shape_cast %69 : vector<2x8x256xf32> to vector<16x256xf32>
    %71 = arith.truncf %70 : vector<16x256xf32> to vector<16x256xbf16>
    %c0_13 = arith.constant 0 : index
    %c0_14 = arith.constant 0 : index
    %72 = vector.load %arg5[%c0_13, %c0_14] : memref<256x256xbf16, #tpu.memory_space<vmem>>, vector<256x256xbf16>
    %cst_15 = arith.constant dense<0.000000e+00> : vector<16x256xf32>
    %73 = tpu.matmul %71, %72, %cst_15 {dimension_numbers = #tpu.dot_dimension_numbers<[1], [0], [0], [1], [0, 0, 1, 1], [], []>} : vector<16x256xbf16>, vector<256x256xbf16>, vector<16x256xf32> -> vector<16x256xf32>
    %c0_16 = arith.constant 0 : index
    %c0_17 = arith.constant 0 : index
    %74 = vector.load %arg6[%c0_16, %c0_17] : memref<1x256xf32, #tpu.memory_space<vmem>>, vector<1x256xf32>
    %75 = vector.broadcast %74 : vector<1x256xf32> to vector<16x256xf32>
    %76 = arith.addf %73, %75 : vector<16x256xf32>
    %77 = arith.addf %76, %1 : vector<16x256xf32>
    %cst_18 = arith.constant dense<0.000000e+00> : vector<16xf32>
    %78 = vector.multi_reduction <add>, %77, %cst_18 [1] : vector<16x256xf32> to vector<16xf32>
    %79 = vector.shape_cast %78 : vector<16xf32> to vector<16x1xf32>
    %cst_19 = arith.constant 2.560000e+02 : f32
    %80 = vector.broadcast %cst_19 : f32 to vector<16x1xf32>
    %81 = arith.divf %79, %80 : vector<16x1xf32>
    %82 = vector.broadcast %81 : vector<16x1xf32> to vector<16x256xf32>
    %83 = arith.subf %77, %82 : vector<16x256xf32>
    %84 = arith.mulf %83, %83 : vector<16x256xf32>
    %cst_20 = arith.constant dense<0.000000e+00> : vector<16xf32>
    %85 = vector.multi_reduction <add>, %84, %cst_20 [1] : vector<16x256xf32> to vector<16xf32>
    %86 = vector.shape_cast %85 : vector<16xf32> to vector<16x1xf32>
    %cst_21 = arith.constant 2.560000e+02 : f32
    %87 = vector.broadcast %cst_21 : f32 to vector<16x1xf32>
    %88 = arith.divf %86, %87 : vector<16x1xf32>
    %89 = vector.broadcast %81 : vector<16x1xf32> to vector<16x256xf32>
    %90 = arith.subf %77, %89 : vector<16x256xf32>
    %cst_22 = arith.constant 9.99999974E-6 : f32
    %91 = vector.broadcast %cst_22 : f32 to vector<16x1xf32>
    %92 = arith.addf %88, %91 : vector<16x1xf32>
    %93 = math.rsqrt %92 : vector<16x1xf32>
    %94 = vector.broadcast %93 : vector<16x1xf32> to vector<16x256xf32>
    %95 = arith.mulf %90, %94 : vector<16x256xf32>
    %c0_23 = arith.constant 0 : index
    %c0_24 = arith.constant 0 : index
    %96 = vector.load %arg7[%c0_23, %c0_24] : memref<1x256xf32, #tpu.memory_space<vmem>>, vector<1x256xf32>
    %97 = vector.broadcast %96 : vector<1x256xf32> to vector<16x256xf32>
    %98 = arith.mulf %95, %97 : vector<16x256xf32>
    %c0_25 = arith.constant 0 : index
    %c0_26 = arith.constant 0 : index
    %99 = vector.load %arg8[%c0_25, %c0_26] : memref<1x256xf32, #tpu.memory_space<vmem>>, vector<1x256xf32>
    %100 = vector.broadcast %99 : vector<1x256xf32> to vector<16x256xf32>
    %101 = arith.addf %98, %100 : vector<16x256xf32>
    %102 = arith.truncf %101 : vector<16x256xf32> to vector<16x256xbf16>
    %c0_27 = arith.constant 0 : index
    %c0_28 = arith.constant 0 : index
    %103 = vector.load %arg9[%c0_27, %c0_28] : memref<256x512xbf16, #tpu.memory_space<vmem>>, vector<256x512xbf16>
    %cst_29 = arith.constant dense<0.000000e+00> : vector<16x512xf32>
    %104 = tpu.matmul %102, %103, %cst_29 {dimension_numbers = #tpu.dot_dimension_numbers<[1], [0], [0], [1], [0, 0, 1, 1], [], []>} : vector<16x256xbf16>, vector<256x512xbf16>, vector<16x512xf32> -> vector<16x512xf32>
    %c0_30 = arith.constant 0 : index
    %c0_31 = arith.constant 0 : index
    %105 = vector.load %arg10[%c0_30, %c0_31] : memref<1x512xf32, #tpu.memory_space<vmem>>, vector<1x512xf32>
    %106 = vector.broadcast %105 : vector<1x512xf32> to vector<16x512xf32>
    %107 = arith.addf %104, %106 : vector<16x512xf32>
    %cst_32 = arith.constant 5.000000e-01 : f32
    %108 = vector.broadcast %cst_32 : f32 to vector<16x512xf32>
    %109 = arith.mulf %108, %107 : vector<16x512xf32>
    %cst_33 = arith.constant 4.471500e-02 : f32
    %110 = vector.broadcast %cst_33 : f32 to vector<16x512xf32>
    %111 = arith.mulf %110, %107 : vector<16x512xf32>
    %112 = arith.mulf %111, %107 : vector<16x512xf32>
    %113 = arith.mulf %112, %107 : vector<16x512xf32>
    %114 = arith.addf %107, %113 : vector<16x512xf32>
    %cst_34 = arith.constant 0.797884583 : f32
    %115 = vector.broadcast %cst_34 : f32 to vector<16x512xf32>
    %116 = arith.mulf %115, %114 : vector<16x512xf32>
    %117 = math.tanh %116 : vector<16x512xf32>
    %cst_35 = arith.constant 1.000000e+00 : f32
    %118 = vector.broadcast %cst_35 : f32 to vector<16x512xf32>
    %119 = arith.addf %118, %117 : vector<16x512xf32>
    %120 = arith.mulf %109, %119 : vector<16x512xf32>
    %121 = arith.truncf %120 : vector<16x512xf32> to vector<16x512xbf16>
    %c0_36 = arith.constant 0 : index
    %c0_37 = arith.constant 0 : index
    %122 = vector.load %arg11[%c0_36, %c0_37] : memref<512x256xbf16, #tpu.memory_space<vmem>>, vector<512x256xbf16>
    %cst_38 = arith.constant dense<0.000000e+00> : vector<16x256xf32>
    %123 = tpu.matmul %121, %122, %cst_38 {dimension_numbers = #tpu.dot_dimension_numbers<[1], [0], [0], [1], [0, 0, 1, 1], [], []>} : vector<16x512xbf16>, vector<512x256xbf16>, vector<16x256xf32> -> vector<16x256xf32>
    %c0_39 = arith.constant 0 : index
    %c0_40 = arith.constant 0 : index
    %124 = vector.load %arg12[%c0_39, %c0_40] : memref<1x256xf32, #tpu.memory_space<vmem>>, vector<1x256xf32>
    %125 = vector.broadcast %124 : vector<1x256xf32> to vector<16x256xf32>
    %126 = arith.addf %123, %125 : vector<16x256xf32>
    %127 = arith.addf %126, %101 : vector<16x256xf32>
    %cst_41 = arith.constant dense<0.000000e+00> : vector<16xf32>
    %128 = vector.multi_reduction <add>, %127, %cst_41 [1] : vector<16x256xf32> to vector<16xf32>
    %129 = vector.shape_cast %128 : vector<16xf32> to vector<16x1xf32>
    %cst_42 = arith.constant 2.560000e+02 : f32
    %130 = vector.broadcast %cst_42 : f32 to vector<16x1xf32>
    %131 = arith.divf %129, %130 : vector<16x1xf32>
    %132 = vector.broadcast %131 : vector<16x1xf32> to vector<16x256xf32>
    %133 = arith.subf %127, %132 : vector<16x256xf32>
    %134 = arith.mulf %133, %133 : vector<16x256xf32>
    %cst_43 = arith.constant dense<0.000000e+00> : vector<16xf32>
    %135 = vector.multi_reduction <add>, %134, %cst_43 [1] : vector<16x256xf32> to vector<16xf32>
    %136 = vector.shape_cast %135 : vector<16xf32> to vector<16x1xf32>
    %cst_44 = arith.constant 2.560000e+02 : f32
    %137 = vector.broadcast %cst_44 : f32 to vector<16x1xf32>
    %138 = arith.divf %136, %137 : vector<16x1xf32>
    %139 = vector.broadcast %131 : vector<16x1xf32> to vector<16x256xf32>
    %140 = arith.subf %127, %139 : vector<16x256xf32>
    %cst_45 = arith.constant 9.99999974E-6 : f32
    %141 = vector.broadcast %cst_45 : f32 to vector<16x1xf32>
    %142 = arith.addf %138, %141 : vector<16x1xf32>
    %143 = math.rsqrt %142 : vector<16x1xf32>
    %144 = vector.broadcast %143 : vector<16x1xf32> to vector<16x256xf32>
    %145 = arith.mulf %140, %144 : vector<16x256xf32>
    %c0_46 = arith.constant 0 : index
    %c0_47 = arith.constant 0 : index
    %146 = vector.load %arg13[%c0_46, %c0_47] : memref<1x256xf32, #tpu.memory_space<vmem>>, vector<1x256xf32>
    %147 = vector.broadcast %146 : vector<1x256xf32> to vector<16x256xf32>
    %148 = arith.mulf %145, %147 : vector<16x256xf32>
    %c0_48 = arith.constant 0 : index
    %c0_49 = arith.constant 0 : index
    %149 = vector.load %arg14[%c0_48, %c0_49] : memref<1x256xf32, #tpu.memory_space<vmem>>, vector<1x256xf32>
    %150 = vector.broadcast %149 : vector<1x256xf32> to vector<16x256xf32>
    %151 = arith.addf %148, %150 : vector<16x256xf32>
    %152 = vector.shape_cast %151 : vector<16x256xf32> to vector<2x8x256xf32>
    %c0_50 = arith.constant 0 : index
    %c0_51 = arith.constant 0 : index
    %c0_52 = arith.constant 0 : index
    %153 = vector.load %arg15[%c0_50, %c0_51, %c0_52] : memref<2x8x256xf32, #tpu.memory_space<vmem>>, vector<2x8x256xf32>
    tpu.vector_store %arg15[%c0_50, %c0_51, %c0_52], %152 {strides = array<i32>} : memref<2x8x256xf32, #tpu.memory_space<vmem>>, vector<2x8x256xf32>,
    return
  }
  func.func @transform_0(%arg0: i32) -> (i32, i32, i32) {
    %c0_i32 = arith.constant 0 : i32
    %c0_i32_0 = arith.constant 0 : i32
    %c0_i32_1 = arith.constant 0 : i32
    return %arg0, %c0_i32, %c0_i32_0 : i32, i32, i32
  }
  func.func @transform_1(%arg0: i32) -> (i32, i32, i32) {
    %c0_i32 = arith.constant 0 : i32
    %c0_i32_0 = arith.constant 0 : i32
    %c0_i32_1 = arith.constant 0 : i32
    return %arg0, %c0_i32, %c0_i32_0 : i32, i32, i32
  }
  func.func @transform_2(%arg0: i32) -> (i32, i32) {
    %c0_i32 = arith.constant 0 : i32
    %c0_i32_0 = arith.constant 0 : i32
    %c0_i32_1 = arith.constant 0 : i32
    return %c0_i32, %c0_i32_0 : i32, i32
  }
  func.func @transform_3(%arg0: i32) -> (i32, i32) {
    %c0_i32 = arith.constant 0 : i32
    %c0_i32_0 = arith.constant 0 : i32
    %c0_i32_1 = arith.constant 0 : i32
    return %c0_i32, %c0_i32_0 : i32, i32
  }
  func.func @transform_4(%arg0: i32) -> (i32, i32) {
    %c0_i32 = arith.constant 0 : i32
    %c0_i32_0 = arith.constant 0 : i32
    %c0_i32_1 = arith.constant 0 : i32
    return %c0_i32, %c0_i32_0 : i32, i32
  }
  func.func @transform_5(%arg0: i32) -> (i32, i32) {
    %c0_i32 = arith.constant 0 : i32
    %c0_i32_0 = arith.constant 0 : i32
    %c0_i32_1 = arith.constant 0 : i32
    return %c0_i32, %c0_i32_0 : i32, i32
  }
  func.func @transform_6(%arg0: i32) -> (i32, i32) {
    %c0_i32 = arith.constant 0 : i32
    %c0_i32_0 = arith.constant 0 : i32
    %c0_i32_1 = arith.constant 0 : i32
    return %c0_i32, %c0_i32_0 : i32, i32
  }
  func.func @transform_7(%arg0: i32) -> (i32, i32) {
    %c0_i32 = arith.constant 0 : i32
    %c0_i32_0 = arith.constant 0 : i32
    %c0_i32_1 = arith.constant 0 : i32
    return %c0_i32, %c0_i32_0 : i32, i32
  }
  func.func @transform_8(%arg0: i32) -> (i32, i32) {
    %c0_i32 = arith.constant 0 : i32
    %c0_i32_0 = arith.constant 0 : i32
    %c0_i32_1 = arith.constant 0 : i32
    return %c0_i32, %c0_i32_0 : i32, i32
  }
  func.func @transform_9(%arg0: i32) -> (i32, i32) {
    %c0_i32 = arith.constant 0 : i32
    %c0_i32_0 = arith.constant 0 : i32
    %c0_i32_1 = arith.constant 0 : i32
    return %c0_i32, %c0_i32_0 : i32, i32
  }
  func.func @transform_10(%arg0: i32) -> (i32, i32) {
    %c0_i32 = arith.constant 0 : i32
    %c0_i32_0 = arith.constant 0 : i32
    %c0_i32_1 = arith.constant 0 : i32
    return %c0_i32, %c0_i32_0 : i32, i32
  }
  func.func @transform_11(%arg0: i32) -> (i32, i32) {
    %c0_i32 = arith.constant 0 : i32
    %c0_i32_0 = arith.constant 0 : i32
    %c0_i32_1 = arith.constant 0 : i32
    return %c0_i32, %c0_i32_0 : i32, i32
  }
  func.func @transform_12(%arg0: i32) -> (i32, i32) {
    %c0_i32 = arith.constant 0 : i32
    %c0_i32_0 = arith.constant 0 : i32
    %c0_i32_1 = arith.constant 0 : i32
    return %c0_i32, %c0_i32_0 : i32, i32
  }
  func.func @transform_13(%arg0: i32) -> (i32, i32) {
    %c0_i32 = arith.constant 0 : i32
    %c0_i32_0 = arith.constant 0 : i32
    %c0_i32_1 = arith.constant 0 : i32
    return %c0_i32, %c0_i32_0 : i32, i32
  }
  func.func @transform_14(%arg0: i32) -> (i32, i32, i32) {
    %c0_i32 = arith.constant 0 : i32
    %c0_i32_0 = arith.constant 0 : i32
    %c0_i32_1 = arith.constant 0 : i32
    return %arg0, %c0_i32, %c0_i32_0 : i32, i32, i32
  }
}

</mosaic_0001>

<llo_original>
// kernel: tpu_custom_call.1
$region0: #{tpu_custom_call.1}
  #allocation0 [shape = 'u32[]', space=smem, size = 0x4, offset = 0x4, fixed_abs, tag = 'smem constant byte address 0x4 - core index']
  #allocation1 [shape = 'u32[144,128]{1,0:T(1,128)}', space=vmem, size = 0x12000, scoped, tag = 'internal scratch']
  %s0 = inlined_call_operand.hbm [shape: f32[2,8,256], index: 0, kind: input, shape index: {}]
  %s1 = inlined_call_operand.hbm [shape: bf16[2,8,8], index: 1, kind: input, shape index: {}]
  %s2 = inlined_call_operand.hbm [shape: bf16[256,768], index: 2, kind: input, shape index: {}]
  %s3 = inlined_call_operand.vmem [shape: f32[1,768], index: 3, kind: input, shape index: {}]
  %s4 = inlined_call_operand.hbm [shape: bf16[256,256], index: 4, kind: input, shape index: {}]
  %s5 = inlined_call_operand.vmem [shape: f32[1,256], index: 5, kind: input, shape index: {}]
  %s6 = inlined_call_operand.vmem [shape: f32[1,256], index: 6, kind: input, shape index: {}]
  %s7 = inlined_call_operand.vmem [shape: f32[1,256], index: 7, kind: input, shape index: {}]
  %s8 = inlined_call_operand.hbm [shape: bf16[256,512], index: 8, kind: input, shape index: {}]
  %s9 = inlined_call_operand.vmem [shape: f32[1,512], index: 9, kind: input, shape index: {}]
  %s10 = inlined_call_operand.hbm [shape: bf16[512,256], index: 10, kind: input, shape index: {}]
  %s11 = inlined_call_operand.vmem [shape: f32[1,256], index: 11, kind: input, shape index: {}]
  %s12 = inlined_call_operand.vmem [shape: f32[1,256], index: 12, kind: input, shape index: {}]
  %s13 = inlined_call_operand.vmem [shape: f32[1,256], index: 13, kind: input, shape index: {}]
  %s14 = inlined_call_operand.hbm [shape: f32[2,8,256], index: 14, kind: output, shape index: {}]
  %s15 = sld [smem:[#allocation0]]
  $region90: #{tpu_custom_call.1} parent=0
    _
  %s17 = ssub.s32 1, %s15
  %s18 = scalar_select 0, %s17, %s15
  $region1: #{tpu_custom_call.1} parent=0
    #allocation2 [shape = 'u8[16384]{0}', space=vmem, size = 0x4000, scoped, tag = 'input window, operand 0, single buffered']
    #allocation3 [shape = 's32[1]{0}', space=sflag, size = 0x4, scoped, tag = 'scoped memory for tpu_custom_call.1']
    #allocation4 [shape = 's32[1]{0}', space=sflag, size = 0x4, scoped, tag = 'scoped memory for tpu_custom_call.1']
    #allocation5 [shape = 'u8[4096]{0}', space=vmem, size = 0x1000, scoped, tag = 'input window, operand 1, single buffered']
    #allocation6 [shape = 's32[1]{0}', space=sflag, size = 0x4, scoped, tag = 'scoped memory for tpu_custom_call.1']
    #allocation7 [shape = 'u8[393216]{0}', space=vmem, size = 0x60000, scoped, tag = 'input window, operand 2, single buffered']
    #allocation8 [shape = 'u8[131072]{0}', space=vmem, size = 0x20000, scoped, tag = 'input window, operand 4, single buffered']
    #allocation9 [shape = 's32[1]{0}', space=sflag, size = 0x4, scoped, tag = 'scoped memory for tpu_custom_call.1']
    #allocation10 [shape = 'u8[262144]{0}', space=vmem, size = 0x40000, scoped, tag = 'input window, operand 8, single buffered']
    #allocation11 [shape = 'u8[262144]{0}', space=vmem, size = 0x40000, scoped, tag = 'input window, operand 10, single buffered']
    #allocation12 [shape = 's32[1]{0}', space=sflag, size = 0x4, scoped, tag = 'scoped memory for tpu_custom_call.1']
    #allocation13 [shape = 'u8[16384]{0}', space=vmem, size = 0x4000, scoped, tag = 'output window, operand 0, single buffered']
    %19 = vsyncpa [#allocation3], 0
    %20 = vsyncpa [#allocation6], 0
    %21 = vsyncpa [#allocation9], 0
    %22 = vsyncpa [#allocation12], 0
    %23 = vsyncpa [#allocation4], 0
    // Predicated region
    $region2: #{tpu_custom_call.1} parent=1 // pred_check
      _
    $region3: #{tpu_custom_call.1} parent=1 // pred_check_branch
      %25 = sbr.rel (0) target = $region5
    $region4: #{tpu_custom_call.1} parent=1 // pred_region
      %s27 = ssub.s32 512, 512
      %28 = vsyncadd [#allocation3], %s27
      %s29 = sshll.u32 [#allocation2], 4
      %s30 = int_to_ptr.vmem [resolvable:$true] %s29
      %35 = dma.hbm_to_vmem [thread:$0]  %s0, 512, %s30, [#allocation3], 256, 256, 16
    $region5: #{tpu_custom_call.1} parent=1 // pred_fallthru
      _
    // Predicated region
    $region6: #{tpu_custom_call.1} parent=1 // pred_check
      _
    $region7: #{tpu_custom_call.1} parent=1 // pred_check_branch
      %37 = sbr.rel (0) target = $region9
    $region8: #{tpu_custom_call.1} parent=1 // pred_region
      %s39 = ssub.s32 128, 128
      %40 = vsyncadd [#allocation6], %s39
      %s41 = sshll.u32 [#allocation5], 4
      %s42 = int_to_ptr.vmem [resolvable:$true] %s41
      %47 = dma.hbm_to_vmem [thread:$0]  %s1, 128, %s42, [#allocation6], 64, 64, 4
    $region9: #{tpu_custom_call.1} parent=1 // pred_fallthru
      _
    // Predicated region
    $region10: #{tpu_custom_call.1} parent=1 // pred_check
      _
    $region11: #{tpu_custom_call.1} parent=1 // pred_check_branch
      %49 = sbr.rel (0) target = $region13
    $region12: #{tpu_custom_call.1} parent=1 // pred_region
      %s51 = ssub.s32 12288, 12288
      %52 = vsyncadd [#allocation6], %s51
      %s53 = sshll.u32 [#allocation7], 4
      %s54 = int_to_ptr.vmem [resolvable:$true] %s53
      %59 = dma.hbm_to_vmem [thread:$0]  %s2, 12288, %s54, [#allocation6], 384, 384, 24
    $region13: #{tpu_custom_call.1} parent=1 // pred_fallthru
      _
    // Predicated region
    $region14: #{tpu_custom_call.1} parent=1 // pred_check
      _
    $region15: #{tpu_custom_call.1} parent=1 // pred_check_branch
      %61 = sbr.rel (0) target = $region17
    $region16: #{tpu_custom_call.1} parent=1 // pred_region
      _
    $region17: #{tpu_custom_call.1} parent=1 // pred_fallthru
      _
    // Predicated region
    $region18: #{tpu_custom_call.1} parent=1 // pred_check
      _
    $region19: #{tpu_custom_call.1} parent=1 // pred_check_branch
      %63 = sbr.rel (0) target = $region21
    $region20: #{tpu_custom_call.1} parent=1 // pred_region
      %s65 = ssub.s32 4096, 4096
      %66 = vsyncadd [#allocation9], %s65
      %s67 = sshll.u32 [#allocation8], 4
      %s68 = int_to_ptr.vmem [resolvable:$true] %s67
      %73 = dma.hbm_to_vmem [thread:$0]  %s4, 4096, %s68, [#allocation9], 128, 128, 8
    $region21: #{tpu_custom_call.1} parent=1 // pred_fallthru
      _
    // Predicated region
    $region22: #{tpu_custom_call.1} parent=1 // pred_check
      _
    $region23: #{tpu_custom_call.1} parent=1 // pred_check_branch
      %75 = sbr.rel (0) target = $region25
    $region24: #{tpu_custom_call.1} parent=1 // pred_region
      _
    $region25: #{tpu_custom_call.1} parent=1 // pred_fallthru
      _
    // Predicated region
    $region26: #{tpu_custom_call.1} parent=1 // pred_check
      _
    $region27: #{tpu_custom_call.1} parent=1 // pred_check_branch
      %77 = sbr.rel (0) target = $region29
    $region28: #{tpu_custom_call.1} parent=1 // pred_region
      _
    $region29: #{tpu_custom_call.1} parent=1 // pred_fallthru
      _
    // Predicated region
    $region30: #{tpu_custom_call.1} parent=1 // pred_check
      _
    $region31: #{tpu_custom_call.1} parent=1 // pred_check_branch
      %79 = sbr.rel (0) target = $region33
    $region32: #{tpu_custom_call.1} parent=1 // pred_region
      _
    $region33: #{tpu_custom_call.1} parent=1 // pred_fallthru
      _
    // Predicated region
    $region34: #{tpu_custom_call.1} parent=1 // pred_check
      _
    $region35: #{tpu_custom_call.1} parent=1 // pred_check_branch
      %81 = sbr.rel (0) target = $region37
    $region36: #{tpu_custom_call.1} parent=1 // pred_region
      %s83 = ssub.s32 8192, 8192
      %84 = vsyncadd [#allocation9], %s83
      %s85 = sshll.u32 [#allocation10], 4
      %s86 = int_to_ptr.vmem [resolvable:$true] %s85
      %91 = dma.hbm_to_vmem [thread:$0]  %s8, 8192, %s86, [#allocation9], 256, 256, 16
    $region37: #{tpu_custom_call.1} parent=1 // pred_fallthru
      _
    // Predicated region
    $region38: #{tpu_custom_call.1} parent=1 // pred_check
      _
    $region39: #{tpu_custom_call.1} parent=1 // pred_check_branch
      %93 = sbr.rel (0) target = $region41
    $region40: #{tpu_custom_call.1} parent=1 // pred_region
      _
    $region41: #{tpu_custom_call.1} parent=1 // pred_fallthru
      _
    // Predicated region
    $region42: #{tpu_custom_call.1} parent=1 // pred_check
      _
    $region43: #{tpu_custom_call.1} parent=1 // pred_check_branch
      %95 = sbr.rel (0) target = $region45
    $region44: #{tpu_custom_call.1} parent=1 // pred_region
      %s97 = ssub.s32 8192, 8192
      %98 = vsyncadd [#allocation12], %s97
      %s99 = sshll.u32 [#allocation11], 4
      %s100 = int_to_ptr.vmem [resolvable:$true] %s99
      %105 = dma.hbm_to_vmem [thread:$0]  %s10, 8192, %s100, [#allocation12], 128, 128, 8
    $region45: #{tpu_custom_call.1} parent=1 // pred_fallthru
      _
    // Predicated region
    $region46: #{tpu_custom_call.1} parent=1 // pred_check
      _
    $region47: #{tpu_custom_call.1} parent=1 // pred_check_branch
      %107 = sbr.rel (0) target = $region49
    $region48: #{tpu_custom_call.1} parent=1 // pred_region
      _
    $region49: #{tpu_custom_call.1} parent=1 // pred_fallthru
      _
    // Predicated region
    $region50: #{tpu_custom_call.1} parent=1 // pred_check
      _
    $region51: #{tpu_custom_call.1} parent=1 // pred_check_branch
      %109 = sbr.rel (0) target = $region53
    $region52: #{tpu_custom_call.1} parent=1 // pred_region
      _
    $region53: #{tpu_custom_call.1} parent=1 // pred_fallthru
      _
    // Predicated region
    $region54: #{tpu_custom_call.1} parent=1 // pred_check
      _
    $region55: #{tpu_custom_call.1} parent=1 // pred_check_branch
      %111 = sbr.rel (0) target = $region57
    $region56: #{tpu_custom_call.1} parent=1 // pred_region
      _
    $region57: #{tpu_custom_call.1} parent=1 // pred_fallthru
      _
    // Predicated region
    $region58: #{tpu_custom_call.1} parent=1 // pred_check
      _
    $region59: #{tpu_custom_call.1} parent=1 // pred_check_branch
      %113 = sbr.rel (0) target = $region61
    $region60: #{tpu_custom_call.1} parent=1 // pred_region
      %114 = dma.done [#allocation3], 512
    $region61: #{tpu_custom_call.1} parent=1 // pred_fallthru
      _
    // Predicated region
    $region62: #{tpu_custom_call.1} parent=1 // pred_check
      _
    $region63: #{tpu_custom_call.1} parent=1 // pred_check_branch
      %116 = sbr.rel (0) target = $region65
    $region64: #{tpu_custom_call.1} parent=1 // pred_region
      %117 = dma.done [#allocation6], 128
    $region65: #{tpu_custom_call.1} parent=1 // pred_fallthru
      _
    // Predicated region
    $region66: #{tpu_custom_call.1} parent=1 // pred_check
      _
    $region67: #{tpu_custom_call.1} parent=1 // pred_check_branch
      %119 = sbr.rel (0) target = $region69
    $region68: #{tpu_custom_call.1} parent=1 // pred_region
      %120 = dma.done [#allocation6], 12288
    $region69: #{tpu_custom_call.1} parent=1 // pred_fallthru
      _
    // Predicated region
    $region70: #{tpu_custom_call.1} parent=1 // pred_check
      _
    $region71: #{tpu_custom_call.1} parent=1 // pred_check_branch
      %122 = sbr.rel (0) target = $region73
    $region72: #{tpu_custom_call.1} parent=1 // pred_region
      %123 = dma.done [#allocation9], 4096
    $region73: #{tpu_custom_call.1} parent=1 // pred_fallthru
      _
    // Predicated region
    $region74: #{tpu_custom_call.1} parent=1 // pred_check
      _
    $region75: #{tpu_custom_call.1} parent=1 // pred_check_branch
      %125 = sbr.rel (0) target = $region77
    $region76: #{tpu_custom_call.1} parent=1 // pred_region
      %126 = dma.done [#allocation9], 8192
    $region77: #{tpu_custom_call.1} parent=1 // pred_fallthru
      _
    // Predicated region
    $region78: #{tpu_custom_call.1} parent=1 // pred_check
      _
    $region79: #{tpu_custom_call.1} parent=1 // pred_check_branch
      %128 = sbr.rel (0) target = $region81
    $region80: #{tpu_custom_call.1} parent=1 // pred_region
      %129 = dma.done [#allocation12], 8192
    $region81: #{tpu_custom_call.1} parent=1 // pred_fallthru
      _
    %v131 = vld [vmem:[#allocation2] sm:$0xff]
    %v132 = vld [vmem:[#allocation2 + $0x8] sm:$0xff]
    %v133 = vld [vmem:[#allocation2 + $0x10] sm:$0xff]
    %v134 = vld [vmem:[#allocation2 + $0x18] sm:$0xff]
    %v135 = vpack.c.bf16 %v133, %v131
    %v136 = vpack.c.bf16 %v134, %v132
    %v137 = vld [vmem:[#allocation7] sm:$0xff]
    %v138 = vld [vmem:[#allocation7 + $0x8] sm:$0xff]
    %v139 = vld [vmem:[#allocation7 + $0x10] sm:$0xff]
    %v140 = vld [vmem:[#allocation7 + $0x18] sm:$0xff]
    %v141 = vld [vmem:[#allocation7 + $0x20] sm:$0xff]
    %v142 = vld [vmem:[#allocation7 + $0x28] sm:$0xff]
    %v143 = vld [vmem:[#allocation7 + $0x30] sm:$0xff]
    %v144 = vld [vmem:[#allocation7 + $0x38] sm:$0xff]
    %v145 = vld [vmem:[#allocation7 + $0x40] sm:$0xff]
    %v146 = vld [vmem:[#allocation7 + $0x48] sm:$0xff]
    %v147 = vld [vmem:[#allocation7 + $0x50] sm:$0xff]
    %v148 = vld [vmem:[#allocation7 + $0x58] sm:$0xff]
    %v149 = vld [vmem:[#allocation7 + $0x60] sm:$0xff]
    %v150 = vld [vmem:[#allocation7 + $0x68] sm:$0xff]
    %v151 = vld [vmem:[#allocation7 + $0x70] sm:$0xff]
    %v152 = vld [vmem:[#allocation7 + $0x78] sm:$0xff]
    %v153 = vld [vmem:[#allocation7 + $0x80] sm:$0xff]
    %v154 = vld [vmem:[#allocation7 + $0x88] sm:$0xff]
    %v155 = vld [vmem:[#allocation7 + $0x90] sm:$0xff]
    %v156 = vld [vmem:[#allocation7 + $0x98] sm:$0xff]
    %v157 = vld [vmem:[#allocation7 + $0xa0] sm:$0xff]
    %v158 = vld [vmem:[#allocation7 + $0xa8] sm:$0xff]
    %v159 = vld [vmem:[#allocation7 + $0xb0] sm:$0xff]
    %v160 = vld [vmem:[#allocation7 + $0xb8] sm:$0xff]
    %v161 = vld [vmem:[#allocation7 + $0xc0] sm:$0xff]
    %v162 = vld [vmem:[#allocation7 + $0xc8] sm:$0xff]
    %v163 = vld [vmem:[#allocation7 + $0xd0] sm:$0xff]
    %v164 = vld [vmem:[#allocation7 + $0xd8] sm:$0xff]
    %v165 = vld [vmem:[#allocation7 + $0xe0] sm:$0xff]
    %v166 = vld [vmem:[#allocation7 + $0xe8] sm:$0xff]
    %v167 = vld [vmem:[#allocation7 + $0xf0] sm:$0xff]
    %v168 = vld [vmem:[#allocation7 + $0xf8] sm:$0xff]
    %v169 = vld [vmem:[#allocation7 + $0x100] sm:$0xff]
    %v170 = vld [vmem:[#allocation7 + $0x108] sm:$0xff]
    %v171 = vld [vmem:[#allocation7 + $0x110] sm:$0xff]
    %v172 = vld [vmem:[#allocation7 + $0x118] sm:$0xff]
    %v173 = vld [vmem:[#allocation7 + $0x120] sm:$0xff]
    %v174 = vld [vmem:[#allocation7 + $0x128] sm:$0xff]
    %v175 = vld [vmem:[#allocation7 + $0x130] sm:$0xff]
    %v176 = vld [vmem:[#allocation7 + $0x138] sm:$0xff]
    %v177 = vld [vmem:[#allocation7 + $0x140] sm:$0xff]
    %v178 = vld [vmem:[#allocation7 + $0x148] sm:$0xff]
    %v179 = vld [vmem:[#allocation7 + $0x150] sm:$0xff]
    %v180 = vld [vmem:[#allocation7 + $0x158] sm:$0xff]
    %v181 = vld [vmem:[#allocation7 + $0x160] sm:$0xff]
    %v182 = vld [vmem:[#allocation7 + $0x168] sm:$0xff]
    %v183 = vld [vmem:[#allocation7 + $0x170] sm:$0xff]
    %v184 = vld [vmem:[#allocation7 + $0x178] sm:$0xff]
    %v185 = vld [vmem:[#allocation7 + $0x180] sm:$0xff]
    %v186 = vld [vmem:[#allocation7 + $0x188] sm:$0xff]
    %v187 = vld [vmem:[#allocation7 + $0x190] sm:$0xff]
    %v188 = vld [vmem:[#allocation7 + $0x198] sm:$0xff]
    %v189 = vld [vmem:[#allocation7 + $0x1a0] sm:$0xff]
    %v190 = vld [vmem:[#allocation7 + $0x1a8] sm:$0xff]
    %v191 = vld [vmem:[#allocation7 + $0x1b0] sm:$0xff]
    %v192 = vld [vmem:[#allocation7 + $0x1b8] sm:$0xff]
    %v193 = vld [vmem:[#allocation7 + $0x1c0] sm:$0xff]
    %v194 = vld [vmem:[#allocation7 + $0x1c8] sm:$0xff]
    %v195 = vld [vmem:[#allocation7 + $0x1d0] sm:$0xff]
    %v196 = vld [vmem:[#allocation7 + $0x1d8] sm:$0xff]
    %v197 = vld [vmem:[#allocation7 + $0x1e0] sm:$0xff]
    %v198 = vld [vmem:[#allocation7 + $0x1e8] sm:$0xff]
    %v199 = vld [vmem:[#allocation7 + $0x1f0] sm:$0xff]
    %v200 = vld [vmem:[#allocation7 + $0x1f8] sm:$0xff]
    %v201 = vld [vmem:[#allocation7 + $0x200] sm:$0xff]
    %v202 = vld [vmem:[#allocation7 + $0x208] sm:$0xff]
    %v203 = vld [vmem:[#allocation7 + $0x210] sm:$0xff]
    %v204 = vld [vmem:[#allocation7 + $0x218] sm:$0xff]
    %v205 = vld [vmem:[#allocation7 + $0x220] sm:$0xff]
    %v206 = vld [vmem:[#allocation7 + $0x228] sm:$0xff]
    %v207 = vld [vmem:[#allocation7 + $0x230] sm:$0xff]
    %v208 = vld [vmem:[#allocation7 + $0x238] sm:$0xff]
    %v209 = vld [vmem:[#allocation7 + $0x240] sm:$0xff]
    %v210 = vld [vmem:[#allocation7 + $0x248] sm:$0xff]
    %v211 = vld [vmem:[#allocation7 + $0x250] sm:$0xff]
    %v212 = vld [vmem:[#allocation7 + $0x258] sm:$0xff]
    %v213 = vld [vmem:[#allocation7 + $0x260] sm:$0xff]
    %v214 = vld [vmem:[#allocation7 + $0x268] sm:$0xff]
    %v215 = vld [vmem:[#allocation7 + $0x270] sm:$0xff]
    %v216 = vld [vmem:[#allocation7 + $0x278] sm:$0xff]
    %v217 = vld [vmem:[#allocation7 + $0x280] sm:$0xff]
    %v218 = vld [vmem:[#allocation7 + $0x288] sm:$0xff]
    %v219 = vld [vmem:[#allocation7 + $0x290] sm:$0xff]
    %v220 = vld [vmem:[#allocation7 + $0x298] sm:$0xff]
    %v221 = vld [vmem:[#allocation7 + $0x2a0] sm:$0xff]
    %v222 = vld [vmem:[#allocation7 + $0x2a8] sm:$0xff]
    %v223 = vld [vmem:[#allocation7 + $0x2b0] sm:$0xff]
    %v224 = vld [vmem:[#allocation7 + $0x2b8] sm:$0xff]
    %v225 = vld [vmem:[#allocation7 + $0x2c0] sm:$0xff]
    %v226 = vld [vmem:[#allocation7 + $0x2c8] sm:$0xff]
    %v227 = vld [vmem:[#allocation7 + $0x2d0] sm:$0xff]
    %v228 = vld [vmem:[#allocation7 + $0x2d8] sm:$0xff]
    %v229 = vld [vmem:[#allocation7 + $0x2e0] sm:$0xff]
    %v230 = vld [vmem:[#allocation7 + $0x2e8] sm:$0xff]
    %v231 = vld [vmem:[#allocation7 + $0x2f0] sm:$0xff]
    %v232 = vld [vmem:[#allocation7 + $0x2f8] sm:$0xff]
    %v233 = vld [vmem:[%s3] sm:$0x3f]
    %v235 = vlaneseq
    %v236 = vshrl.u32 %v235, 7
    %v237 = vsub.s32 0, %v236
    %v238 = vrot.slane %v233, %v237
    %v239 = vlaneseq
    %v240 = vshrl.u32 %v239, 7
    %v241 = vsub.s32 1, %v240
    %v242 = vrot.slane %v233, %v241
    %v243 = vlaneseq
    %v244 = vshrl.u32 %v243, 7
    %v245 = vsub.s32 2, %v244
    %v246 = vrot.slane %v233, %v245
    %v247 = vlaneseq
    %v248 = vshrl.u32 %v247, 7
    %v249 = vsub.s32 3, %v248
    %v250 = vrot.slane %v233, %v249
    %v251 = vlaneseq
    %v252 = vshrl.u32 %v251, 7
    %v253 = vsub.s32 4, %v252
    %v254 = vrot.slane %v233, %v253
    %v255 = vlaneseq
    %v256 = vshrl.u32 %v255, 7
    %v257 = vsub.s32 5, %v256
    %v258 = vrot.slane %v233, %v257
    %v361 = vunpack.c.l.b16 %v137
    %v362 = vunpack.c.h.b16 %v137
    %v363 = vunpack.c.l.b16 %v138
    %v364 = vunpack.c.h.b16 %v138
    %v365 = vunpack.c.l.b16 %v139
    %v366 = vunpack.c.h.b16 %v139
    %v367 = vunpack.c.l.b16 %v140
    %v368 = vunpack.c.h.b16 %v140
    %v369 = vunpack.c.l.b16 %v141
    %v370 = vunpack.c.h.b16 %v141
    %v371 = vunpack.c.l.b16 %v142
    %v372 = vunpack.c.h.b16 %v142
    %v373 = vunpack.c.l.b16 %v143
    %v374 = vunpack.c.h.b16 %v143
    %v375 = vunpack.c.l.b16 %v144
    %v376 = vunpack.c.h.b16 %v144
    %v377 = vunpack.c.l.b16 %v145
    %v378 = vunpack.c.h.b16 %v145
    %v379 = vunpack.c.l.b16 %v146
    %v380 = vunpack.c.h.b16 %v146
    %v381 = vunpack.c.l.b16 %v147
    %v382 = vunpack.c.h.b16 %v147
    %v383 = vunpack.c.l.b16 %v148
    %v384 = vunpack.c.h.b16 %v148
    %v385 = vunpack.c.l.b16 %v149
    %v386 = vunpack.c.h.b16 %v149
    %v387 = vunpack.c.l.b16 %v150
    %v388 = vunpack.c.h.b16 %v150
    %v389 = vunpack.c.l.b16 %v151
    %v390 = vunpack.c.h.b16 %v151
    %v391 = vunpack.c.l.b16 %v152
    %v392 = vunpack.c.h.b16 %v152
    %v393 = vunpack.c.l.b16 %v153
    %v394 = vunpack.c.h.b16 %v153
    %v395 = vunpack.c.l.b16 %v154
    %v396 = vunpack.c.h.b16 %v154
    %v397 = vunpack.c.l.b16 %v155
    %v398 = vunpack.c.h.b16 %v155
    %v399 = vunpack.c.l.b16 %v156
    %v400 = vunpack.c.h.b16 %v156
    %v401 = vunpack.c.l.b16 %v157
    %v402 = vunpack.c.h.b16 %v157
    %v403 = vunpack.c.l.b16 %v158
    %v404 = vunpack.c.h.b16 %v158
    %v405 = vunpack.c.l.b16 %v159
    %v406 = vunpack.c.h.b16 %v159
    %v407 = vunpack.c.l.b16 %v160
    %v408 = vunpack.c.h.b16 %v160
    %v409 = vunpack.c.l.b16 %v161
    %v410 = vunpack.c.h.b16 %v161
    %v411 = vunpack.c.l.b16 %v162
    %v412 = vunpack.c.h.b16 %v162
    %v413 = vunpack.c.l.b16 %v163
    %v414 = vunpack.c.h.b16 %v163
    %v415 = vunpack.c.l.b16 %v164
    %v416 = vunpack.c.h.b16 %v164
    %v417 = vunpack.c.l.b16 %v165
    %v418 = vunpack.c.h.b16 %v165
    %v419 = vunpack.c.l.b16 %v166
    %v420 = vunpack.c.h.b16 %v166
    %v421 = vunpack.c.l.b16 %v167
    %v422 = vunpack.c.h.b16 %v167
    %v423 = vunpack.c.l.b16 %v168
    %v424 = vunpack.c.h.b16 %v168
    %v425 = vunpack.c.l.b16 %v169
    %v426 = vunpack.c.h.b16 %v169
    %v427 = vunpack.c.l.b16 %v170
    %v428 = vunpack.c.h.b16 %v170
    %v429 = vunpack.c.l.b16 %v171
    %v430 = vunpack.c.h.b16 %v171
    %v431 = vunpack.c.l.b16 %v172
    %v432 = vunpack.c.h.b16 %v172
    %v433 = vunpack.c.l.b16 %v173
    %v434 = vunpack.c.h.b16 %v173
    %v435 = vunpack.c.l.b16 %v174
    %v436 = vunpack.c.h.b16 %v174
    %v437 = vunpack.c.l.b16 %v175
    %v438 = vunpack.c.h.b16 %v175
    %v439 = vunpack.c.l.b16 %v176
    %v440 = vunpack.c.h.b16 %v176
    %v441 = vunpack.c.l.b16 %v177
    %v442 = vunpack.c.h.b16 %v177
    %v443 = vunpack.c.l.b16 %v178
    %v444 = vunpack.c.h.b16 %v178
    %v445 = vunpack.c.l.b16 %v179
    %v446 = vunpack.c.h.b16 %v179
    %v447 = vunpack.c.l.b16 %v180
    %v448 = vunpack.c.h.b16 %v180
    %v449 = vunpack.c.l.b16 %v181
    %v450 = vunpack.c.h.b16 %v181
    %v451 = vunpack.c.l.b16 %v182
    %v452 = vunpack.c.h.b16 %v182
    %v453 = vunpack.c.l.b16 %v183
    %v454 = vunpack.c.h.b16 %v183
    %v455 = vunpack.c.l.b16 %v184
    %v456 = vunpack.c.h.b16 %v184
    %v457 = vunpack.c.l.b16 %v185
    %v458 = vunpack.c.h.b16 %v185
    %v459 = vunpack.c.l.b16 %v186
    %v460 = vunpack.c.h.b16 %v186
    %v461 = vunpack.c.l.b16 %v187
    %v462 = vunpack.c.h.b16 %v187
    %v463 = vunpack.c.l.b16 %v188
    %v464 = vunpack.c.h.b16 %v188
    %v465 = vunpack.c.l.b16 %v189
    %v466 = vunpack.c.h.b16 %v189
    %v467 = vunpack.c.l.b16 %v190
    %v468 = vunpack.c.h.b16 %v190
    %v469 = vunpack.c.l.b16 %v191
    %v470 = vunpack.c.h.b16 %v191
    %v471 = vunpack.c.l.b16 %v192
    %v472 = vunpack.c.h.b16 %v192
    %v473 = vunpack.c.l.b16 %v193
    %v474 = vunpack.c.h.b16 %v193
    %v475 = vunpack.c.l.b16 %v194
    %v476 = vunpack.c.h.b16 %v194
    %v477 = vunpack.c.l.b16 %v195
    %v478 = vunpack.c.h.b16 %v195
    %v479 = vunpack.c.l.b16 %v196
    %v480 = vunpack.c.h.b16 %v196
    %v481 = vunpack.c.l.b16 %v197
    %v482 = vunpack.c.h.b16 %v197
    %v483 = vunpack.c.l.b16 %v198
    %v484 = vunpack.c.h.b16 %v198
    %v485 = vunpack.c.l.b16 %v199
    %v486 = vunpack.c.h.b16 %v199
    %v487 = vunpack.c.l.b16 %v200
    %v488 = vunpack.c.h.b16 %v200
    %v489 = vunpack.c.l.b16 %v201
    %v490 = vunpack.c.h.b16 %v201
    %v491 = vunpack.c.l.b16 %v202
    %v492 = vunpack.c.h.b16 %v202
    %v493 = vunpack.c.l.b16 %v203
    %v494 = vunpack.c.h.b16 %v203
    %v495 = vunpack.c.l.b16 %v204
    %v496 = vunpack.c.h.b16 %v204
    %v497 = vunpack.c.l.b16 %v205
    %v498 = vunpack.c.h.b16 %v205
    %v499 = vunpack.c.l.b16 %v206
    %v500 = vunpack.c.h.b16 %v206
    %v501 = vunpack.c.l.b16 %v207
    %v502 = vunpack.c.h.b16 %v207
    %v503 = vunpack.c.l.b16 %v208
    %v504 = vunpack.c.h.b16 %v208
    %v505 = vunpack.c.l.b16 %v209
    %v506 = vunpack.c.h.b16 %v209
    %v507 = vunpack.c.l.b16 %v210
    %v508 = vunpack.c.h.b16 %v210
    %v509 = vunpack.c.l.b16 %v211
    %v510 = vunpack.c.h.b16 %v211
    %v511 = vunpack.c.l.b16 %v212
    %v512 = vunpack.c.h.b16 %v212
    %v513 = vunpack.c.l.b16 %v213
    %v514 = vunpack.c.h.b16 %v213
    %v515 = vunpack.c.l.b16 %v214
    %v516 = vunpack.c.h.b16 %v214
    %v517 = vunpack.c.l.b16 %v215
    %v518 = vunpack.c.h.b16 %v215
    %v519 = vunpack.c.l.b16 %v216
    %v520 = vunpack.c.h.b16 %v216
    %v521 = vunpack.c.l.b16 %v217
    %v522 = vunpack.c.h.b16 %v217
    %v523 = vunpack.c.l.b16 %v218
    %v524 = vunpack.c.h.b16 %v218
    %v525 = vunpack.c.l.b16 %v219
    %v526 = vunpack.c.h.b16 %v219
    %v527 = vunpack.c.l.b16 %v220
    %v528 = vunpack.c.h.b16 %v220
    %v529 = vunpack.c.l.b16 %v221
    %v530 = vunpack.c.h.b16 %v221
    %v531 = vunpack.c.l.b16 %v222
    %v532 = vunpack.c.h.b16 %v222
    %v533 = vunpack.c.l.b16 %v223
    %v534 = vunpack.c.h.b16 %v223
    %v535 = vunpack.c.l.b16 %v224
    %v536 = vunpack.c.h.b16 %v224
    %v537 = vunpack.c.l.b16 %v225
    %v538 = vunpack.c.h.b16 %v225
    %v539 = vunpack.c.l.b16 %v226
    %v540 = vunpack.c.h.b16 %v226
    %v541 = vunpack.c.l.b16 %v227
    %v542 = vunpack.c.h.b16 %v227
    %v543 = vunpack.c.l.b16 %v228
    %v544 = vunpack.c.h.b16 %v228
    %v545 = vunpack.c.l.b16 %v229
    %v546 = vunpack.c.h.b16 %v229
    %v547 = vunpack.c.l.b16 %v230
    %v548 = vunpack.c.h.b16 %v230
    %v549 = vunpack.c.l.b16 %v231
    %v550 = vunpack.c.h.b16 %v231
    %v551 = vunpack.c.l.b16 %v232
    %v552 = vunpack.c.h.b16 %v232
    %v553 = vpack.c.b16 %v367, %v361
    %v554 = vpack.c.b16 %v368, %v362
    %v555 = vpack.c.b16 %v369, %v363
    %v556 = vpack.c.b16 %v370, %v364
    %v557 = vpack.c.b16 %v371, %v365
    %v558 = vpack.c.b16 %v372, %v366
    %v559 = vpack.c.b16 %v379, %v373
    %v560 = vpack.c.b16 %v380, %v374
    %v561 = vpack.c.b16 %v381, %v375
    %v562 = vpack.c.b16 %v382, %v376
    %v563 = vpack.c.b16 %v383, %v377
    %v564 = vpack.c.b16 %v384, %v378
    %v565 = vpack.c.b16 %v391, %v385
    %v566 = vpack.c.b16 %v392, %v386
    %v567 = vpack.c.b16 %v393, %v387
    %v568 = vpack.c.b16 %v394, %v388
    %v569 = vpack.c.b16 %v395, %v389
    %v570 = vpack.c.b16 %v396, %v390
    %v571 = vpack.c.b16 %v403, %v397
    %v572 = vpack.c.b16 %v404, %v398
    %v573 = vpack.c.b16 %v405, %v399
    %v574 = vpack.c.b16 %v406, %v400
    %v575 = vpack.c.b16 %v407, %v401
    %v576 = vpack.c.b16 %v408, %v402
    %v577 = vpack.c.b16 %v415, %v409
    %v578 = vpack.c.b16 %v416, %v410
    %v579 = vpack.c.b16 %v417, %v411
    %v580 = vpack.c.b16 %v418, %v412
    %v581 = vpack.c.b16 %v419, %v413
    %v582 = vpack.c.b16 %v420, %v414
    %v583 = vpack.c.b16 %v427, %v421
    %v584 = vpack.c.b16 %v428, %v422
    %v585 = vpack.c.b16 %v429, %v423
    %v586 = vpack.c.b16 %v430, %v424
    %v587 = vpack.c.b16 %v431, %v425
    %v588 = vpack.c.b16 %v432, %v426
    %v589 = vpack.c.b16 %v439, %v433
    %v590 = vpack.c.b16 %v440, %v434
    %v591 = vpack.c.b16 %v441, %v435
    %v592 = vpack.c.b16 %v442, %v436
    %v593 = vpack.c.b16 %v443, %v437
    %v594 = vpack.c.b16 %v444, %v438
    %v595 = vpack.c.b16 %v451, %v445
    %v596 = vpack.c.b16 %v452, %v446
    %v597 = vpack.c.b16 %v453, %v447
    %v598 = vpack.c.b16 %v454, %v448
    %v599 = vpack.c.b16 %v455, %v449
    %v600 = vpack.c.b16 %v456, %v450
    %v601 = vpack.c.b16 %v463, %v457
    %v602 = vpack.c.b16 %v464, %v458
    %v603 = vpack.c.b16 %v465, %v459
    %v604 = vpack.c.b16 %v466, %v460
    %v605 = vpack.c.b16 %v467, %v461
    %v606 = vpack.c.b16 %v468, %v462
    %v607 = vpack.c.b16 %v475, %v469
    %v608 = vpack.c.b16 %v476, %v470
    %v609 = vpack.c.b16 %v477, %v471
    %v610 = vpack.c.b16 %v478, %v472
    %v611 = vpack.c.b16 %v479, %v473
    %v612 = vpack.c.b16 %v480, %v474
    %v613 = vpack.c.b16 %v487, %v481
    %v614 = vpack.c.b16 %v488, %v482
    %v615 = vpack.c.b16 %v489, %v483
    %v616 = vpack.c.b16 %v490, %v484
    %v617 = vpack.c.b16 %v491, %v485
    %v618 = vpack.c.b16 %v492, %v486
    %v619 = vpack.c.b16 %v499, %v493
    %v620 = vpack.c.b16 %v500, %v494
    %v621 = vpack.c.b16 %v501, %v495
    %v622 = vpack.c.b16 %v502, %v496
    %v623 = vpack.c.b16 %v503, %v497
    %v624 = vpack.c.b16 %v504, %v498
    %v625 = vpack.c.b16 %v511, %v505
    %v626 = vpack.c.b16 %v512, %v506
    %v627 = vpack.c.b16 %v513, %v507
    %v628 = vpack.c.b16 %v514, %v508
    %v629 = vpack.c.b16 %v515, %v509
    %v630 = vpack.c.b16 %v516, %v510
    %v631 = vpack.c.b16 %v523, %v517
    %v632 = vpack.c.b16 %v524, %v518
    %v633 = vpack.c.b16 %v525, %v519
    %v634 = vpack.c.b16 %v526, %v520
    %v635 = vpack.c.b16 %v527, %v521
    %v636 = vpack.c.b16 %v528, %v522
    %v637 = vpack.c.b16 %v535, %v529
    %v638 = vpack.c.b16 %v536, %v530
    %v639 = vpack.c.b16 %v537, %v531
    %v640 = vpack.c.b16 %v538, %v532
    %v641 = vpack.c.b16 %v539, %v533
    %v642 = vpack.c.b16 %v540, %v534
    %v643 = vpack.c.b16 %v547, %v541
    %v644 = vpack.c.b16 %v548, %v542
    %v645 = vpack.c.b16 %v549, %v543
    %v646 = vpack.c.b16 %v550, %v544
    %v647 = vpack.c.b16 %v551, %v545
    %v648 = vpack.c.b16 %v552, %v546
    %745 = vmatprep.subr.bf16.mxu0 %v554
    %746 = vmatpush1.bf16.msra.mxu0 %v553
    %747 = vmatprep.subr.bf16.mxu0 %v560
    %748 = vmatpush1.bf16.msra.mxu0 %v559
    %749 = vmatprep.subr.bf16.mxu0 %v566
    %750 = vmatpush1.bf16.msra.mxu0 %v565
    %751 = vmatprep.subr.bf16.mxu0 %v572
    %752 = vmatpush1.bf16.msra.mxu0 %v571
    %753 = vmatprep.subr.bf16.mxu0 %v578
    %754 = vmatpush1.bf16.msra.mxu0 %v577
    %755 = vmatprep.subr.bf16.mxu0 %v584
    %756 = vmatpush1.bf16.msra.mxu0 %v583
    %757 = vmatprep.subr.bf16.mxu0 %v590
    %758 = vmatpush1.bf16.msra.mxu0 %v589
    %759 = vmatprep.subr.bf16.mxu0 %v596
    %760 = vmatpush1.bf16.msra.mxu0 %v595
    %761 = vmatprep.subr.bf16.mxu0 %v602
    %762 = vmatpush1.bf16.msra.mxu0 %v601
    %763 = vmatprep.subr.bf16.mxu0 %v608
    %764 = vmatpush1.bf16.msra.mxu0 %v607
    %765 = vmatprep.subr.bf16.mxu0 %v614
    %766 = vmatpush1.bf16.msra.mxu0 %v613
    %767 = vmatprep.subr.bf16.mxu0 %v620
    %768 = vmatpush1.bf16.msra.mxu0 %v619
    %769 = vmatprep.subr.bf16.mxu0 %v626
    %770 = vmatpush1.bf16.msra.mxu0 %v625
    %771 = vmatprep.subr.bf16.mxu0 %v632
    %772 = vmatpush1.bf16.msra.mxu0 %v631
    %773 = vmatprep.subr.bf16.mxu0 %v638
    %774 = vmatpush1.bf16.msra.mxu0 %v637
    %775 = vmatprep.subr.bf16.mxu0 %v644
    %776 = vmatpush1.bf16.msra.mxu0 %v643
    %777 = vmatprep.mubr.bf16.mxu0 %v136
    %778 = vmatmul.mubr.bf16.gmra.mrb[0].mxu0 %v135
    %v779 = vpop.f32.mrb[0].mxu0
    %v780 = vadd.f32 %v238, %v779
    %v781 = vpop.f32.mrb[0].mxu0
    %v782 = vadd.f32 %v242, %v781
    %v783 = vpop.f32.mrb[0].mxu0
    %v784 = vadd.f32 %v238, %v783
    %v785 = vpop.f32.mrb[0].mxu0
    %v786 = vadd.f32 %v242, %v785
    %787 = vdwg.mxu0
    %788 = vmatprep.subr.bf16.mxu0 %v556
    %789 = vmatpush1.bf16.msra.mxu0 %v555
    %790 = vmatprep.subr.bf16.mxu0 %v562
    %791 = vmatpush1.bf16.msra.mxu0 %v561
    %792 = vmatprep.subr.bf16.mxu0 %v568
    %793 = vmatpush1.bf16.msra.mxu0 %v567
    %794 = vmatprep.subr.bf16.mxu0 %v574
    %795 = vmatpush1.bf16.msra.mxu0 %v573
    %796 = vmatprep.subr.bf16.mxu0 %v580
    %797 = vmatpush1.bf16.msra.mxu0 %v579
    %798 = vmatprep.subr.bf16.mxu0 %v586
    %799 = vmatpush1.bf16.msra.mxu0 %v585
    %800 = vmatprep.subr.bf16.mxu0 %v592
    %801 = vmatpush1.bf16.msra.mxu0 %v591
    %802 = vmatprep.subr.bf16.mxu0 %v598
    %803 = vmatpush1.bf16.msra.mxu0 %v597
    %804 = vmatprep.subr.bf16.mxu0 %v604
    %805 = vmatpush1.bf16.msra.mxu0 %v603
    %806 = vmatprep.subr.bf16.mxu0 %v610
    %807 = vmatpush1.bf16.msra.mxu0 %v609
    %808 = vmatprep.subr.bf16.mxu0 %v616
    %809 = vmatpush1.bf16.msra.mxu0 %v615
    %810 = vmatprep.subr.bf16.mxu0 %v622
    %811 = vmatpush1.bf16.msra.mxu0 %v621
    %812 = vmatprep.subr.bf16.mxu0 %v628
    %813 = vmatpush1.bf16.msra.mxu0 %v627
    %814 = vmatprep.subr.bf16.mxu0 %v634
    %815 = vmatpush1.bf16.msra.mxu0 %v633
    %816 = vmatprep.subr.bf16.mxu0 %v640
    %817 = vmatpush1.bf16.msra.mxu0 %v639
    %818 = vmatprep.subr.bf16.mxu0 %v646
    %819 = vmatpush1.bf16.msra.mxu0 %v645
    %820 = vmatprep.mubr.bf16.mxu0 %v136
    %821 = vmatmul.mubr.bf16.gmra.mrb[0].mxu0 %v135
    %v822 = vpop.f32.mrb[0].mxu0
    %v823 = vadd.f32 %v246, %v822
    %v824 = vpop.f32.mrb[0].mxu0
    %v825 = vadd.f32 %v250, %v824
    %v826 = vpop.f32.mrb[0].mxu0
    %v827 = vadd.f32 %v246, %v826
    %v828 = vpop.f32.mrb[0].mxu0
    %v829 = vadd.f32 %v250, %v828
    %830 = vdwg.mxu0
    %831 = vmatprep.subr.bf16.mxu0 %v558
    %832 = vmatpush1.bf16.msra.mxu0 %v557
    %833 = vmatprep.subr.bf16.mxu0 %v564
    %834 = vmatpush1.bf16.msra.mxu0 %v563
    %835 = vmatprep.subr.bf16.mxu0 %v570
    %836 = vmatpush1.bf16.msra.mxu0 %v569
    %837 = vmatprep.subr.bf16.mxu0 %v576
    %838 = vmatpush1.bf16.msra.mxu0 %v575
    %839 = vmatprep.subr.bf16.mxu0 %v582
    %840 = vmatpush1.bf16.msra.mxu0 %v581
    %841 = vmatprep.subr.bf16.mxu0 %v588
    %842 = vmatpush1.bf16.msra.mxu0 %v587
    %843 = vmatprep.subr.bf16.mxu0 %v594
    %844 = vmatpush1.bf16.msra.mxu0 %v593
    %845 = vmatprep.subr.bf16.mxu0 %v600
    %846 = vmatpush1.bf16.msra.mxu0 %v599
    %847 = vmatprep.subr.bf16.mxu0 %v606
    %848 = vmatpush1.bf16.msra.mxu0 %v605
    %849 = vmatprep.subr.bf16.mxu0 %v612
    %850 = vmatpush1.bf16.msra.mxu0 %v611
    %851 = vmatprep.subr.bf16.mxu0 %v618
    %852 = vmatpush1.bf16.msra.mxu0 %v617
    %853 = vmatprep.subr.bf16.mxu0 %v624
    %854 = vmatpush1.bf16.msra.mxu0 %v623
    %855 = vmatprep.subr.bf16.mxu0 %v630
    %856 = vmatpush1.bf16.msra.mxu0 %v629
    %857 = vmatprep.subr.bf16.mxu0 %v636
    %858 = vmatpush1.bf16.msra.mxu0 %v635
    %859 = vmatprep.subr.bf16.mxu0 %v642
    %860 = vmatpush1.bf16.msra.mxu0 %v641
    %861 = vmatprep.subr.bf16.mxu0 %v648
    %862 = vmatpush1.bf16.msra.mxu0 %v647
    %863 = vmatprep.mubr.bf16.mxu0 %v136
    %864 = vmatmul.mubr.bf16.gmra.mrb[0].mxu0 %v135
    %v865 = vpop.f32.mrb[0].mxu0
    %v866 = vadd.f32 %v254, %v865
    %v867 = vpop.f32.mrb[0].mxu0
    %v868 = vadd.f32 %v258, %v867
    %v869 = vpop.f32.mrb[0].mxu0
    %v870 = vadd.f32 %v254, %v869
    %v871 = vpop.f32.mrb[0].mxu0
    %v872 = vadd.f32 %v258, %v871
    %873 = vdwg.mxu0
    %v874 = vpack.c.bf16 %v784, %v780
    %v875 = vpack.c.bf16 %v786, %v782
    %v876 = vpack.c.bf16 %v827, %v823
    %v877 = vpack.c.bf16 %v829, %v825
    %v878 = vpack.c.bf16 %v870, %v866
    %v879 = vpack.c.bf16 %v872, %v868
    %v886 = vunpack.c.l.b16 %v874
    %v887 = vunpack.c.l.b16 %v875
    %v888 = vunpack.c.l.b16 %v876
    %v889 = vunpack.c.l.b16 %v877
    %v890 = vunpack.c.l.b16 %v878
    %v891 = vunpack.c.l.b16 %v879
    %v892 = vunpack.c.h.b16 %v874
    %v893 = vunpack.c.h.b16 %v875
    %v894 = vunpack.c.h.b16 %v876
    %v895 = vunpack.c.h.b16 %v877
    %v896 = vunpack.c.h.b16 %v878
    %v897 = vunpack.c.h.b16 %v879
    %v898 = vpack.c.b16 %v887, %v886
    %v899 = vpack.c.b16 %v889, %v888
    %v900 = vpack.c.b16 %v891, %v890
    %v901 = vpack.c.b16 %v893, %v892
    %v902 = vpack.c.b16 %v895, %v894
    %v903 = vpack.c.b16 %v897, %v896
    %v904 = vrot.slane %v898, 4
    %v905 = vrot.slane %v901, 4
    %906 = vrot.lane.b32.xlu0 %v898, 64
    %v907 = vpop.permute.xlu0 %906
    %908 = vrot.lane.b32.xlu0 %v901, 64
    %v909 = vpop.permute.xlu0 %908
    %v910 = vrot.slane %v907, 4
    %v911 = vrot.slane %v909, 4
    %v912 = vrot.slane %v899, 4
    %v913 = vrot.slane %v902, 4
    %914 = vrot.lane.b32.xlu0 %v899, 64
    %v915 = vpop.permute.xlu0 %914
    %916 = vrot.lane.b32.xlu0 %v902, 64
    %v917 = vpop.permute.xlu0 %916
    %v918 = vrot.slane %v915, 4
    %v919 = vrot.slane %v917, 4
    %v920 = vrot.slane %v900, 4
    %v921 = vrot.slane %v903, 4
    %922 = vrot.lane.b32.xlu0 %v900, 64
    %v923 = vpop.permute.xlu0 %922
    %924 = vrot.lane.b32.xlu0 %v903, 64
    %v925 = vpop.permute.xlu0 %924
    %v926 = vrot.slane %v923, 4
    %v927 = vrot.slane %v925, 4
    %vm928 = vcmask 523264
    %v930 = vsel %vm928, %v898, 0
    %v933 = vsel %vm928, %v899, 0
    %935 = vmatprep.subr.bf16.mxu0 0
    %936 = vmatpush1.bf16.xpose.msra.mxu0 %v933
    %937 = vmatprep.subr.bf16.mxu0 0
    %938 = vmatpush1.bf16.xpose.msra.mxu0 0
    %939 = vmatprep.subr.bf16.mxu0 0
    %940 = vmatpush1.bf16.xpose.msra.mxu0 0
    %941 = vmatprep.subr.bf16.mxu0 0
    %942 = vmatpush1.bf16.xpose.msra.mxu0 0
    %943 = vmatprep.subr.bf16.mxu0 0
    %944 = vmatpush1.bf16.xpose.msra.mxu0 0
    %945 = vmatprep.subr.bf16.mxu0 0
    %946 = vmatpush1.bf16.xpose.msra.mxu0 0
    %947 = vmatprep.subr.bf16.mxu0 0
    %948 = vmatpush1.bf16.xpose.msra.mxu0 0
    %949 = vmatprep.subr.bf16.mxu0 0
    %950 = vmatpush1.bf16.xpose.msra.mxu0 0
    %951 = vmatprep.subr.bf16.mxu0 0
    %952 = vmatpush1.bf16.xpose.msra.mxu0 0
    %953 = vmatprep.subr.bf16.mxu0 0
    %954 = vmatpush1.bf16.xpose.msra.mxu0 0
    %955 = vmatprep.subr.bf16.mxu0 0
    %956 = vmatpush1.bf16.xpose.msra.mxu0 0
    %957 = vmatprep.subr.bf16.mxu0 0
    %958 = vmatpush1.bf16.xpose.msra.mxu0 0
    %959 = vmatprep.subr.bf16.mxu0 0
    %960 = vmatpush1.bf16.xpose.msra.mxu0 0
    %961 = vmatprep.subr.bf16.mxu0 0
    %962 = vmatpush1.bf16.xpose.msra.mxu0 0
    %963 = vmatprep.subr.bf16.mxu0 0
    %964 = vmatpush1.bf16.xpose.msra.mxu0 0
    %965 = vmatprep.subr.bf16.mxu0 0
    %966 = vmatpush1.bf16.xpose.msra.mxu0 0
    %967 = vmatprep.mubr.bf16.mxu0 0
    %968 = vmatmul.mubr.bf16.gmra.mrb[0].mxu0 %v930
    %v969 = vpop.f32.mrb[0].mxu0
    %v970 = vadd.f32 0.0, %v969
    %v971 = vpop.f32.mrb[0].mxu0
    %v972 = vpop.f32.mrb[0].mxu0
    %v973 = vpop.f32.mrb[0].mxu0
    %974 = vdwg.mxu0
    %v976 = vsel %vm928, %v901, 0
    %v979 = vsel %vm928, %v902, 0
    %981 = vmatprep.subr.bf16.mxu0 0
    %982 = vmatpush1.bf16.xpose.msra.mxu0 %v979
    %983 = vmatprep.subr.bf16.mxu0 0
    %984 = vmatpush1.bf16.xpose.msra.mxu0 0
    %985 = vmatprep.subr.bf16.mxu0 0
    %986 = vmatpush1.bf16.xpose.msra.mxu0 0
    %987 = vmatprep.subr.bf16.mxu0 0
    %988 = vmatpush1.bf16.xpose.msra.mxu0 0
    %989 = vmatprep.subr.bf16.mxu0 0
    %990 = vmatpush1.bf16.xpose.msra.mxu0 0
    %991 = vmatprep.subr.bf16.mxu0 0
    %992 = vmatpush1.bf16.xpose.msra.mxu0 0
    %993 = vmatprep.subr.bf16.mxu0 0
    %994 = vmatpush1.bf16.xpose.msra.mxu0 0
    %995 = vmatprep.subr.bf16.mxu0 0
    %996 = vmatpush1.bf16.xpose.msra.mxu0 0
    %997 = vmatprep.subr.bf16.mxu0 0
    %998 = vmatpush1.bf16.xpose.msra.mxu0 0
    %999 = vmatprep.subr.bf16.mxu0 0
    %1000 = vmatpush1.bf16.xpose.msra.mxu0 0
    %1001 = vmatprep.subr.bf16.mxu0 0
    %1002 = vmatpush1.bf16.xpose.msra.mxu0 0
    %1003 = vmatprep.subr.bf16.mxu0 0
    %1004 = vmatpush1.bf16.xpose.msra.mxu0 0
    %1005 = vmatprep.subr.bf16.mxu0 0
    %1006 = vmatpush1.bf16.xpose.msra.mxu0 0
    %1007 = vmatprep.subr.bf16.mxu0 0
    %1008 = vmatpush1.bf16.xpose.msra.mxu0 0
    %1009 = vmatprep.subr.bf16.mxu0 0
    %1010 = vmatpush1.bf16.xpose.msra.mxu0 0
    %1011 = vmatprep.subr.bf16.mxu0 0
    %1012 = vmatpush1.bf16.xpose.msra.mxu0 0
    %1013 = vmatprep.mubr.bf16.mxu0 0
    %1014 = vmatmul.mubr.bf16.gmra.mrb[0].mxu0 %v976
    %v1015 = vpop.f32.mrb[0].mxu0
    %v1016 = vadd.f32 0.0, %v1015
    %v1017 = vpop.f32.mrb[0].mxu0
    %v1018 = vpop.f32.mrb[0].mxu0
    %v1019 = vpop.f32.mrb[0].mxu0
    %1020 = vdwg.mxu0
    %v1022 = vsel %vm928, %v907, 0
    %v1025 = vsel %vm928, %v915, 0
    %1027 = vmatprep.subr.bf16.mxu0 0
    %1028 = vmatpush1.bf16.xpose.msra.mxu0 %v1025
    %1029 = vmatprep.subr.bf16.mxu0 0
    %1030 = vmatpush1.bf16.xpose.msra.mxu0 0
    %1031 = vmatprep.subr.bf16.mxu0 0
    %1032 = vmatpush1.bf16.xpose.msra.mxu0 0
    %1033 = vmatprep.subr.bf16.mxu0 0
    %1034 = vmatpush1.bf16.xpose.msra.mxu0 0
    %1035 = vmatprep.subr.bf16.mxu0 0
    %1036 = vmatpush1.bf16.xpose.msra.mxu0 0
    %1037 = vmatprep.subr.bf16.mxu0 0
    %1038 = vmatpush1.bf16.xpose.msra.mxu0 0
    %1039 = vmatprep.subr.bf16.mxu0 0
    %1040 = vmatpush1.bf16.xpose.msra.mxu0 0
    %1041 = vmatprep.subr.bf16.mxu0 0
    %1042 = vmatpush1.bf16.xpose.msra.mxu0 0
    %1043 = vmatprep.subr.bf16.mxu0 0
    %1044 = vmatpush1.bf16.xpose.msra.mxu0 0
    %1045 = vmatprep.subr.bf16.mxu0 0
    %1046 = vmatpush1.bf16.xpose.msra.mxu0 0
    %1047 = vmatprep.subr.bf16.mxu0 0
    %1048 = vmatpush1.bf16.xpose.msra.mxu0 0
    %1049 = vmatprep.subr.bf16.mxu0 0
    %1050 = vmatpush1.bf16.xpose.msra.mxu0 0
    %1051 = vmatprep.subr.bf16.mxu0 0
    %1052 = vmatpush1.bf16.xpose.msra.mxu0 0
    %1053 = vmatprep.subr.bf16.mxu0 0
    %1054 = vmatpush1.bf16.xpose.msra.mxu0 0
    %1055 = vmatprep.subr.bf16.mxu0 0
    %1056 = vmatpush1.bf16.xpose.msra.mxu0 0
    %1057 = vmatprep.subr.bf16.mxu0 0
    %1058 = vmatpush1.bf16.xpose.msra.mxu0 0
    %1059 = vmatprep.mubr.bf16.mxu0 0
    %1060 = vmatmul.mubr.bf16.gmra.mrb[0].mxu0 %v1022
    %v1061 = vpop.f32.mrb[0].mxu0
    %v1062 = vadd.f32 0.0, %v1061
    %v1063 = vpop.f32.mrb[0].mxu0
    %v1064 = vpop.f32.mrb[0].mxu0
    %v1065 = vpop.f32.mrb[0].mxu0
    %1066 = vdwg.mxu0
    %v1068 = vsel %vm928, %v909, 0
    %v1071 = vsel %vm928, %v917, 0
    %1073 = vmatprep.subr.bf16.mxu0 0
    %1074 = vmatpush1.bf16.xpose.msra.mxu0 %v1071
    %1075 = vmatprep.subr.bf16.mxu0 0
    %1076 = vmatpush1.bf16.xpose.msra.mxu0 0
    %1077 = vmatprep.subr.bf16.mxu0 0
    %1078 = vmatpush1.bf16.xpose.msra.mxu0 0
    %1079 = vmatprep.subr.bf16.mxu0 0
    %1080 = vmatpush1.bf16.xpose.msra.mxu0 0
    %1081 = vmatprep.subr.bf16.mxu0 0
    %1082 = vmatpush1.bf16.xpose.msra.mxu0 0
    %1083 = vmatprep.subr.bf16.mxu0 0
    %1084 = vmatpush1.bf16.xpose.msra.mxu0 0
    %1085 = vmatprep.subr.bf16.mxu0 0
    %1086 = vmatpush1.bf16.xpose.msra.mxu0 0
    %1087 = vmatprep.subr.bf16.mxu0 0
    %1088 = vmatpush1.bf16.xpose.msra.mxu0 0
    %1089 = vmatprep.subr.bf16.mxu0 0
    %1090 = vmatpush1.bf16.xpose.msra.mxu0 0
    %1091 = vmatprep.subr.bf16.mxu0 0
    %1092 = vmatpush1.bf16.xpose.msra.mxu0 0
    %1093 = vmatprep.subr.bf16.mxu0 0
    %1094 = vmatpush1.bf16.xpose.msra.mxu0 0
    %1095 = vmatprep.subr.bf16.mxu0 0
    %1096 = vmatpush1.bf16.xpose.msra.mxu0 0
    %1097 = vmatprep.subr.bf16.mxu0 0
    %1098 = vmatpush1.bf16.xpose.msra.mxu0 0
    %1099 = vmatprep.subr.bf16.mxu0 0
    %1100 = vmatpush1.bf16.xpose.msra.mxu0 0
    %1101 = vmatprep.subr.bf16.mxu0 0
    %1102 = vmatpush1.bf16.xpose.msra.mxu0 0
    %1103 = vmatprep.subr.bf16.mxu0 0
    %1104 = vmatpush1.bf16.xpose.msra.mxu0 0
    %1105 = vmatprep.mubr.bf16.mxu0 0
    %1106 = vmatmul.mubr.bf16.gmra.mrb[0].mxu0 %v1068
    %v1107 = vpop.f32.mrb[0].mxu0
    %v1108 = vadd.f32 0.0, %v1107
    %v1109 = vpop.f32.mrb[0].mxu0
    %v1110 = vpop.f32.mrb[0].mxu0
    %v1111 = vpop.f32.mrb[0].mxu0
    %1112 = vdwg.mxu0
    %v1114 = vsel %vm928, %v904, 0
    %v1117 = vsel %vm928, %v912, 0
    %1119 = vmatprep.subr.bf16.mxu0 0
    %1120 = vmatpush1.bf16.xpose.msra.mxu0 %v1117
    %1121 = vmatprep.subr.bf16.mxu0 0
    %1122 = vmatpush1.bf16.xpose.msra.mxu0 0
    %1123 = vmatprep.subr.bf16.mxu0 0
    %1124 = vmatpush1.bf16.xpose.msra.mxu0 0
    %1125 = vmatprep.subr.bf16.mxu0 0
    %1126 = vmatpush1.bf16.xpose.msra.mxu0 0
    %1127 = vmatprep.subr.bf16.mxu0 0
    %1128 = vmatpush1.bf16.xpose.msra.mxu0 0
    %1129 = vmatprep.subr.bf16.mxu0 0
    %1130 = vmatpush1.bf16.xpose.msra.mxu0 0
    %1131 = vmatprep.subr.bf16.mxu0 0
    %1132 = vmatpush1.bf16.xpose.msra.mxu0 0
    %1133 = vmatprep.subr.bf16.mxu0 0
    %1134 = vmatpush1.bf16.xpose.msra.mxu0 0
    %1135 = vmatprep.subr.bf16.mxu0 0
    %1136 = vmatpush1.bf16.xpose.msra.mxu0 0
    %1137 = vmatprep.subr.bf16.mxu0 0
    %1138 = vmatpush1.bf16.xpose.msra.mxu0 0
    %1139 = vmatprep.subr.bf16.mxu0 0
    %1140 = vmatpush1.bf16.xpose.msra.mxu0 0
    %1141 = vmatprep.subr.bf16.mxu0 0
    %1142 = vmatpush1.bf16.xpose.msra.mxu0 0
    %1143 = vmatprep.subr.bf16.mxu0 0
    %1144 = vmatpush1.bf16.xpose.msra.mxu0 0
    %1145 = vmatprep.subr.bf16.mxu0 0
    %1146 = vmatpush1.bf16.xpose.msra.mxu0 0
    %1147 = vmatprep.subr.bf16.mxu0 0
    %1148 = vmatpush1.bf16.xpose.msra.mxu0 0
    %1149 = vmatprep.subr.bf16.mxu0 0
    %1150 = vmatpush1.bf16.xpose.msra.mxu0 0
    %1151 = vmatprep.mubr.bf16.mxu0 0
    %1152 = vmatmul.mubr.bf16.gmra.mrb[0].mxu0 %v1114
    %v1153 = vpop.f32.mrb[0].mxu0
    %v1154 = vadd.f32 0.0, %v1153
    %v1155 = vpop.f32.mrb[0].mxu0
    %v1156 = vpop.f32.mrb[0].mxu0
    %v1157 = vpop.f32.mrb[0].mxu0
    %1158 = vdwg.mxu0
    %v1160 = vsel %vm928, %v905, 0
    %v1163 = vsel %vm928, %v913, 0
    %1165 = vmatprep.subr.bf16.mxu0 0
    %1166 = vmatpush1.bf16.xpose.msra.mxu0 %v1163
    %1167 = vmatprep.subr.bf16.mxu0 0
    %1168 = vmatpush1.bf16.xpose.msra.mxu0 0
    %1169 = vmatprep.subr.bf16.mxu0 0
    %1170 = vmatpush1.bf16.xpose.msra.mxu0 0
    %1171 = vmatprep.subr.bf16.mxu0 0
    %1172 = vmatpush1.bf16.xpose.msra.mxu0 0
    %1173 = vmatprep.subr.bf16.mxu0 0
    %1174 = vmatpush1.bf16.xpose.msra.mxu0 0
    %1175 = vmatprep.subr.bf16.mxu0 0
    %1176 = vmatpush1.bf16.xpose.msra.mxu0 0
    %1177 = vmatprep.subr.bf16.mxu0 0
    %1178 = vmatpush1.bf16.xpose.msra.mxu0 0
    %1179 = vmatprep.subr.bf16.mxu0 0
    %1180 = vmatpush1.bf16.xpose.msra.mxu0 0
    %1181 = vmatprep.subr.bf16.mxu0 0
    %1182 = vmatpush1.bf16.xpose.msra.mxu0 0
    %1183 = vmatprep.subr.bf16.mxu0 0
    %1184 = vmatpush1.bf16.xpose.msra.mxu0 0
    %1185 = vmatprep.subr.bf16.mxu0 0
    %1186 = vmatpush1.bf16.xpose.msra.mxu0 0
    %1187 = vmatprep.subr.bf16.mxu0 0
    %1188 = vmatpush1.bf16.xpose.msra.mxu0 0
    %1189 = vmatprep.subr.bf16.mxu0 0
    %1190 = vmatpush1.bf16.xpose.msra.mxu0 0
    %1191 = vmatprep.subr.bf16.mxu0 0
    %1192 = vmatpush1.bf16.xpose.msra.mxu0 0
    %1193 = vmatprep.subr.bf16.mxu0 0
    %1194 = vmatpush1.bf16.xpose.msra.mxu0 0
    %1195 = vmatprep.subr.bf16.mxu0 0
    %1196 = vmatpush1.bf16.xpose.msra.mxu0 0
    %1197 = vmatprep.mubr.bf16.mxu0 0
    %1198 = vmatmul.mubr.bf16.gmra.mrb[0].mxu0 %v1160
    %v1199 = vpop.f32.mrb[0].mxu0
    %v1200 = vadd.f32 0.0, %v1199
    %v1201 = vpop.f32.mrb[0].mxu0
    %v1202 = vpop.f32.mrb[0].mxu0
    %v1203 = vpop.f32.mrb[0].mxu0
    %1204 = vdwg.mxu0
    %v1206 = vsel %vm928, %v910, 0
    %v1209 = vsel %vm928, %v918, 0
    %1211 = vmatprep.subr.bf16.mxu0 0
    %1212 = vmatpush1.bf16.xpose.msra.mxu0 %v1209
    %1213 = vmatprep.subr.bf16.mxu0 0
    %1214 = vmatpush1.bf16.xpose.msra.mxu0 0
    %1215 = vmatprep.subr.bf16.mxu0 0
    %1216 = vmatpush1.bf16.xpose.msra.mxu0 0
    %1217 = vmatprep.subr.bf16.mxu0 0
    %1218 = vmatpush1.bf16.xpose.msra.mxu0 0
    %1219 = vmatprep.subr.bf16.mxu0 0
    %1220 = vmatpush1.bf16.xpose.msra.mxu0 0
    %1221 = vmatprep.subr.bf16.mxu0 0
    %1222 = vmatpush1.bf16.xpose.msra.mxu0 0
    %1223 = vmatprep.subr.bf16.mxu0 0
    %1224 = vmatpush1.bf16.xpose.msra.mxu0 0
    %1225 = vmatprep.subr.bf16.mxu0 0
    %1226 = vmatpush1.bf16.xpose.msra.mxu0 0
    %1227 = vmatprep.subr.bf16.mxu0 0
    %1228 = vmatpush1.bf16.xpose.msra.mxu0 0
    %1229 = vmatprep.subr.bf16.mxu0 0
    %1230 = vmatpush1.bf16.xpose.msra.mxu0 0
    %1231 = vmatprep.subr.bf16.mxu0 0
    %1232 = vmatpush1.bf16.xpose.msra.mxu0 0
    %1233 = vmatprep.subr.bf16.mxu0 0
    %1234 = vmatpush1.bf16.xpose.msra.mxu0 0
    %1235 = vmatprep.subr.bf16.mxu0 0
    %1236 = vmatpush1.bf16.xpose.msra.mxu0 0
    %1237 = vmatprep.subr.bf16.mxu0 0
    %1238 = vmatpush1.bf16.xpose.msra.mxu0 0
    %1239 = vmatprep.subr.bf16.mxu0 0
    %1240 = vmatpush1.bf16.xpose.msra.mxu0 0
    %1241 = vmatprep.subr.bf16.mxu0 0
    %1242 = vmatpush1.bf16.xpose.msra.mxu0 0
    %1243 = vmatprep.mubr.bf16.mxu0 0
    %1244 = vmatmul.mubr.bf16.gmra.mrb[0].mxu0 %v1206
    %v1245 = vpop.f32.mrb[0].mxu0
    %v1246 = vadd.f32 0.0, %v1245
    %v1247 = vpop.f32.mrb[0].mxu0
    %v1248 = vpop.f32.mrb[0].mxu0
    %v1249 = vpop.f32.mrb[0].mxu0
    %1250 = vdwg.mxu0
    %v1252 = vsel %vm928, %v911, 0
    %v1255 = vsel %vm928, %v919, 0
    %1257 = vmatprep.subr.bf16.mxu0 0
    %1258 = vmatpush1.bf16.xpose.msra.mxu0 %v1255
    %1259 = vmatprep.subr.bf16.mxu0 0
    %1260 = vmatpush1.bf16.xpose.msra.mxu0 0
    %1261 = vmatprep.subr.bf16.mxu0 0
    %1262 = vmatpush1.bf16.xpose.msra.mxu0 0
    %1263 = vmatprep.subr.bf16.mxu0 0
    %1264 = vmatpush1.bf16.xpose.msra.mxu0 0
    %1265 = vmatprep.subr.bf16.mxu0 0
    %1266 = vmatpush1.bf16.xpose.msra.mxu0 0
    %1267 = vmatprep.subr.bf16.mxu0 0
    %1268 = vmatpush1.bf16.xpose.msra.mxu0 0
    %1269 = vmatprep.subr.bf16.mxu0 0
    %1270 = vmatpush1.bf16.xpose.msra.mxu0 0
    %1271 = vmatprep.subr.bf16.mxu0 0
    %1272 = vmatpush1.bf16.xpose.msra.mxu0 0
    %1273 = vmatprep.subr.bf16.mxu0 0
    %1274 = vmatpush1.bf16.xpose.msra.mxu0 0
    %1275 = vmatprep.subr.bf16.mxu0 0
    %1276 = vmatpush1.bf16.xpose.msra.mxu0 0
    %1277 = vmatprep.subr.bf16.mxu0 0
    %1278 = vmatpush1.bf16.xpose.msra.mxu0 0
    %1279 = vmatprep.subr.bf16.mxu0 0
    %1280 = vmatpush1.bf16.xpose.msra.mxu0 0
    %1281 = vmatprep.subr.bf16.mxu0 0
    %1282 = vmatpush1.bf16.xpose.msra.mxu0 0
    %1283 = vmatprep.subr.bf16.mxu0 0
    %1284 = vmatpush1.bf16.xpose.msra.mxu0 0
    %1285 = vmatprep.subr.bf16.mxu0 0
    %1286 = vmatpush1.bf16.xpose.msra.mxu0 0
    %1287 = vmatprep.subr.bf16.mxu0 0
    %1288 = vmatpush1.bf16.xpose.msra.mxu0 0
    %1289 = vmatprep.mubr.bf16.mxu0 0
    %1290 = vmatmul.mubr.bf16.gmra.mrb[0].mxu0 %v1252
    %v1291 = vpop.f32.mrb[0].mxu0
    %v1292 = vadd.f32 0.0, %v1291
    %v1293 = vpop.f32.mrb[0].mxu0
    %v1294 = vpop.f32.mrb[0].mxu0
    %v1295 = vpop.f32.mrb[0].mxu0
    %1296 = vdwg.mxu0
    %v1297 = vld [vmem:[#allocation5] sm:$0xf]
    %v1298 = vld [vmem:[#allocation5 + $0x4] sm:$0xf]
    %v1299 = vunpack.c.l.bf16 %v1297
    %v1300 = vunpack.c.l.bf16 %v1298
    %v1301 = vadd.f32 %v970, %v1299
    %v1302 = vadd.f32 %v1016, %v1300
    %v1303 = vadd.f32 %v1062, %v1299
    %v1304 = vadd.f32 %v1108, %v1300
    %v1305 = vadd.f32 %v1154, %v1299
    %v1306 = vadd.f32 %v1200, %v1300
    %v1307 = vadd.f32 %v1246, %v1299
    %v1308 = vadd.f32 %v1292, %v1300
    %vm1309 = vcmask 64512
    %v1310 = vsel %vm1309, %v1301, -inf
    %1311 = vmax.xlane.f32.xlu0 %v1310
    %v1312 = vpop.xlane.xlu0 %1311
    %v1313 = vsel %vm1309, %v1302, -inf
    %1314 = vmax.xlane.f32.xlu0 %v1313
    %v1315 = vpop.xlane.xlu0 %1314
    %v1316 = vsel %vm1309, %v1303, -inf
    %1317 = vmax.xlane.f32.xlu0 %v1316
    %v1318 = vpop.xlane.xlu0 %1317
    %v1319 = vsel %vm1309, %v1304, -inf
    %1320 = vmax.xlane.f32.xlu0 %v1319
    %v1321 = vpop.xlane.xlu0 %1320
    %v1322 = vsel %vm1309, %v1305, -inf
    %1323 = vmax.xlane.f32.xlu0 %v1322
    %v1324 = vpop.xlane.xlu0 %1323
    %v1325 = vsel %vm1309, %v1306, -inf
    %1326 = vmax.xlane.f32.xlu0 %v1325
    %v1327 = vpop.xlane.xlu0 %1326
    %v1328 = vsel %vm1309, %v1307, -inf
    %1329 = vmax.xlane.f32.xlu0 %v1328
    %v1330 = vpop.xlane.xlu0 %1329
    %v1331 = vsel %vm1309, %v1308, -inf
    %1332 = vmax.xlane.f32.xlu0 %v1331
    %v1333 = vpop.xlane.xlu0 %1332
    %v1334 = vsub.f32 %v1301, %v1312
    %v1335 = vsub.f32 %v1302, %v1315
    %v1336 = vsub.f32 %v1303, %v1318
    %v1337 = vsub.f32 %v1304, %v1321
    %v1338 = vsub.f32 %v1305, %v1324
    %v1339 = vsub.f32 %v1306, %v1327
    %v1340 = vsub.f32 %v1307, %v1330
    %v1341 = vsub.f32 %v1308, %v1333
    %v1342 = vmul.f32 %v1334, 1.442695
    %v1343 = vpow.pop %v1342
    %v1344 = vmul.f32 %v1335, 1.442695
    %v1345 = vpow.pop %v1344
    %v1346 = vmul.f32 %v1336, 1.442695
    %v1347 = vpow.pop %v1346
    %v1348 = vmul.f32 %v1337, 1.442695
    %v1349 = vpow.pop %v1348
    %v1350 = vmul.f32 %v1338, 1.442695
    %v1351 = vpow.pop %v1350
    %v1352 = vmul.f32 %v1339, 1.442695
    %v1353 = vpow.pop %v1352
    %v1354 = vmul.f32 %v1340, 1.442695
    %v1355 = vpow.pop %v1354
    %v1356 = vmul.f32 %v1341, 1.442695
    %v1357 = vpow.pop %v1356
    %v1358 = vsel %vm1309, %v1343, 0.0
    %1359 = vadd.xlane.f32.xlu0 %v1358
    %v1360 = vpop.xlane.xlu0 %1359
    %v1361 = vsel %vm1309, %v1345, 0.0
    %1362 = vadd.xlane.f32.xlu0 %v1361
    %v1363 = vpop.xlane.xlu0 %1362
    %v1364 = vsel %vm1309, %v1347, 0.0
    %1365 = vadd.xlane.f32.xlu0 %v1364
    %v1366 = vpop.xlane.xlu0 %1365
    %v1367 = vsel %vm1309, %v1349, 0.0
    %1368 = vadd.xlane.f32.xlu0 %v1367
    %v1369 = vpop.xlane.xlu0 %1368
    %v1370 = vsel %vm1309, %v1351, 0.0
    %1371 = vadd.xlane.f32.xlu0 %v1370
    %v1372 = vpop.xlane.xlu0 %1371
    %v1373 = vsel %vm1309, %v1353, 0.0
    %1374 = vadd.xlane.f32.xlu0 %v1373
    %v1375 = vpop.xlane.xlu0 %1374
    %v1376 = vsel %vm1309, %v1355, 0.0
    %1377 = vadd.xlane.f32.xlu0 %v1376
    %v1378 = vpop.xlane.xlu0 %1377
    %v1379 = vsel %vm1309, %v1357, 0.0
    %1380 = vadd.xlane.f32.xlu0 %v1379
    %v1381 = vpop.xlane.xlu0 %1380
    %v1382 = vrcp.pop %v1360
    %v1383 = vrcp.pop %v1363
    %v1384 = vrcp.pop %v1366
    %v1385 = vrcp.pop %v1369
    %v1386 = vrcp.pop %v1372
    %v1387 = vrcp.pop %v1375
    %v1388 = vrcp.pop %v1378
    %v1389 = vrcp.pop %v1381
    %v1390 = vmul.f32 %v1343, %v1382
    %v1391 = vmul.f32 %v1345, %v1383
    %v1392 = vmul.f32 %v1347, %v1384
    %v1393 = vmul.f32 %v1349, %v1385
    %v1394 = vmul.f32 %v1351, %v1386
    %v1395 = vmul.f32 %v1353, %v1387
    %v1396 = vmul.f32 %v1355, %v1388
    %v1397 = vmul.f32 %v1357, %v1389
    %v1398 = vpack.c.bf16 %v1390, %v1390
    %v1399 = vpack.c.bf16 %v1391, %v1391
    %v1400 = vpack.c.bf16 %v1392, %v1392
    %v1401 = vpack.c.bf16 %v1393, %v1393
    %v1402 = vpack.c.bf16 %v1394, %v1394
    %v1403 = vpack.c.bf16 %v1395, %v1395
    %v1404 = vpack.c.bf16 %v1396, %v1396
    %v1405 = vpack.c.bf16 %v1397, %v1397
    %v1407 = vsel %vm1309, %v1398, 0
    %vm1409 = vcmask 1043456
    %v1411 = vsel %vm1409, %v900, 0
    %1413 = vmatprep.subr.bf16.mxu0 0
    %1414 = vmatpush1.bf16.msra.mxu0 %v1411
    %1415 = vmatprep.subr.bf16.mxu0 0
    %1416 = vmatpush1.bf16.msra.mxu0 0
    %1417 = vmatprep.subr.bf16.mxu0 0
    %1418 = vmatpush1.bf16.msra.mxu0 0
    %1419 = vmatprep.subr.bf16.mxu0 0
    %1420 = vmatpush1.bf16.msra.mxu0 0
    %1421 = vmatprep.subr.bf16.mxu0 0
    %1422 = vmatpush1.bf16.msra.mxu0 0
    %1423 = vmatprep.subr.bf16.mxu0 0
    %1424 = vmatpush1.bf16.msra.mxu0 0
    %1425 = vmatprep.subr.bf16.mxu0 0
    %1426 = vmatpush1.bf16.msra.mxu0 0
    %1427 = vmatprep.subr.bf16.mxu0 0
    %1428 = vmatpush1.bf16.msra.mxu0 0
    %1429 = vmatprep.subr.bf16.mxu0 0
    %1430 = vmatpush1.bf16.msra.mxu0 0
    %1431 = vmatprep.subr.bf16.mxu0 0
    %1432 = vmatpush1.bf16.msra.mxu0 0
    %1433 = vmatprep.subr.bf16.mxu0 0
    %1434 = vmatpush1.bf16.msra.mxu0 0
    %1435 = vmatprep.subr.bf16.mxu0 0
    %1436 = vmatpush1.bf16.msra.mxu0 0
    %1437 = vmatprep.subr.bf16.mxu0 0
    %1438 = vmatpush1.bf16.msra.mxu0 0
    %1439 = vmatprep.subr.bf16.mxu0 0
    %1440 = vmatpush1.bf16.msra.mxu0 0
    %1441 = vmatprep.subr.bf16.mxu0 0
    %1442 = vmatpush1.bf16.msra.mxu0 0
    %1443 = vmatprep.subr.bf16.mxu0 0
    %1444 = vmatpush1.bf16.msra.mxu0 0
    %1445 = vmatprep.mubr.bf16.mxu0 0
    %1446 = vmatmul.mubr.bf16.gmra.mrb[0].mxu0 %v1407
    %v1447 = vpop.f32.mrb[0].mxu0
    %v1448 = vadd.f32 0.0, %v1447
    %v1449 = vpop.f32.mrb[0].mxu0
    %v1450 = vpop.f32.mrb[0].mxu0
    %v1451 = vpop.f32.mrb[0].mxu0
    %1452 = vdwg.mxu0
    %v1454 = vsel %vm1309, %v1399, 0
    %v1457 = vsel %vm1409, %v903, 0
    %1459 = vmatprep.subr.bf16.mxu0 0
    %1460 = vmatpush1.bf16.msra.mxu0 %v1457
    %1461 = vmatprep.subr.bf16.mxu0 0
    %1462 = vmatpush1.bf16.msra.mxu0 0
    %1463 = vmatprep.subr.bf16.mxu0 0
    %1464 = vmatpush1.bf16.msra.mxu0 0
    %1465 = vmatprep.subr.bf16.mxu0 0
    %1466 = vmatpush1.bf16.msra.mxu0 0
    %1467 = vmatprep.subr.bf16.mxu0 0
    %1468 = vmatpush1.bf16.msra.mxu0 0
    %1469 = vmatprep.subr.bf16.mxu0 0
    %1470 = vmatpush1.bf16.msra.mxu0 0
    %1471 = vmatprep.subr.bf16.mxu0 0
    %1472 = vmatpush1.bf16.msra.mxu0 0
    %1473 = vmatprep.subr.bf16.mxu0 0
    %1474 = vmatpush1.bf16.msra.mxu0 0
    %1475 = vmatprep.subr.bf16.mxu0 0
    %1476 = vmatpush1.bf16.msra.mxu0 0
    %1477 = vmatprep.subr.bf16.mxu0 0
    %1478 = vmatpush1.bf16.msra.mxu0 0
    %1479 = vmatprep.subr.bf16.mxu0 0
    %1480 = vmatpush1.bf16.msra.mxu0 0
    %1481 = vmatprep.subr.bf16.mxu0 0
    %1482 = vmatpush1.bf16.msra.mxu0 0
    %1483 = vmatprep.subr.bf16.mxu0 0
    %1484 = vmatpush1.bf16.msra.mxu0 0
    %1485 = vmatprep.subr.bf16.mxu0 0
    %1486 = vmatpush1.bf16.msra.mxu0 0
    %1487 = vmatprep.subr.bf16.mxu0 0
    %1488 = vmatpush1.bf16.msra.mxu0 0
    %1489 = vmatprep.subr.bf16.mxu0 0
    %1490 = vmatpush1.bf16.msra.mxu0 0
    %1491 = vmatprep.mubr.bf16.mxu0 0
    %1492 = vmatmul.mubr.bf16.gmra.mrb[0].mxu0 %v1454
    %v1493 = vpop.f32.mrb[0].mxu0
    %v1494 = vadd.f32 0.0, %v1493
    %v1495 = vpop.f32.mrb[0].mxu0
    %v1496 = vpop.f32.mrb[0].mxu0
    %v1497 = vpop.f32.mrb[0].mxu0
    %1498 = vdwg.mxu0
    %v1500 = vsel %vm1309, %v1400, 0
    %v1503 = vsel %vm1409, %v923, 0
    %1505 = vmatprep.subr.bf16.mxu0 0
    %1506 = vmatpush1.bf16.msra.mxu0 %v1503
    %1507 = vmatprep.subr.bf16.mxu0 0
    %1508 = vmatpush1.bf16.msra.mxu0 0
    %1509 = vmatprep.subr.bf16.mxu0 0
    %1510 = vmatpush1.bf16.msra.mxu0 0
    %1511 = vmatprep.subr.bf16.mxu0 0
    %1512 = vmatpush1.bf16.msra.mxu0 0
    %1513 = vmatprep.subr.bf16.mxu0 0
    %1514 = vmatpush1.bf16.msra.mxu0 0
    %1515 = vmatprep.subr.bf16.mxu0 0
    %1516 = vmatpush1.bf16.msra.mxu0 0
    %1517 = vmatprep.subr.bf16.mxu0 0
    %1518 = vmatpush1.bf16.msra.mxu0 0
    %1519 = vmatprep.subr.bf16.mxu0 0
    %1520 = vmatpush1.bf16.msra.mxu0 0
    %1521 = vmatprep.subr.bf16.mxu0 0
    %1522 = vmatpush1.bf16.msra.mxu0 0
    %1523 = vmatprep.subr.bf16.mxu0 0
    %1524 = vmatpush1.bf16.msra.mxu0 0
    %1525 = vmatprep.subr.bf16.mxu0 0
    %1526 = vmatpush1.bf16.msra.mxu0 0
    %1527 = vmatprep.subr.bf16.mxu0 0
    %1528 = vmatpush1.bf16.msra.mxu0 0
    %1529 = vmatprep.subr.bf16.mxu0 0
    %1530 = vmatpush1.bf16.msra.mxu0 0
    %1531 = vmatprep.subr.bf16.mxu0 0
    %1532 = vmatpush1.bf16.msra.mxu0 0
    %1533 = vmatprep.subr.bf16.mxu0 0
    %1534 = vmatpush1.bf16.msra.mxu0 0
    %1535 = vmatprep.subr.bf16.mxu0 0
    %1536 = vmatpush1.bf16.msra.mxu0 0
    %1537 = vmatprep.mubr.bf16.mxu0 0
    %1538 = vmatmul.mubr.bf16.gmra.mrb[0].mxu0 %v1500
    %v1539 = vpop.f32.mrb[0].mxu0
    %v1540 = vadd.f32 0.0, %v1539
    %v1541 = vpop.f32.mrb[0].mxu0
    %v1542 = vpop.f32.mrb[0].mxu0
    %v1543 = vpop.f32.mrb[0].mxu0
    %1544 = vdwg.mxu0
    %v1546 = vsel %vm1309, %v1401, 0
    %v1549 = vsel %vm1409, %v925, 0
    %1551 = vmatprep.subr.bf16.mxu0 0
    %1552 = vmatpush1.bf16.msra.mxu0 %v1549
    %1553 = vmatprep.subr.bf16.mxu0 0
    %1554 = vmatpush1.bf16.msra.mxu0 0
    %1555 = vmatprep.subr.bf16.mxu0 0
    %1556 = vmatpush1.bf16.msra.mxu0 0
    %1557 = vmatprep.subr.bf16.mxu0 0
    %1558 = vmatpush1.bf16.msra.mxu0 0
    %1559 = vmatprep.subr.bf16.mxu0 0
    %1560 = vmatpush1.bf16.msra.mxu0 0
    %1561 = vmatprep.subr.bf16.mxu0 0
    %1562 = vmatpush1.bf16.msra.mxu0 0
    %1563 = vmatprep.subr.bf16.mxu0 0
    %1564 = vmatpush1.bf16.msra.mxu0 0
    %1565 = vmatprep.subr.bf16.mxu0 0
    %1566 = vmatpush1.bf16.msra.mxu0 0
    %1567 = vmatprep.subr.bf16.mxu0 0
    %1568 = vmatpush1.bf16.msra.mxu0 0
    %1569 = vmatprep.subr.bf16.mxu0 0
    %1570 = vmatpush1.bf16.msra.mxu0 0
    %1571 = vmatprep.subr.bf16.mxu0 0
    %1572 = vmatpush1.bf16.msra.mxu0 0
    %1573 = vmatprep.subr.bf16.mxu0 0
    %1574 = vmatpush1.bf16.msra.mxu0 0
    %1575 = vmatprep.subr.bf16.mxu0 0
    %1576 = vmatpush1.bf16.msra.mxu0 0
    %1577 = vmatprep.subr.bf16.mxu0 0
    %1578 = vmatpush1.bf16.msra.mxu0 0
    %1579 = vmatprep.subr.bf16.mxu0 0
    %1580 = vmatpush1.bf16.msra.mxu0 0
    %1581 = vmatprep.subr.bf16.mxu0 0
    %1582 = vmatpush1.bf16.msra.mxu0 0
    %1583 = vmatprep.mubr.bf16.mxu0 0
    %1584 = vmatmul.mubr.bf16.gmra.mrb[0].mxu0 %v1546
    %v1585 = vpop.f32.mrb[0].mxu0
    %v1586 = vadd.f32 0.0, %v1585
    %v1587 = vpop.f32.mrb[0].mxu0
    %v1588 = vpop.f32.mrb[0].mxu0
    %v1589 = vpop.f32.mrb[0].mxu0
    %1590 = vdwg.mxu0
    %v1592 = vsel %vm1309, %v1402, 0
    %v1595 = vsel %vm1409, %v920, 0
    %1597 = vmatprep.subr.bf16.mxu0 0
    %1598 = vmatpush1.bf16.msra.mxu0 %v1595
    %1599 = vmatprep.subr.bf16.mxu0 0
    %1600 = vmatpush1.bf16.msra.mxu0 0
    %1601 = vmatprep.subr.bf16.mxu0 0
    %1602 = vmatpush1.bf16.msra.mxu0 0
    %1603 = vmatprep.subr.bf16.mxu0 0
    %1604 = vmatpush1.bf16.msra.mxu0 0
    %1605 = vmatprep.subr.bf16.mxu0 0
    %1606 = vmatpush1.bf16.msra.mxu0 0
    %1607 = vmatprep.subr.bf16.mxu0 0
    %1608 = vmatpush1.bf16.msra.mxu0 0
    %1609 = vmatprep.subr.bf16.mxu0 0
    %1610 = vmatpush1.bf16.msra.mxu0 0
    %1611 = vmatprep.subr.bf16.mxu0 0
    %1612 = vmatpush1.bf16.msra.mxu0 0
    %1613 = vmatprep.subr.bf16.mxu0 0
    %1614 = vmatpush1.bf16.msra.mxu0 0
    %1615 = vmatprep.subr.bf16.mxu0 0
    %1616 = vmatpush1.bf16.msra.mxu0 0
    %1617 = vmatprep.subr.bf16.mxu0 0
    %1618 = vmatpush1.bf16.msra.mxu0 0
    %1619 = vmatprep.subr.bf16.mxu0 0
    %1620 = vmatpush1.bf16.msra.mxu0 0
    %1621 = vmatprep.subr.bf16.mxu0 0
    %1622 = vmatpush1.bf16.msra.mxu0 0
    %1623 = vmatprep.subr.bf16.mxu0 0
    %1624 = vmatpush1.bf16.msra.mxu0 0
    %1625 = vmatprep.subr.bf16.mxu0 0
    %1626 = vmatpush1.bf16.msra.mxu0 0
    %1627 = vmatprep.subr.bf16.mxu0 0
    %1628 = vmatpush1.bf16.msra.mxu0 0
    %1629 = vmatprep.mubr.bf16.mxu0 0
    %1630 = vmatmul.mubr.bf16.gmra.mrb[0].mxu0 %v1592
    %v1631 = vpop.f32.mrb[0].mxu0
    %v1632 = vadd.f32 0.0, %v1631
    %v1633 = vpop.f32.mrb[0].mxu0
    %v1634 = vpop.f32.mrb[0].mxu0
    %v1635 = vpop.f32.mrb[0].mxu0
    %1636 = vdwg.mxu0
    %v1638 = vsel %vm1309, %v1403, 0
    %v1641 = vsel %vm1409, %v921, 0
    %1643 = vmatprep.subr.bf16.mxu0 0
    %1644 = vmatpush1.bf16.msra.mxu0 %v1641
    %1645 = vmatprep.subr.bf16.mxu0 0
    %1646 = vmatpush1.bf16.msra.mxu0 0
    %1647 = vmatprep.subr.bf16.mxu0 0
    %1648 = vmatpush1.bf16.msra.mxu0 0
    %1649 = vmatprep.subr.bf16.mxu0 0
    %1650 = vmatpush1.bf16.msra.mxu0 0
    %1651 = vmatprep.subr.bf16.mxu0 0
    %1652 = vmatpush1.bf16.msra.mxu0 0
    %1653 = vmatprep.subr.bf16.mxu0 0
    %1654 = vmatpush1.bf16.msra.mxu0 0
    %1655 = vmatprep.subr.bf16.mxu0 0
    %1656 = vmatpush1.bf16.msra.mxu0 0
    %1657 = vmatprep.subr.bf16.mxu0 0
    %1658 = vmatpush1.bf16.msra.mxu0 0
    %1659 = vmatprep.subr.bf16.mxu0 0
    %1660 = vmatpush1.bf16.msra.mxu0 0
    %1661 = vmatprep.subr.bf16.mxu0 0
    %1662 = vmatpush1.bf16.msra.mxu0 0
    %1663 = vmatprep.subr.bf16.mxu0 0
    %1664 = vmatpush1.bf16.msra.mxu0 0
    %1665 = vmatprep.subr.bf16.mxu0 0
    %1666 = vmatpush1.bf16.msra.mxu0 0
    %1667 = vmatprep.subr.bf16.mxu0 0
    %1668 = vmatpush1.bf16.msra.mxu0 0
    %1669 = vmatprep.subr.bf16.mxu0 0
    %1670 = vmatpush1.bf16.msra.mxu0 0
    %1671 = vmatprep.subr.bf16.mxu0 0
    %1672 = vmatpush1.bf16.msra.mxu0 0
    %1673 = vmatprep.subr.bf16.mxu0 0
    %1674 = vmatpush1.bf16.msra.mxu0 0
    %1675 = vmatprep.mubr.bf16.mxu0 0
    %1676 = vmatmul.mubr.bf16.gmra.mrb[0].mxu0 %v1638
    %v1677 = vpop.f32.mrb[0].mxu0
    %v1678 = vadd.f32 0.0, %v1677
    %v1679 = vpop.f32.mrb[0].mxu0
    %v1680 = vpop.f32.mrb[0].mxu0
    %v1681 = vpop.f32.mrb[0].mxu0
    %1682 = vdwg.mxu0
    %v1684 = vsel %vm1309, %v1404, 0
    %v1687 = vsel %vm1409, %v926, 0
    %1689 = vmatprep.subr.bf16.mxu0 0
    %1690 = vmatpush1.bf16.msra.mxu0 %v1687
    %1691 = vmatprep.subr.bf16.mxu0 0
    %1692 = vmatpush1.bf16.msra.mxu0 0
    %1693 = vmatprep.subr.bf16.mxu0 0
    %1694 = vmatpush1.bf16.msra.mxu0 0
    %1695 = vmatprep.subr.bf16.mxu0 0
    %1696 = vmatpush1.bf16.msra.mxu0 0
    %1697 = vmatprep.subr.bf16.mxu0 0
    %1698 = vmatpush1.bf16.msra.mxu0 0
    %1699 = vmatprep.subr.bf16.mxu0 0
    %1700 = vmatpush1.bf16.msra.mxu0 0
    %1701 = vmatprep.subr.bf16.mxu0 0
    %1702 = vmatpush1.bf16.msra.mxu0 0
    %1703 = vmatprep.subr.bf16.mxu0 0
    %1704 = vmatpush1.bf16.msra.mxu0 0
    %1705 = vmatprep.subr.bf16.mxu0 0
    %1706 = vmatpush1.bf16.msra.mxu0 0
    %1707 = vmatprep.subr.bf16.mxu0 0
    %1708 = vmatpush1.bf16.msra.mxu0 0
    %1709 = vmatprep.subr.bf16.mxu0 0
    %1710 = vmatpush1.bf16.msra.mxu0 0
    %1711 = vmatprep.subr.bf16.mxu0 0
    %1712 = vmatpush1.bf16.msra.mxu0 0
    %1713 = vmatprep.subr.bf16.mxu0 0
    %1714 = vmatpush1.bf16.msra.mxu0 0
    %1715 = vmatprep.subr.bf16.mxu0 0
    %1716 = vmatpush1.bf16.msra.mxu0 0
    %1717 = vmatprep.subr.bf16.mxu0 0
    %1718 = vmatpush1.bf16.msra.mxu0 0
    %1719 = vmatprep.subr.bf16.mxu0 0
    %1720 = vmatpush1.bf16.msra.mxu0 0
    %1721 = vmatprep.mubr.bf16.mxu0 0
    %1722 = vmatmul.mubr.bf16.gmra.mrb[0].mxu0 %v1684
    %v1723 = vpop.f32.mrb[0].mxu0
    %v1724 = vadd.f32 0.0, %v1723
    %v1725 = vpop.f32.mrb[0].mxu0
    %v1726 = vpop.f32.mrb[0].mxu0
    %v1727 = vpop.f32.mrb[0].mxu0
    %1728 = vdwg.mxu0
    %v1730 = vsel %vm1309, %v1405, 0
    %v1733 = vsel %vm1409, %v927, 0
    %1735 = vmatprep.subr.bf16.mxu0 0
    %1736 = vmatpush1.bf16.msra.mxu0 %v1733
    %1737 = vmatprep.subr.bf16.mxu0 0
    %1738 = vmatpush1.bf16.msra.mxu0 0
    %1739 = vmatprep.subr.bf16.mxu0 0
    %1740 = vmatpush1.bf16.msra.mxu0 0
    %1741 = vmatprep.subr.bf16.mxu0 0
    %1742 = vmatpush1.bf16.msra.mxu0 0
    %1743 = vmatprep.subr.bf16.mxu0 0
    %1744 = vmatpush1.bf16.msra.mxu0 0
    %1745 = vmatprep.subr.bf16.mxu0 0
    %1746 = vmatpush1.bf16.msra.mxu0 0
    %1747 = vmatprep.subr.bf16.mxu0 0
    %1748 = vmatpush1.bf16.msra.mxu0 0
    %1749 = vmatprep.subr.bf16.mxu0 0
    %1750 = vmatpush1.bf16.msra.mxu0 0
    %1751 = vmatprep.subr.bf16.mxu0 0
    %1752 = vmatpush1.bf16.msra.mxu0 0
    %1753 = vmatprep.subr.bf16.mxu0 0
    %1754 = vmatpush1.bf16.msra.mxu0 0
    %1755 = vmatprep.subr.bf16.mxu0 0
    %1756 = vmatpush1.bf16.msra.mxu0 0
    %1757 = vmatprep.subr.bf16.mxu0 0
    %1758 = vmatpush1.bf16.msra.mxu0 0
    %1759 = vmatprep.subr.bf16.mxu0 0
    %1760 = vmatpush1.bf16.msra.mxu0 0
    %1761 = vmatprep.subr.bf16.mxu0 0
    %1762 = vmatpush1.bf16.msra.mxu0 0
    %1763 = vmatprep.subr.bf16.mxu0 0
    %1764 = vmatpush1.bf16.msra.mxu0 0
    %1765 = vmatprep.subr.bf16.mxu0 0
    %1766 = vmatpush1.bf16.msra.mxu0 0
    %1767 = vmatprep.mubr.bf16.mxu0 0
    %1768 = vmatmul.mubr.bf16.gmra.mrb[0].mxu0 %v1730
    %v1769 = vpop.f32.mrb[0].mxu0
    %v1770 = vadd.f32 0.0, %v1769
    %v1771 = vpop.f32.mrb[0].mxu0
    %v1772 = vpop.f32.mrb[0].mxu0
    %v1773 = vpop.f32.mrb[0].mxu0
    %1774 = vdwg.mxu0
    %1777 = vrot.lane.b32.xlu0 %v1540, 64
    %v1778 = vpop.permute.xlu0 %1777
    %1779 = vrot.lane.b32.xlu0 %v1586, 64
    %v1780 = vpop.permute.xlu0 %1779
    %1785 = vrot.lane.b32.xlu0 %v1724, 64
    %v1786 = vpop.permute.xlu0 %1785
    %1787 = vrot.lane.b32.xlu0 %v1770, 64
    %v1788 = vpop.permute.xlu0 %1787
    %v1791 = vsel %vm928, %v1448, %v1778
    %v1792 = vsel %vm928, %v1494, %v1780
    %v1793 = vsel %vm928, %v1632, %v1786
    %v1794 = vsel %vm928, %v1678, %v1788
    %v1795 = vpack.c.bf16 %v1792, %v1791
    %v1796 = vpack.c.bf16 %v1794, %v1793
    %v1797 = vld [vmem:[#allocation8] sm:$0xff]
    %v1798 = vld [vmem:[#allocation8 + $0x8] sm:$0xff]
    %v1799 = vld [vmem:[#allocation8 + $0x10] sm:$0xff]
    %v1800 = vld [vmem:[#allocation8 + $0x18] sm:$0xff]
    %v1801 = vld [vmem:[#allocation8 + $0x20] sm:$0xff]
    %v1802 = vld [vmem:[#allocation8 + $0x28] sm:$0xff]
    %v1803 = vld [vmem:[#allocation8 + $0x30] sm:$0xff]
    %v1804 = vld [vmem:[#allocation8 + $0x38] sm:$0xff]
    %v1805 = vld [vmem:[#allocation8 + $0x40] sm:$0xff]
    %v1806 = vld [vmem:[#allocation8 + $0x48] sm:$0xff]
    %v1807 = vld [vmem:[#allocation8 + $0x50] sm:$0xff]
    %v1808 = vld [vmem:[#allocation8 + $0x58] sm:$0xff]
    %v1809 = vld [vmem:[#allocation8 + $0x60] sm:$0xff]
    %v1810 = vld [vmem:[#allocation8 + $0x68] sm:$0xff]
    %v1811 = vld [vmem:[#allocation8 + $0x70] sm:$0xff]
    %v1812 = vld [vmem:[#allocation8 + $0x78] sm:$0xff]
    %v1813 = vld [vmem:[#allocation8 + $0x80] sm:$0xff]
    %v1814 = vld [vmem:[#allocation8 + $0x88] sm:$0xff]
    %v1815 = vld [vmem:[#allocation8 + $0x90] sm:$0xff]
    %v1816 = vld [vmem:[#allocation8 + $0x98] sm:$0xff]
    %v1817 = vld [vmem:[#allocation8 + $0xa0] sm:$0xff]
    %v1818 = vld [vmem:[#allocation8 + $0xa8] sm:$0xff]
    %v1819 = vld [vmem:[#allocation8 + $0xb0] sm:$0xff]
    %v1820 = vld [vmem:[#allocation8 + $0xb8] sm:$0xff]
    %v1821 = vld [vmem:[#allocation8 + $0xc0] sm:$0xff]
    %v1822 = vld [vmem:[#allocation8 + $0xc8] sm:$0xff]
    %v1823 = vld [vmem:[#allocation8 + $0xd0] sm:$0xff]
    %v1824 = vld [vmem:[#allocation8 + $0xd8] sm:$0xff]
    %v1825 = vld [vmem:[#allocation8 + $0xe0] sm:$0xff]
    %v1826 = vld [vmem:[#allocation8 + $0xe8] sm:$0xff]
    %v1827 = vld [vmem:[#allocation8 + $0xf0] sm:$0xff]
    %v1828 = vld [vmem:[#allocation8 + $0xf8] sm:$0xff]
    %v1829 = vld [vmem:[%s5] sm:$0x3]
    %v1831 = vlaneseq
    %v1832 = vshrl.u32 %v1831, 7
    %v1833 = vsub.s32 0, %v1832
    %v1834 = vrot.slane %v1829, %v1833
    %v1835 = vlaneseq
    %v1836 = vshrl.u32 %v1835, 7
    %v1837 = vsub.s32 1, %v1836
    %v1838 = vrot.slane %v1829, %v1837
    %v1873 = vunpack.c.l.b16 %v1797
    %v1874 = vunpack.c.h.b16 %v1797
    %v1875 = vunpack.c.l.b16 %v1798
    %v1876 = vunpack.c.h.b16 %v1798
    %v1877 = vunpack.c.l.b16 %v1799
    %v1878 = vunpack.c.h.b16 %v1799
    %v1879 = vunpack.c.l.b16 %v1800
    %v1880 = vunpack.c.h.b16 %v1800
    %v1881 = vunpack.c.l.b16 %v1801
    %v1882 = vunpack.c.h.b16 %v1801
    %v1883 = vunpack.c.l.b16 %v1802
    %v1884 = vunpack.c.h.b16 %v1802
    %v1885 = vunpack.c.l.b16 %v1803
    %v1886 = vunpack.c.h.b16 %v1803
    %v1887 = vunpack.c.l.b16 %v1804
    %v1888 = vunpack.c.h.b16 %v1804
    %v1889 = vunpack.c.l.b16 %v1805
    %v1890 = vunpack.c.h.b16 %v1805
    %v1891 = vunpack.c.l.b16 %v1806
    %v1892 = vunpack.c.h.b16 %v1806
    %v1893 = vunpack.c.l.b16 %v1807
    %v1894 = vunpack.c.h.b16 %v1807
    %v1895 = vunpack.c.l.b16 %v1808
    %v1896 = vunpack.c.h.b16 %v1808
    %v1897 = vunpack.c.l.b16 %v1809
    %v1898 = vunpack.c.h.b16 %v1809
    %v1899 = vunpack.c.l.b16 %v1810
    %v1900 = vunpack.c.h.b16 %v1810
    %v1901 = vunpack.c.l.b16 %v1811
    %v1902 = vunpack.c.h.b16 %v1811
    %v1903 = vunpack.c.l.b16 %v1812
    %v1904 = vunpack.c.h.b16 %v1812
    %v1905 = vunpack.c.l.b16 %v1813
    %v1906 = vunpack.c.h.b16 %v1813
    %v1907 = vunpack.c.l.b16 %v1814
    %v1908 = vunpack.c.h.b16 %v1814
    %v1909 = vunpack.c.l.b16 %v1815
    %v1910 = vunpack.c.h.b16 %v1815
    %v1911 = vunpack.c.l.b16 %v1816
    %v1912 = vunpack.c.h.b16 %v1816
    %v1913 = vunpack.c.l.b16 %v1817
    %v1914 = vunpack.c.h.b16 %v1817
    %v1915 = vunpack.c.l.b16 %v1818
    %v1916 = vunpack.c.h.b16 %v1818
    %v1917 = vunpack.c.l.b16 %v1819
    %v1918 = vunpack.c.h.b16 %v1819
    %v1919 = vunpack.c.l.b16 %v1820
    %v1920 = vunpack.c.h.b16 %v1820
    %v1921 = vunpack.c.l.b16 %v1821
    %v1922 = vunpack.c.h.b16 %v1821
    %v1923 = vunpack.c.l.b16 %v1822
    %v1924 = vunpack.c.h.b16 %v1822
    %v1925 = vunpack.c.l.b16 %v1823
    %v1926 = vunpack.c.h.b16 %v1823
    %v1927 = vunpack.c.l.b16 %v1824
    %v1928 = vunpack.c.h.b16 %v1824
    %v1929 = vunpack.c.l.b16 %v1825
    %v1930 = vunpack.c.h.b16 %v1825
    %v1931 = vunpack.c.l.b16 %v1826
    %v1932 = vunpack.c.h.b16 %v1826
    %v1933 = vunpack.c.l.b16 %v1827
    %v1934 = vunpack.c.h.b16 %v1827
    %v1935 = vunpack.c.l.b16 %v1828
    %v1936 = vunpack.c.h.b16 %v1828
    %v1937 = vpack.c.b16 %v1875, %v1873
    %v1938 = vpack.c.b16 %v1876, %v1874
    %v1939 = vpack.c.b16 %v1879, %v1877
    %v1940 = vpack.c.b16 %v1880, %v1878
    %v1941 = vpack.c.b16 %v1883, %v1881
    %v1942 = vpack.c.b16 %v1884, %v1882
    %v1943 = vpack.c.b16 %v1887, %v1885
    %v1944 = vpack.c.b16 %v1888, %v1886
    %v1945 = vpack.c.b16 %v1891, %v1889
    %v1946 = vpack.c.b16 %v1892, %v1890
    %v1947 = vpack.c.b16 %v1895, %v1893
    %v1948 = vpack.c.b16 %v1896, %v1894
    %v1949 = vpack.c.b16 %v1899, %v1897
    %v1950 = vpack.c.b16 %v1900, %v1898
    %v1951 = vpack.c.b16 %v1903, %v1901
    %v1952 = vpack.c.b16 %v1904, %v1902
    %v1953 = vpack.c.b16 %v1907, %v1905
    %v1954 = vpack.c.b16 %v1908, %v1906
    %v1955 = vpack.c.b16 %v1911, %v1909
    %v1956 = vpack.c.b16 %v1912, %v1910
    %v1957 = vpack.c.b16 %v1915, %v1913
    %v1958 = vpack.c.b16 %v1916, %v1914
    %v1959 = vpack.c.b16 %v1919, %v1917
    %v1960 = vpack.c.b16 %v1920, %v1918
    %v1961 = vpack.c.b16 %v1923, %v1921
    %v1962 = vpack.c.b16 %v1924, %v1922
    %v1963 = vpack.c.b16 %v1927, %v1925
    %v1964 = vpack.c.b16 %v1928, %v1926
    %v1965 = vpack.c.b16 %v1931, %v1929
    %v1966 = vpack.c.b16 %v1932, %v1930
    %v1967 = vpack.c.b16 %v1935, %v1933
    %v1968 = vpack.c.b16 %v1936, %v1934
    %2001 = vmatprep.subr.bf16.mxu0 %v1938
    %2002 = vmatpush1.bf16.msra.mxu0 %v1937
    %2003 = vmatprep.subr.bf16.mxu0 %v1940
    %2004 = vmatpush1.bf16.msra.mxu0 %v1939
    %2005 = vmatprep.subr.bf16.mxu0 %v1942
    %2006 = vmatpush1.bf16.msra.mxu0 %v1941
    %2007 = vmatprep.subr.bf16.mxu0 %v1944
    %2008 = vmatpush1.bf16.msra.mxu0 %v1943
    %2009 = vmatprep.subr.bf16.mxu0 %v1946
    %2010 = vmatpush1.bf16.msra.mxu0 %v1945
    %2011 = vmatprep.subr.bf16.mxu0 %v1948
    %2012 = vmatpush1.bf16.msra.mxu0 %v1947
    %2013 = vmatprep.subr.bf16.mxu0 %v1950
    %2014 = vmatpush1.bf16.msra.mxu0 %v1949
    %2015 = vmatprep.subr.bf16.mxu0 %v1952
    %2016 = vmatpush1.bf16.msra.mxu0 %v1951
    %2017 = vmatprep.subr.bf16.mxu0 %v1954
    %2018 = vmatpush1.bf16.msra.mxu0 %v1953
    %2019 = vmatprep.subr.bf16.mxu0 %v1956
    %2020 = vmatpush1.bf16.msra.mxu0 %v1955
    %2021 = vmatprep.subr.bf16.mxu0 %v1958
    %2022 = vmatpush1.bf16.msra.mxu0 %v1957
    %2023 = vmatprep.subr.bf16.mxu0 %v1960
    %2024 = vmatpush1.bf16.msra.mxu0 %v1959
    %2025 = vmatprep.subr.bf16.mxu0 %v1962
    %2026 = vmatpush1.bf16.msra.mxu0 %v1961
    %2027 = vmatprep.subr.bf16.mxu0 %v1964
    %2028 = vmatpush1.bf16.msra.mxu0 %v1963
    %2029 = vmatprep.subr.bf16.mxu0 %v1966
    %2030 = vmatpush1.bf16.msra.mxu0 %v1965
    %2031 = vmatprep.subr.bf16.mxu0 %v1968
    %2032 = vmatpush1.bf16.msra.mxu0 %v1967
    %2033 = vmatprep.mubr.bf16.mxu0 %v1796
    %2034 = vmatmul.mubr.bf16.gmra.mrb[0].mxu0 %v1795
    %v2035 = vpop.f32.mrb[0].mxu0
    %v2036 = vadd.f32 %v1834, %v2035
    %v2037 = vpop.f32.mrb[0].mxu0
    %v2038 = vadd.f32 %v1838, %v2037
    %v2039 = vpop.f32.mrb[0].mxu0
    %v2040 = vadd.f32 %v1834, %v2039
    %v2041 = vpop.f32.mrb[0].mxu0
    %v2042 = vadd.f32 %v1838, %v2041
    %2043 = vdwg.mxu0
    %v2044 = vadd.f32 %v2036, %v131
    %v2045 = vadd.f32 %v2038, %v132
    %v2046 = vadd.f32 %v2040, %v133
    %v2047 = vadd.f32 %v2042, %v134
    %v2048 = vadd.f32 %v2044, %v2045
    %2049 = vadd.xlane.f32.xlu0 %v2048
    %v2050 = vpop.xlane.xlu0 %2049
    %v2051 = vadd.f32 %v2046, %v2047
    %2052 = vadd.xlane.f32.xlu0 %v2051
    %v2053 = vpop.xlane.xlu0 %2052
    %v2054 = vrcp.pop 256.0
    %v2055 = vmul.f32 %v2050, %v2054
    %v2056 = vmul.f32 %v2053, %v2054
    %v2057 = vsub.f32 %v2044, %v2055
    %v2058 = vsub.f32 %v2045, %v2055
    %v2059 = vsub.f32 %v2046, %v2056
    %v2060 = vsub.f32 %v2047, %v2056
    %v2061 = vmul.f32 %v2057, %v2057
    %v2062 = vmul.f32 %v2058, %v2058
    %v2063 = vmul.f32 %v2059, %v2059
    %v2064 = vmul.f32 %v2060, %v2060
    %v2065 = vadd.f32 %v2061, %v2062
    %2066 = vadd.xlane.f32.xlu0 %v2065
    %v2067 = vpop.xlane.xlu0 %2066
    %v2068 = vadd.f32 %v2063, %v2064
    %2069 = vadd.xlane.f32.xlu0 %v2068
    %v2070 = vpop.xlane.xlu0 %2069
    %v2071 = vmul.f32 %v2067, %v2054
    %v2072 = vmul.f32 %v2070, %v2054
    %v2073 = vadd.f32 %v2071, 1e-05
    %v2074 = vadd.f32 %v2072, 1e-05
    %v2075 = vrsqrt.pop %v2073
    %v2076 = vrsqrt.pop %v2074
    %v2077 = vmul.f32 %v2057, %v2075
    %v2078 = vmul.f32 %v2058, %v2075
    %v2079 = vmul.f32 %v2059, %v2076
    %v2080 = vmul.f32 %v2060, %v2076
    %v2081 = vld [vmem:[%s6] sm:$0x3]
    %v2083 = vlaneseq
    %v2084 = vshrl.u32 %v2083, 7
    %v2085 = vsub.s32 0, %v2084
    %v2086 = vrot.slane %v2081, %v2085
    %v2087 = vlaneseq
    %v2088 = vshrl.u32 %v2087, 7
    %v2089 = vsub.s32 1, %v2088
    %v2090 = vrot.slane %v2081, %v2089
    %v2093 = vmul.f32 %v2077, %v2086
    %v2094 = vmul.f32 %v2078, %v2090
    %v2095 = vmul.f32 %v2079, %v2086
    %v2096 = vmul.f32 %v2080, %v2090
    %v2097 = vld [vmem:[%s7] sm:$0x3]
    %v2099 = vlaneseq
    %v2100 = vshrl.u32 %v2099, 7
    %v2101 = vsub.s32 0, %v2100
    %v2102 = vrot.slane %v2097, %v2101
    %v2103 = vlaneseq
    %v2104 = vshrl.u32 %v2103, 7
    %v2105 = vsub.s32 1, %v2104
    %v2106 = vrot.slane %v2097, %v2105
    %v2109 = vadd.f32 %v2093, %v2102
    %v2110 = vadd.f32 %v2094, %v2106
    %v2111 = vadd.f32 %v2095, %v2102
    %v2112 = vadd.f32 %v2096, %v2106
    %v2113 = vpack.c.bf16 %v2111, %v2109
    %v2114 = vpack.c.bf16 %v2112, %v2110
    %v2115 = vld [vmem:[#allocation10] sm:$0xff]
    %v2116 = vld [vmem:[#allocation10 + $0x8] sm:$0xff]
    %v2117 = vld [vmem:[#allocation10 + $0x10] sm:$0xff]
    %v2118 = vld [vmem:[#allocation10 + $0x18] sm:$0xff]
    %v2119 = vld [vmem:[#allocation10 + $0x20] sm:$0xff]
    %v2120 = vld [vmem:[#allocation10 + $0x28] sm:$0xff]
    %v2121 = vld [vmem:[#allocation10 + $0x30] sm:$0xff]
    %v2122 = vld [vmem:[#allocation10 + $0x38] sm:$0xff]
    %v2123 = vld [vmem:[#allocation10 + $0x40] sm:$0xff]
    %v2124 = vld [vmem:[#allocation10 + $0x48] sm:$0xff]
    %v2125 = vld [vmem:[#allocation10 + $0x50] sm:$0xff]
    %v2126 = vld [vmem:[#allocation10 + $0x58] sm:$0xff]
    %v2127 = vld [vmem:[#allocation10 + $0x60] sm:$0xff]
    %v2128 = vld [vmem:[#allocation10 + $0x68] sm:$0xff]
    %v2129 = vld [vmem:[#allocation10 + $0x70] sm:$0xff]
    %v2130 = vld [vmem:[#allocation10 + $0x78] sm:$0xff]
    %v2131 = vld [vmem:[#allocation10 + $0x80] sm:$0xff]
    %v2132 = vld [vmem:[#allocation10 + $0x88] sm:$0xff]
    %v2133 = vld [vmem:[#allocation10 + $0x90] sm:$0xff]
    %v2134 = vld [vmem:[#allocation10 + $0x98] sm:$0xff]
    %v2135 = vld [vmem:[#allocation10 + $0xa0] sm:$0xff]
    %v2136 = vld [vmem:[#allocation10 + $0xa8] sm:$0xff]
    %v2137 = vld [vmem:[#allocation10 + $0xb0] sm:$0xff]
    %v2138 = vld [vmem:[#allocation10 + $0xb8] sm:$0xff]
    %v2139 = vld [vmem:[#allocation10 + $0xc0] sm:$0xff]
    %v2140 = vld [vmem:[#allocation10 + $0xc8] sm:$0xff]
    %v2141 = vld [vmem:[#allocation10 + $0xd0] sm:$0xff]
    %v2142 = vld [vmem:[#allocation10 + $0xd8] sm:$0xff]
    %v2143 = vld [vmem:[#allocation10 + $0xe0] sm:$0xff]
    %v2144 = vld [vmem:[#allocation10 + $0xe8] sm:$0xff]
    %v2145 = vld [vmem:[#allocation10 + $0xf0] sm:$0xff]
    %v2146 = vld [vmem:[#allocation10 + $0xf8] sm:$0xff]
    %v2147 = vld [vmem:[#allocation10 + $0x100] sm:$0xff]
    %v2148 = vld [vmem:[#allocation10 + $0x108] sm:$0xff]
    %v2149 = vld [vmem:[#allocation10 + $0x110] sm:$0xff]
    %v2150 = vld [vmem:[#allocation10 + $0x118] sm:$0xff]
    %v2151 = vld [vmem:[#allocation10 + $0x120] sm:$0xff]
    %v2152 = vld [vmem:[#allocation10 + $0x128] sm:$0xff]
    %v2153 = vld [vmem:[#allocation10 + $0x130] sm:$0xff]
    %v2154 = vld [vmem:[#allocation10 + $0x138] sm:$0xff]
    %v2155 = vld [vmem:[#allocation10 + $0x140] sm:$0xff]
    %v2156 = vld [vmem:[#allocation10 + $0x148] sm:$0xff]
    %v2157 = vld [vmem:[#allocation10 + $0x150] sm:$0xff]
    %v2158 = vld [vmem:[#allocation10 + $0x158] sm:$0xff]
    %v2159 = vld [vmem:[#allocation10 + $0x160] sm:$0xff]
    %v2160 = vld [vmem:[#allocation10 + $0x168] sm:$0xff]
    %v2161 = vld [vmem:[#allocation10 + $0x170] sm:$0xff]
    %v2162 = vld [vmem:[#allocation10 + $0x178] sm:$0xff]
    %v2163 = vld [vmem:[#allocation10 + $0x180] sm:$0xff]
    %v2164 = vld [vmem:[#allocation10 + $0x188] sm:$0xff]
    %v2165 = vld [vmem:[#allocation10 + $0x190] sm:$0xff]
    %v2166 = vld [vmem:[#allocation10 + $0x198] sm:$0xff]
    %v2167 = vld [vmem:[#allocation10 + $0x1a0] sm:$0xff]
    %v2168 = vld [vmem:[#allocation10 + $0x1a8] sm:$0xff]
    %v2169 = vld [vmem:[#allocation10 + $0x1b0] sm:$0xff]
    %v2170 = vld [vmem:[#allocation10 + $0x1b8] sm:$0xff]
    %v2171 = vld [vmem:[#allocation10 + $0x1c0] sm:$0xff]
    %v2172 = vld [vmem:[#allocation10 + $0x1c8] sm:$0xff]
    %v2173 = vld [vmem:[#allocation10 + $0x1d0] sm:$0xff]
    %v2174 = vld [vmem:[#allocation10 + $0x1d8] sm:$0xff]
    %v2175 = vld [vmem:[#allocation10 + $0x1e0] sm:$0xff]
    %v2176 = vld [vmem:[#allocation10 + $0x1e8] sm:$0xff]
    %v2177 = vld [vmem:[#allocation10 + $0x1f0] sm:$0xff]
    %v2178 = vld [vmem:[#allocation10 + $0x1f8] sm:$0xff]
    %v2179 = vld [vmem:[%s9] sm:$0xf]
    %v2181 = vlaneseq
    %v2182 = vshrl.u32 %v2181, 7
    %v2183 = vsub.s32 0, %v2182
    %v2184 = vrot.slane %v2179, %v2183
    %v2185 = vlaneseq
    %v2186 = vshrl.u32 %v2185, 7
    %v2187 = vsub.s32 1, %v2186
    %v2188 = vrot.slane %v2179, %v2187
    %v2189 = vlaneseq
    %v2190 = vshrl.u32 %v2189, 7
    %v2191 = vsub.s32 2, %v2190
    %v2192 = vrot.slane %v2179, %v2191
    %v2193 = vlaneseq
    %v2194 = vshrl.u32 %v2193, 7
    %v2195 = vsub.s32 3, %v2194
    %v2196 = vrot.slane %v2179, %v2195
    %v2265 = vunpack.c.l.b16 %v2115
    %v2266 = vunpack.c.h.b16 %v2115
    %v2267 = vunpack.c.l.b16 %v2116
    %v2268 = vunpack.c.h.b16 %v2116
    %v2269 = vunpack.c.l.b16 %v2117
    %v2270 = vunpack.c.h.b16 %v2117
    %v2271 = vunpack.c.l.b16 %v2118
    %v2272 = vunpack.c.h.b16 %v2118
    %v2273 = vunpack.c.l.b16 %v2119
    %v2274 = vunpack.c.h.b16 %v2119
    %v2275 = vunpack.c.l.b16 %v2120
    %v2276 = vunpack.c.h.b16 %v2120
    %v2277 = vunpack.c.l.b16 %v2121
    %v2278 = vunpack.c.h.b16 %v2121
    %v2279 = vunpack.c.l.b16 %v2122
    %v2280 = vunpack.c.h.b16 %v2122
    %v2281 = vunpack.c.l.b16 %v2123
    %v2282 = vunpack.c.h.b16 %v2123
    %v2283 = vunpack.c.l.b16 %v2124
    %v2284 = vunpack.c.h.b16 %v2124
    %v2285 = vunpack.c.l.b16 %v2125
    %v2286 = vunpack.c.h.b16 %v2125
    %v2287 = vunpack.c.l.b16 %v2126
    %v2288 = vunpack.c.h.b16 %v2126
    %v2289 = vunpack.c.l.b16 %v2127
    %v2290 = vunpack.c.h.b16 %v2127
    %v2291 = vunpack.c.l.b16 %v2128
    %v2292 = vunpack.c.h.b16 %v2128
    %v2293 = vunpack.c.l.b16 %v2129
    %v2294 = vunpack.c.h.b16 %v2129
    %v2295 = vunpack.c.l.b16 %v2130
    %v2296 = vunpack.c.h.b16 %v2130
    %v2297 = vunpack.c.l.b16 %v2131
    %v2298 = vunpack.c.h.b16 %v2131
    %v2299 = vunpack.c.l.b16 %v2132
    %v2300 = vunpack.c.h.b16 %v2132
    %v2301 = vunpack.c.l.b16 %v2133
    %v2302 = vunpack.c.h.b16 %v2133
    %v2303 = vunpack.c.l.b16 %v2134
    %v2304 = vunpack.c.h.b16 %v2134
    %v2305 = vunpack.c.l.b16 %v2135
    %v2306 = vunpack.c.h.b16 %v2135
    %v2307 = vunpack.c.l.b16 %v2136
    %v2308 = vunpack.c.h.b16 %v2136
    %v2309 = vunpack.c.l.b16 %v2137
    %v2310 = vunpack.c.h.b16 %v2137
    %v2311 = vunpack.c.l.b16 %v2138
    %v2312 = vunpack.c.h.b16 %v2138
    %v2313 = vunpack.c.l.b16 %v2139
    %v2314 = vunpack.c.h.b16 %v2139
    %v2315 = vunpack.c.l.b16 %v2140
    %v2316 = vunpack.c.h.b16 %v2140
    %v2317 = vunpack.c.l.b16 %v2141
    %v2318 = vunpack.c.h.b16 %v2141
    %v2319 = vunpack.c.l.b16 %v2142
    %v2320 = vunpack.c.h.b16 %v2142
    %v2321 = vunpack.c.l.b16 %v2143
    %v2322 = vunpack.c.h.b16 %v2143
    %v2323 = vunpack.c.l.b16 %v2144
    %v2324 = vunpack.c.h.b16 %v2144
    %v2325 = vunpack.c.l.b16 %v2145
    %v2326 = vunpack.c.h.b16 %v2145
    %v2327 = vunpack.c.l.b16 %v2146
    %v2328 = vunpack.c.h.b16 %v2146
    %v2329 = vunpack.c.l.b16 %v2147
    %v2330 = vunpack.c.h.b16 %v2147
    %v2331 = vunpack.c.l.b16 %v2148
    %v2332 = vunpack.c.h.b16 %v2148
    %v2333 = vunpack.c.l.b16 %v2149
    %v2334 = vunpack.c.h.b16 %v2149
    %v2335 = vunpack.c.l.b16 %v2150
    %v2336 = vunpack.c.h.b16 %v2150
    %v2337 = vunpack.c.l.b16 %v2151
    %v2338 = vunpack.c.h.b16 %v2151
    %v2339 = vunpack.c.l.b16 %v2152
    %v2340 = vunpack.c.h.b16 %v2152
    %v2341 = vunpack.c.l.b16 %v2153
    %v2342 = vunpack.c.h.b16 %v2153
    %v2343 = vunpack.c.l.b16 %v2154
    %v2344 = vunpack.c.h.b16 %v2154
    %v2345 = vunpack.c.l.b16 %v2155
    %v2346 = vunpack.c.h.b16 %v2155
    %v2347 = vunpack.c.l.b16 %v2156
    %v2348 = vunpack.c.h.b16 %v2156
    %v2349 = vunpack.c.l.b16 %v2157
    %v2350 = vunpack.c.h.b16 %v2157
    %v2351 = vunpack.c.l.b16 %v2158
    %v2352 = vunpack.c.h.b16 %v2158
    %v2353 = vunpack.c.l.b16 %v2159
    %v2354 = vunpack.c.h.b16 %v2159
    %v2355 = vunpack.c.l.b16 %v2160
    %v2356 = vunpack.c.h.b16 %v2160
    %v2357 = vunpack.c.l.b16 %v2161
    %v2358 = vunpack.c.h.b16 %v2161
    %v2359 = vunpack.c.l.b16 %v2162
    %v2360 = vunpack.c.h.b16 %v2162
    %v2361 = vunpack.c.l.b16 %v2163
    %v2362 = vunpack.c.h.b16 %v2163
    %v2363 = vunpack.c.l.b16 %v2164
    %v2364 = vunpack.c.h.b16 %v2164
    %v2365 = vunpack.c.l.b16 %v2165
    %v2366 = vunpack.c.h.b16 %v2165
    %v2367 = vunpack.c.l.b16 %v2166
    %v2368 = vunpack.c.h.b16 %v2166
    %v2369 = vunpack.c.l.b16 %v2167
    %v2370 = vunpack.c.h.b16 %v2167
    %v2371 = vunpack.c.l.b16 %v2168
    %v2372 = vunpack.c.h.b16 %v2168
    %v2373 = vunpack.c.l.b16 %v2169
    %v2374 = vunpack.c.h.b16 %v2169
    %v2375 = vunpack.c.l.b16 %v2170
    %v2376 = vunpack.c.h.b16 %v2170
    %v2377 = vunpack.c.l.b16 %v2171
    %v2378 = vunpack.c.h.b16 %v2171
    %v2379 = vunpack.c.l.b16 %v2172
    %v2380 = vunpack.c.h.b16 %v2172
    %v2381 = vunpack.c.l.b16 %v2173
    %v2382 = vunpack.c.h.b16 %v2173
    %v2383 = vunpack.c.l.b16 %v2174
    %v2384 = vunpack.c.h.b16 %v2174
    %v2385 = vunpack.c.l.b16 %v2175
    %v2386 = vunpack.c.h.b16 %v2175
    %v2387 = vunpack.c.l.b16 %v2176
    %v2388 = vunpack.c.h.b16 %v2176
    %v2389 = vunpack.c.l.b16 %v2177
    %v2390 = vunpack.c.h.b16 %v2177
    %v2391 = vunpack.c.l.b16 %v2178
    %v2392 = vunpack.c.h.b16 %v2178
    %v2393 = vpack.c.b16 %v2269, %v2265
    %v2394 = vpack.c.b16 %v2270, %v2266
    %v2395 = vpack.c.b16 %v2271, %v2267
    %v2396 = vpack.c.b16 %v2272, %v2268
    %v2397 = vpack.c.b16 %v2277, %v2273
    %v2398 = vpack.c.b16 %v2278, %v2274
    %v2399 = vpack.c.b16 %v2279, %v2275
    %v2400 = vpack.c.b16 %v2280, %v2276
    %v2401 = vpack.c.b16 %v2285, %v2281
    %v2402 = vpack.c.b16 %v2286, %v2282
    %v2403 = vpack.c.b16 %v2287, %v2283
    %v2404 = vpack.c.b16 %v2288, %v2284
    %v2405 = vpack.c.b16 %v2293, %v2289
    %v2406 = vpack.c.b16 %v2294, %v2290
    %v2407 = vpack.c.b16 %v2295, %v2291
    %v2408 = vpack.c.b16 %v2296, %v2292
    %v2409 = vpack.c.b16 %v2301, %v2297
    %v2410 = vpack.c.b16 %v2302, %v2298
    %v2411 = vpack.c.b16 %v2303, %v2299
    %v2412 = vpack.c.b16 %v2304, %v2300
    %v2413 = vpack.c.b16 %v2309, %v2305
    %v2414 = vpack.c.b16 %v2310, %v2306
    %v2415 = vpack.c.b16 %v2311, %v2307
    %v2416 = vpack.c.b16 %v2312, %v2308
    %v2417 = vpack.c.b16 %v2317, %v2313
    %v2418 = vpack.c.b16 %v2318, %v2314
    %v2419 = vpack.c.b16 %v2319, %v2315
    %v2420 = vpack.c.b16 %v2320, %v2316
    %v2421 = vpack.c.b16 %v2325, %v2321
    %v2422 = vpack.c.b16 %v2326, %v2322
    %v2423 = vpack.c.b16 %v2327, %v2323
    %v2424 = vpack.c.b16 %v2328, %v2324
    %v2425 = vpack.c.b16 %v2333, %v2329
    %v2426 = vpack.c.b16 %v2334, %v2330
    %v2427 = vpack.c.b16 %v2335, %v2331
    %v2428 = vpack.c.b16 %v2336, %v2332
    %v2429 = vpack.c.b16 %v2341, %v2337
    %v2430 = vpack.c.b16 %v2342, %v2338
    %v2431 = vpack.c.b16 %v2343, %v2339
    %v2432 = vpack.c.b16 %v2344, %v2340
    %v2433 = vpack.c.b16 %v2349, %v2345
    %v2434 = vpack.c.b16 %v2350, %v2346
    %v2435 = vpack.c.b16 %v2351, %v2347
    %v2436 = vpack.c.b16 %v2352, %v2348
    %v2437 = vpack.c.b16 %v2357, %v2353
    %v2438 = vpack.c.b16 %v2358, %v2354
    %v2439 = vpack.c.b16 %v2359, %v2355
    %v2440 = vpack.c.b16 %v2360, %v2356
    %v2441 = vpack.c.b16 %v2365, %v2361
    %v2442 = vpack.c.b16 %v2366, %v2362
    %v2443 = vpack.c.b16 %v2367, %v2363
    %v2444 = vpack.c.b16 %v2368, %v2364
    %v2445 = vpack.c.b16 %v2373, %v2369
    %v2446 = vpack.c.b16 %v2374, %v2370
    %v2447 = vpack.c.b16 %v2375, %v2371
    %v2448 = vpack.c.b16 %v2376, %v2372
    %v2449 = vpack.c.b16 %v2381, %v2377
    %v2450 = vpack.c.b16 %v2382, %v2378
    %v2451 = vpack.c.b16 %v2383, %v2379
    %v2452 = vpack.c.b16 %v2384, %v2380
    %v2453 = vpack.c.b16 %v2389, %v2385
    %v2454 = vpack.c.b16 %v2390, %v2386
    %v2455 = vpack.c.b16 %v2391, %v2387
    %v2456 = vpack.c.b16 %v2392, %v2388
    %2521 = vmatprep.subr.bf16.mxu0 %v2394
    %2522 = vmatpush1.bf16.msra.mxu0 %v2393
    %2523 = vmatprep.subr.bf16.mxu0 %v2398
    %2524 = vmatpush1.bf16.msra.mxu0 %v2397
    %2525 = vmatprep.subr.bf16.mxu0 %v2402
    %2526 = vmatpush1.bf16.msra.mxu0 %v2401
    %2527 = vmatprep.subr.bf16.mxu0 %v2406
    %2528 = vmatpush1.bf16.msra.mxu0 %v2405
    %2529 = vmatprep.subr.bf16.mxu0 %v2410
    %2530 = vmatpush1.bf16.msra.mxu0 %v2409
    %2531 = vmatprep.subr.bf16.mxu0 %v2414
    %2532 = vmatpush1.bf16.msra.mxu0 %v2413
    %2533 = vmatprep.subr.bf16.mxu0 %v2418
    %2534 = vmatpush1.bf16.msra.mxu0 %v2417
    %2535 = vmatprep.subr.bf16.mxu0 %v2422
    %2536 = vmatpush1.bf16.msra.mxu0 %v2421
    %2537 = vmatprep.subr.bf16.mxu0 %v2426
    %2538 = vmatpush1.bf16.msra.mxu0 %v2425
    %2539 = vmatprep.subr.bf16.mxu0 %v2430
    %2540 = vmatpush1.bf16.msra.mxu0 %v2429
    %2541 = vmatprep.subr.bf16.mxu0 %v2434
    %2542 = vmatpush1.bf16.msra.mxu0 %v2433
    %2543 = vmatprep.subr.bf16.mxu0 %v2438
    %2544 = vmatpush1.bf16.msra.mxu0 %v2437
    %2545 = vmatprep.subr.bf16.mxu0 %v2442
    %2546 = vmatpush1.bf16.msra.mxu0 %v2441
    %2547 = vmatprep.subr.bf16.mxu0 %v2446
    %2548 = vmatpush1.bf16.msra.mxu0 %v2445
    %2549 = vmatprep.subr.bf16.mxu0 %v2450
    %2550 = vmatpush1.bf16.msra.mxu0 %v2449
    %2551 = vmatprep.subr.bf16.mxu0 %v2454
    %2552 = vmatpush1.bf16.msra.mxu0 %v2453
    %2553 = vmatprep.mubr.bf16.mxu0 %v2114
    %2554 = vmatmul.mubr.bf16.gmra.mrb[0].mxu0 %v2113
    %v2555 = vpop.f32.mrb[0].mxu0
    %v2556 = vadd.f32 %v2184, %v2555
    %v2557 = vpop.f32.mrb[0].mxu0
    %v2558 = vadd.f32 %v2188, %v2557
    %v2559 = vpop.f32.mrb[0].mxu0
    %v2560 = vadd.f32 %v2184, %v2559
    %v2561 = vpop.f32.mrb[0].mxu0
    %v2562 = vadd.f32 %v2188, %v2561
    %2563 = vdwg.mxu0
    %2564 = vmatprep.subr.bf16.mxu0 %v2396
    %2565 = vmatpush1.bf16.msra.mxu0 %v2395
    %2566 = vmatprep.subr.bf16.mxu0 %v2400
    %2567 = vmatpush1.bf16.msra.mxu0 %v2399
    %2568 = vmatprep.subr.bf16.mxu0 %v2404
    %2569 = vmatpush1.bf16.msra.mxu0 %v2403
    %2570 = vmatprep.subr.bf16.mxu0 %v2408
    %2571 = vmatpush1.bf16.msra.mxu0 %v2407
    %2572 = vmatprep.subr.bf16.mxu0 %v2412
    %2573 = vmatpush1.bf16.msra.mxu0 %v2411
    %2574 = vmatprep.subr.bf16.mxu0 %v2416
    %2575 = vmatpush1.bf16.msra.mxu0 %v2415
    %2576 = vmatprep.subr.bf16.mxu0 %v2420
    %2577 = vmatpush1.bf16.msra.mxu0 %v2419
    %2578 = vmatprep.subr.bf16.mxu0 %v2424
    %2579 = vmatpush1.bf16.msra.mxu0 %v2423
    %2580 = vmatprep.subr.bf16.mxu0 %v2428
    %2581 = vmatpush1.bf16.msra.mxu0 %v2427
    %2582 = vmatprep.subr.bf16.mxu0 %v2432
    %2583 = vmatpush1.bf16.msra.mxu0 %v2431
    %2584 = vmatprep.subr.bf16.mxu0 %v2436
    %2585 = vmatpush1.bf16.msra.mxu0 %v2435
    %2586 = vmatprep.subr.bf16.mxu0 %v2440
    %2587 = vmatpush1.bf16.msra.mxu0 %v2439
    %2588 = vmatprep.subr.bf16.mxu0 %v2444
    %2589 = vmatpush1.bf16.msra.mxu0 %v2443
    %2590 = vmatprep.subr.bf16.mxu0 %v2448
    %2591 = vmatpush1.bf16.msra.mxu0 %v2447
    %2592 = vmatprep.subr.bf16.mxu0 %v2452
    %2593 = vmatpush1.bf16.msra.mxu0 %v2451
    %2594 = vmatprep.subr.bf16.mxu0 %v2456
    %2595 = vmatpush1.bf16.msra.mxu0 %v2455
    %2596 = vmatprep.mubr.bf16.mxu0 %v2114
    %2597 = vmatmul.mubr.bf16.gmra.mrb[0].mxu0 %v2113
    %v2598 = vpop.f32.mrb[0].mxu0
    %v2599 = vadd.f32 %v2192, %v2598
    %v2600 = vpop.f32.mrb[0].mxu0
    %v2601 = vadd.f32 %v2196, %v2600
    %v2602 = vpop.f32.mrb[0].mxu0
    %v2603 = vadd.f32 %v2192, %v2602
    %v2604 = vpop.f32.mrb[0].mxu0
    %v2605 = vadd.f32 %v2196, %v2604
    %2606 = vdwg.mxu0
    %v2607 = vmul.f32 %v2556, 0.5
    %v2608 = vmul.f32 %v2558, 0.5
    %v2609 = vmul.f32 %v2599, 0.5
    %v2610 = vmul.f32 %v2601, 0.5
    %v2611 = vmul.f32 %v2560, 0.5
    %v2612 = vmul.f32 %v2562, 0.5
    %v2613 = vmul.f32 %v2603, 0.5
    %v2614 = vmul.f32 %v2605, 0.5
    %v2615 = vmul.f32 %v2556, 0.044715
    %v2616 = vmul.f32 %v2558, 0.044715
    %v2617 = vmul.f32 %v2599, 0.044715
    %v2618 = vmul.f32 %v2601, 0.044715
    %v2619 = vmul.f32 %v2560, 0.044715
    %v2620 = vmul.f32 %v2562, 0.044715
    %v2621 = vmul.f32 %v2603, 0.044715
    %v2622 = vmul.f32 %v2605, 0.044715
    %v2623 = vmul.f32 %v2615, %v2556
    %v2624 = vmul.f32 %v2616, %v2558
    %v2625 = vmul.f32 %v2617, %v2599
    %v2626 = vmul.f32 %v2618, %v2601
    %v2627 = vmul.f32 %v2619, %v2560
    %v2628 = vmul.f32 %v2620, %v2562
    %v2629 = vmul.f32 %v2621, %v2603
    %v2630 = vmul.f32 %v2622, %v2605
    %v2631 = vmul.f32 %v2623, %v2556
    %v2632 = vmul.f32 %v2624, %v2558
    %v2633 = vmul.f32 %v2625, %v2599
    %v2634 = vmul.f32 %v2626, %v2601
    %v2635 = vmul.f32 %v2627, %v2560
    %v2636 = vmul.f32 %v2628, %v2562
    %v2637 = vmul.f32 %v2629, %v2603
    %v2638 = vmul.f32 %v2630, %v2605
    %v2639 = vadd.f32 %v2556, %v2631
    %v2640 = vadd.f32 %v2558, %v2632
    %v2641 = vadd.f32 %v2599, %v2633
    %v2642 = vadd.f32 %v2601, %v2634
    %v2643 = vadd.f32 %v2560, %v2635
    %v2644 = vadd.f32 %v2562, %v2636
    %v2645 = vadd.f32 %v2603, %v2637
    %v2646 = vadd.f32 %v2605, %v2638
    %v2647 = vmul.f32 %v2639, 0.7978846
    %v2648 = vmul.f32 %v2640, 0.7978846
    %v2649 = vmul.f32 %v2641, 0.7978846
    %v2650 = vmul.f32 %v2642, 0.7978846
    %v2651 = vmul.f32 %v2643, 0.7978846
    %v2652 = vmul.f32 %v2644, 0.7978846
    %v2653 = vmul.f32 %v2645, 0.7978846
    %v2654 = vmul.f32 %v2646, 0.7978846
    %v2655 = vtanh.pop %v2647
    %v2656 = vtanh.pop %v2648
    %v2657 = vtanh.pop %v2649
    %v2658 = vtanh.pop %v2650
    %v2659 = vtanh.pop %v2651
    %v2660 = vtanh.pop %v2652
    %v2661 = vtanh.pop %v2653
    %v2662 = vtanh.pop %v2654
    %v2663 = vadd.f32 %v2655, 1.0
    %v2664 = vadd.f32 %v2656, 1.0
    %v2665 = vadd.f32 %v2657, 1.0
    %v2666 = vadd.f32 %v2658, 1.0
    %v2667 = vadd.f32 %v2659, 1.0
    %v2668 = vadd.f32 %v2660, 1.0
    %v2669 = vadd.f32 %v2661, 1.0
    %v2670 = vadd.f32 %v2662, 1.0
    %v2671 = vmul.f32 %v2607, %v2663
    %v2672 = vmul.f32 %v2608, %v2664
    %v2673 = vmul.f32 %v2609, %v2665
    %v2674 = vmul.f32 %v2610, %v2666
    %v2675 = vmul.f32 %v2611, %v2667
    %v2676 = vmul.f32 %v2612, %v2668
    %v2677 = vmul.f32 %v2613, %v2669
    %v2678 = vmul.f32 %v2614, %v2670
    %v2679 = vpack.c.bf16 %v2675, %v2671
    %v2680 = vpack.c.bf16 %v2676, %v2672
    %v2681 = vpack.c.bf16 %v2677, %v2673
    %v2682 = vpack.c.bf16 %v2678, %v2674
    %v2683 = vld [vmem:[#allocation11] sm:$0xff]
    %v2684 = vld [vmem:[#allocation11 + $0x8] sm:$0xff]
    %v2685 = vld [vmem:[#allocation11 + $0x10] sm:$0xff]
    %v2686 = vld [vmem:[#allocation11 + $0x18] sm:$0xff]
    %v2687 = vld [vmem:[#allocation11 + $0x20] sm:$0xff]
    %v2688 = vld [vmem:[#allocation11 + $0x28] sm:$0xff]
    %v2689 = vld [vmem:[#allocation11 + $0x30] sm:$0xff]
    %v2690 = vld [vmem:[#allocation11 + $0x38] sm:$0xff]
    %v2691 = vld [vmem:[#allocation11 + $0x40] sm:$0xff]
    %v2692 = vld [vmem:[#allocation11 + $0x48] sm:$0xff]
    %v2693 = vld [vmem:[#allocation11 + $0x50] sm:$0xff]
    %v2694 = vld [vmem:[#allocation11 + $0x58] sm:$0xff]
    %v2695 = vld [vmem:[#allocation11 + $0x60] sm:$0xff]
    %v2696 = vld [vmem:[#allocation11 + $0x68] sm:$0xff]
    %v2697 = vld [vmem:[#allocation11 + $0x70] sm:$0xff]
    %v2698 = vld [vmem:[#allocation11 + $0x78] sm:$0xff]
    %v2699 = vld [vmem:[#allocation11 + $0x80] sm:$0xff]
    %v2700 = vld [vmem:[#allocation11 + $0x88] sm:$0xff]
    %v2701 = vld [vmem:[#allocation11 + $0x90] sm:$0xff]
    %v2702 = vld [vmem:[#allocation11 + $0x98] sm:$0xff]
    %v2703 = vld [vmem:[#allocation11 + $0xa0] sm:$0xff]
    %v2704 = vld [vmem:[#allocation11 + $0xa8] sm:$0xff]
    %v2705 = vld [vmem:[#allocation11 + $0xb0] sm:$0xff]
    %v2706 = vld [vmem:[#allocation11 + $0xb8] sm:$0xff]
    %v2707 = vld [vmem:[#allocation11 + $0xc0] sm:$0xff]
    %v2708 = vld [vmem:[#allocation11 + $0xc8] sm:$0xff]
    %v2709 = vld [vmem:[#allocation11 + $0xd0] sm:$0xff]
    %v2710 = vld [vmem:[#allocation11 + $0xd8] sm:$0xff]
    %v2711 = vld [vmem:[#allocation11 + $0xe0] sm:$0xff]
    %v2712 = vld [vmem:[#allocation11 + $0xe8] sm:$0xff]
    %v2713 = vld [vmem:[#allocation11 + $0xf0] sm:$0xff]
    %v2714 = vld [vmem:[#allocation11 + $0xf8] sm:$0xff]
    %v2715 = vld [vmem:[#allocation11 + $0x100] sm:$0xff]
    %v2716 = vld [vmem:[#allocation11 + $0x108] sm:$0xff]
    %v2717 = vld [vmem:[#allocation11 + $0x110] sm:$0xff]
    %v2718 = vld [vmem:[#allocation11 + $0x118] sm:$0xff]
    %v2719 = vld [vmem:[#allocation11 + $0x120] sm:$0xff]
    %v2720 = vld [vmem:[#allocation11 + $0x128] sm:$0xff]
    %v2721 = vld [vmem:[#allocation11 + $0x130] sm:$0xff]
    %v2722 = vld [vmem:[#allocation11 + $0x138] sm:$0xff]
    %v2723 = vld [vmem:[#allocation11 + $0x140] sm:$0xff]
    %v2724 = vld [vmem:[#allocation11 + $0x148] sm:$0xff]
    %v2725 = vld [vmem:[#allocation11 + $0x150] sm:$0xff]
    %v2726 = vld [vmem:[#allocation11 + $0x158] sm:$0xff]
    %v2727 = vld [vmem:[#allocation11 + $0x160] sm:$0xff]
    %v2728 = vld [vmem:[#allocation11 + $0x168] sm:$0xff]
    %v2729 = vld [vmem:[#allocation11 + $0x170] sm:$0xff]
    %v2730 = vld [vmem:[#allocation11 + $0x178] sm:$0xff]
    %v2731 = vld [vmem:[#allocation11 + $0x180] sm:$0xff]
    %v2732 = vld [vmem:[#allocation11 + $0x188] sm:$0xff]
    %v2733 = vld [vmem:[#allocation11 + $0x190] sm:$0xff]
    %v2734 = vld [vmem:[#allocation11 + $0x198] sm:$0xff]
    %v2735 = vld [vmem:[#allocation11 + $0x1a0] sm:$0xff]
    %v2736 = vld [vmem:[#allocation11 + $0x1a8] sm:$0xff]
    %v2737 = vld [vmem:[#allocation11 + $0x1b0] sm:$0xff]
    %v2738 = vld [vmem:[#allocation11 + $0x1b8] sm:$0xff]
    %v2739 = vld [vmem:[#allocation11 + $0x1c0] sm:$0xff]
    %v2740 = vld [vmem:[#allocation11 + $0x1c8] sm:$0xff]
    %v2741 = vld [vmem:[#allocation11 + $0x1d0] sm:$0xff]
    %v2742 = vld [vmem:[#allocation11 + $0x1d8] sm:$0xff]
    %v2743 = vld [vmem:[#allocation11 + $0x1e0] sm:$0xff]
    %v2744 = vld [vmem:[#allocation11 + $0x1e8] sm:$0xff]
    %v2745 = vld [vmem:[#allocation11 + $0x1f0] sm:$0xff]
    %v2746 = vld [vmem:[#allocation11 + $0x1f8] sm:$0xff]
    %v2747 = vld [vmem:[%s11] sm:$0x3]
    %v2749 = vlaneseq
    %v2750 = vshrl.u32 %v2749, 7
    %v2751 = vsub.s32 0, %v2750
    %v2752 = vrot.slane %v2747, %v2751
    %v2753 = vlaneseq
    %v2754 = vshrl.u32 %v2753, 7
    %v2755 = vsub.s32 1, %v2754
    %v2756 = vrot.slane %v2747, %v2755
    %v2823 = vunpack.c.l.b16 %v2683
    %v2824 = vunpack.c.h.b16 %v2683
    %v2825 = vunpack.c.l.b16 %v2684
    %v2826 = vunpack.c.h.b16 %v2684
    %v2827 = vunpack.c.l.b16 %v2685
    %v2828 = vunpack.c.h.b16 %v2685
    %v2829 = vunpack.c.l.b16 %v2686
    %v2830 = vunpack.c.h.b16 %v2686
    %v2831 = vunpack.c.l.b16 %v2687
    %v2832 = vunpack.c.h.b16 %v2687
    %v2833 = vunpack.c.l.b16 %v2688
    %v2834 = vunpack.c.h.b16 %v2688
    %v2835 = vunpack.c.l.b16 %v2689
    %v2836 = vunpack.c.h.b16 %v2689
    %v2837 = vunpack.c.l.b16 %v2690
    %v2838 = vunpack.c.h.b16 %v2690
    %v2839 = vunpack.c.l.b16 %v2691
    %v2840 = vunpack.c.h.b16 %v2691
    %v2841 = vunpack.c.l.b16 %v2692
    %v2842 = vunpack.c.h.b16 %v2692
    %v2843 = vunpack.c.l.b16 %v2693
    %v2844 = vunpack.c.h.b16 %v2693
    %v2845 = vunpack.c.l.b16 %v2694
    %v2846 = vunpack.c.h.b16 %v2694
    %v2847 = vunpack.c.l.b16 %v2695
    %v2848 = vunpack.c.h.b16 %v2695
    %v2849 = vunpack.c.l.b16 %v2696
    %v2850 = vunpack.c.h.b16 %v2696
    %v2851 = vunpack.c.l.b16 %v2697
    %v2852 = vunpack.c.h.b16 %v2697
    %v2853 = vunpack.c.l.b16 %v2698
    %v2854 = vunpack.c.h.b16 %v2698
    %v2855 = vunpack.c.l.b16 %v2699
    %v2856 = vunpack.c.h.b16 %v2699
    %v2857 = vunpack.c.l.b16 %v2700
    %v2858 = vunpack.c.h.b16 %v2700
    %v2859 = vunpack.c.l.b16 %v2701
    %v2860 = vunpack.c.h.b16 %v2701
    %v2861 = vunpack.c.l.b16 %v2702
    %v2862 = vunpack.c.h.b16 %v2702
    %v2863 = vunpack.c.l.b16 %v2703
    %v2864 = vunpack.c.h.b16 %v2703
    %v2865 = vunpack.c.l.b16 %v2704
    %v2866 = vunpack.c.h.b16 %v2704
    %v2867 = vunpack.c.l.b16 %v2705
    %v2868 = vunpack.c.h.b16 %v2705
    %v2869 = vunpack.c.l.b16 %v2706
    %v2870 = vunpack.c.h.b16 %v2706
    %v2871 = vunpack.c.l.b16 %v2707
    %v2872 = vunpack.c.h.b16 %v2707
    %v2873 = vunpack.c.l.b16 %v2708
    %v2874 = vunpack.c.h.b16 %v2708
    %v2875 = vunpack.c.l.b16 %v2709
    %v2876 = vunpack.c.h.b16 %v2709
    %v2877 = vunpack.c.l.b16 %v2710
    %v2878 = vunpack.c.h.b16 %v2710
    %v2879 = vunpack.c.l.b16 %v2711
    %v2880 = vunpack.c.h.b16 %v2711
    %v2881 = vunpack.c.l.b16 %v2712
    %v2882 = vunpack.c.h.b16 %v2712
    %v2883 = vunpack.c.l.b16 %v2713
    %v2884 = vunpack.c.h.b16 %v2713
    %v2885 = vunpack.c.l.b16 %v2714
    %v2886 = vunpack.c.h.b16 %v2714
    %v2887 = vunpack.c.l.b16 %v2715
    %v2888 = vunpack.c.h.b16 %v2715
    %v2889 = vunpack.c.l.b16 %v2716
    %v2890 = vunpack.c.h.b16 %v2716
    %v2891 = vunpack.c.l.b16 %v2717
    %v2892 = vunpack.c.h.b16 %v2717
    %v2893 = vunpack.c.l.b16 %v2718
    %v2894 = vunpack.c.h.b16 %v2718
    %v2895 = vunpack.c.l.b16 %v2719
    %v2896 = vunpack.c.h.b16 %v2719
    %v2897 = vunpack.c.l.b16 %v2720
    %v2898 = vunpack.c.h.b16 %v2720
    %v2899 = vunpack.c.l.b16 %v2721
    %v2900 = vunpack.c.h.b16 %v2721
    %v2901 = vunpack.c.l.b16 %v2722
    %v2902 = vunpack.c.h.b16 %v2722
    %v2903 = vunpack.c.l.b16 %v2723
    %v2904 = vunpack.c.h.b16 %v2723
    %v2905 = vunpack.c.l.b16 %v2724
    %v2906 = vunpack.c.h.b16 %v2724
    %v2907 = vunpack.c.l.b16 %v2725
    %v2908 = vunpack.c.h.b16 %v2725
    %v2909 = vunpack.c.l.b16 %v2726
    %v2910 = vunpack.c.h.b16 %v2726
    %v2911 = vunpack.c.l.b16 %v2727
    %v2912 = vunpack.c.h.b16 %v2727
    %v2913 = vunpack.c.l.b16 %v2728
    %v2914 = vunpack.c.h.b16 %v2728
    %v2915 = vunpack.c.l.b16 %v2729
    %v2916 = vunpack.c.h.b16 %v2729
    %v2917 = vunpack.c.l.b16 %v2730
    %v2918 = vunpack.c.h.b16 %v2730
    %v2919 = vunpack.c.l.b16 %v2731
    %v2920 = vunpack.c.h.b16 %v2731
    %v2921 = vunpack.c.l.b16 %v2732
    %v2922 = vunpack.c.h.b16 %v2732
    %v2923 = vunpack.c.l.b16 %v2733
    %v2924 = vunpack.c.h.b16 %v2733
    %v2925 = vunpack.c.l.b16 %v2734
    %v2926 = vunpack.c.h.b16 %v2734
    %v2927 = vunpack.c.l.b16 %v2735
    %v2928 = vunpack.c.h.b16 %v2735
    %v2929 = vunpack.c.l.b16 %v2736
    %v2930 = vunpack.c.h.b16 %v2736
    %v2931 = vunpack.c.l.b16 %v2737
    %v2932 = vunpack.c.h.b16 %v2737
    %v2933 = vunpack.c.l.b16 %v2738
    %v2934 = vunpack.c.h.b16 %v2738
    %v2935 = vunpack.c.l.b16 %v2739
    %v2936 = vunpack.c.h.b16 %v2739
    %v2937 = vunpack.c.l.b16 %v2740
    %v2938 = vunpack.c.h.b16 %v2740
    %v2939 = vunpack.c.l.b16 %v2741
    %v2940 = vunpack.c.h.b16 %v2741
    %v2941 = vunpack.c.l.b16 %v2742
    %v2942 = vunpack.c.h.b16 %v2742
    %v2943 = vunpack.c.l.b16 %v2743
    %v2944 = vunpack.c.h.b16 %v2743
    %v2945 = vunpack.c.l.b16 %v2744
    %v2946 = vunpack.c.h.b16 %v2744
    %v2947 = vunpack.c.l.b16 %v2745
    %v2948 = vunpack.c.h.b16 %v2745
    %v2949 = vunpack.c.l.b16 %v2746
    %v2950 = vunpack.c.h.b16 %v2746
    %v2951 = vpack.c.b16 %v2825, %v2823
    %v2952 = vpack.c.b16 %v2826, %v2824
    %v2953 = vpack.c.b16 %v2829, %v2827
    %v2954 = vpack.c.b16 %v2830, %v2828
    %v2955 = vpack.c.b16 %v2833, %v2831
    %v2956 = vpack.c.b16 %v2834, %v2832
    %v2957 = vpack.c.b16 %v2837, %v2835
    %v2958 = vpack.c.b16 %v2838, %v2836
    %v2959 = vpack.c.b16 %v2841, %v2839
    %v2960 = vpack.c.b16 %v2842, %v2840
    %v2961 = vpack.c.b16 %v2845, %v2843
    %v2962 = vpack.c.b16 %v2846, %v2844
    %v2963 = vpack.c.b16 %v2849, %v2847
    %v2964 = vpack.c.b16 %v2850, %v2848
    %v2965 = vpack.c.b16 %v2853, %v2851
    %v2966 = vpack.c.b16 %v2854, %v2852
    %v2967 = vpack.c.b16 %v2857, %v2855
    %v2968 = vpack.c.b16 %v2858, %v2856
    %v2969 = vpack.c.b16 %v2861, %v2859
    %v2970 = vpack.c.b16 %v2862, %v2860
    %v2971 = vpack.c.b16 %v2865, %v2863
    %v2972 = vpack.c.b16 %v2866, %v2864
    %v2973 = vpack.c.b16 %v2869, %v2867
    %v2974 = vpack.c.b16 %v2870, %v2868
    %v2975 = vpack.c.b16 %v2873, %v2871
    %v2976 = vpack.c.b16 %v2874, %v2872
    %v2977 = vpack.c.b16 %v2877, %v2875
    %v2978 = vpack.c.b16 %v2878, %v2876
    %v2979 = vpack.c.b16 %v2881, %v2879
    %v2980 = vpack.c.b16 %v2882, %v2880
    %v2981 = vpack.c.b16 %v2885, %v2883
    %v2982 = vpack.c.b16 %v2886, %v2884
    %v2983 = vpack.c.b16 %v2889, %v2887
    %v2984 = vpack.c.b16 %v2890, %v2888
    %v2985 = vpack.c.b16 %v2893, %v2891
    %v2986 = vpack.c.b16 %v2894, %v2892
    %v2987 = vpack.c.b16 %v2897, %v2895
    %v2988 = vpack.c.b16 %v2898, %v2896
    %v2989 = vpack.c.b16 %v2901, %v2899
    %v2990 = vpack.c.b16 %v2902, %v2900
    %v2991 = vpack.c.b16 %v2905, %v2903
    %v2992 = vpack.c.b16 %v2906, %v2904
    %v2993 = vpack.c.b16 %v2909, %v2907
    %v2994 = vpack.c.b16 %v2910, %v2908
    %v2995 = vpack.c.b16 %v2913, %v2911
    %v2996 = vpack.c.b16 %v2914, %v2912
    %v2997 = vpack.c.b16 %v2917, %v2915
    %v2998 = vpack.c.b16 %v2918, %v2916
    %v2999 = vpack.c.b16 %v2921, %v2919
    %v3000 = vpack.c.b16 %v2922, %v2920
    %v3001 = vpack.c.b16 %v2925, %v2923
    %v3002 = vpack.c.b16 %v2926, %v2924
    %v3003 = vpack.c.b16 %v2929, %v2927
    %v3004 = vpack.c.b16 %v2930, %v2928
    %v3005 = vpack.c.b16 %v2933, %v2931
    %v3006 = vpack.c.b16 %v2934, %v2932
    %v3007 = vpack.c.b16 %v2937, %v2935
    %v3008 = vpack.c.b16 %v2938, %v2936
    %v3009 = vpack.c.b16 %v2941, %v2939
    %v3010 = vpack.c.b16 %v2942, %v2940
    %v3011 = vpack.c.b16 %v2945, %v2943
    %v3012 = vpack.c.b16 %v2946, %v2944
    %v3013 = vpack.c.b16 %v2949, %v2947
    %v3014 = vpack.c.b16 %v2950, %v2948
    %3079 = vmatprep.subr.bf16.mxu0 %v2952
    %3080 = vmatpush1.bf16.msra.mxu0 %v2951
    %3081 = vmatprep.subr.bf16.mxu0 %v2954
    %3082 = vmatpush1.bf16.msra.mxu0 %v2953
    %3083 = vmatprep.subr.bf16.mxu0 %v2956
    %3084 = vmatpush1.bf16.msra.mxu0 %v2955
    %3085 = vmatprep.subr.bf16.mxu0 %v2958
    %3086 = vmatpush1.bf16.msra.mxu0 %v2957
    %3087 = vmatprep.subr.bf16.mxu0 %v2960
    %3088 = vmatpush1.bf16.msra.mxu0 %v2959
    %3089 = vmatprep.subr.bf16.mxu0 %v2962
    %3090 = vmatpush1.bf16.msra.mxu0 %v2961
    %3091 = vmatprep.subr.bf16.mxu0 %v2964
    %3092 = vmatpush1.bf16.msra.mxu0 %v2963
    %3093 = vmatprep.subr.bf16.mxu0 %v2966
    %3094 = vmatpush1.bf16.msra.mxu0 %v2965
    %3095 = vmatprep.subr.bf16.mxu0 %v2968
    %3096 = vmatpush1.bf16.msra.mxu0 %v2967
    %3097 = vmatprep.subr.bf16.mxu0 %v2970
    %3098 = vmatpush1.bf16.msra.mxu0 %v2969
    %3099 = vmatprep.subr.bf16.mxu0 %v2972
    %3100 = vmatpush1.bf16.msra.mxu0 %v2971
    %3101 = vmatprep.subr.bf16.mxu0 %v2974
    %3102 = vmatpush1.bf16.msra.mxu0 %v2973
    %3103 = vmatprep.subr.bf16.mxu0 %v2976
    %3104 = vmatpush1.bf16.msra.mxu0 %v2975
    %3105 = vmatprep.subr.bf16.mxu0 %v2978
    %3106 = vmatpush1.bf16.msra.mxu0 %v2977
    %3107 = vmatprep.subr.bf16.mxu0 %v2980
    %3108 = vmatpush1.bf16.msra.mxu0 %v2979
    %3109 = vmatprep.subr.bf16.mxu0 %v2982
    %3110 = vmatpush1.bf16.msra.mxu0 %v2981
    %3111 = vmatprep.mubr.bf16.mxu0 %v2680
    %3112 = vmatmul.mubr.bf16.gmra.mrb[0].mxu0 %v2679
    %v3113 = vpop.f32.mrb[0].mxu0
    %v3114 = vadd.f32 %v2752, %v3113
    %v3115 = vpop.f32.mrb[0].mxu0
    %v3116 = vadd.f32 %v2756, %v3115
    %v3117 = vpop.f32.mrb[0].mxu0
    %v3118 = vadd.f32 %v2752, %v3117
    %v3119 = vpop.f32.mrb[0].mxu0
    %v3120 = vadd.f32 %v2756, %v3119
    %3121 = vdwg.mxu0
    %3122 = vmatprep.subr.bf16.mxu0 %v2984
    %3123 = vmatpush1.bf16.msra.mxu0 %v2983
    %3124 = vmatprep.subr.bf16.mxu0 %v2986
    %3125 = vmatpush1.bf16.msra.mxu0 %v2985
    %3126 = vmatprep.subr.bf16.mxu0 %v2988
    %3127 = vmatpush1.bf16.msra.mxu0 %v2987
    %3128 = vmatprep.subr.bf16.mxu0 %v2990
    %3129 = vmatpush1.bf16.msra.mxu0 %v2989
    %3130 = vmatprep.subr.bf16.mxu0 %v2992
    %3131 = vmatpush1.bf16.msra.mxu0 %v2991
    %3132 = vmatprep.subr.bf16.mxu0 %v2994
    %3133 = vmatpush1.bf16.msra.mxu0 %v2993
    %3134 = vmatprep.subr.bf16.mxu0 %v2996
    %3135 = vmatpush1.bf16.msra.mxu0 %v2995
    %3136 = vmatprep.subr.bf16.mxu0 %v2998
    %3137 = vmatpush1.bf16.msra.mxu0 %v2997
    %3138 = vmatprep.subr.bf16.mxu0 %v3000
    %3139 = vmatpush1.bf16.msra.mxu0 %v2999
    %3140 = vmatprep.subr.bf16.mxu0 %v3002
    %3141 = vmatpush1.bf16.msra.mxu0 %v3001
    %3142 = vmatprep.subr.bf16.mxu0 %v3004
    %3143 = vmatpush1.bf16.msra.mxu0 %v3003
    %3144 = vmatprep.subr.bf16.mxu0 %v3006
    %3145 = vmatpush1.bf16.msra.mxu0 %v3005
    %3146 = vmatprep.subr.bf16.mxu0 %v3008
    %3147 = vmatpush1.bf16.msra.mxu0 %v3007
    %3148 = vmatprep.subr.bf16.mxu0 %v3010
    %3149 = vmatpush1.bf16.msra.mxu0 %v3009
    %3150 = vmatprep.subr.bf16.mxu0 %v3012
    %3151 = vmatpush1.bf16.msra.mxu0 %v3011
    %3152 = vmatprep.subr.bf16.mxu0 %v3014
    %3153 = vmatpush1.bf16.msra.mxu0 %v3013
    %3154 = vmatprep.mubr.bf16.mxu0 %v2682
    %3155 = vmatmul.mubr.bf16.gmra.mrb[0].mxu0 %v2681
    %v3156 = vpop.f32.mrb[0].mxu0
    %v3157 = vadd.f32 %v3114, %v3156
    %v3158 = vpop.f32.mrb[0].mxu0
    %v3159 = vadd.f32 %v3116, %v3158
    %v3160 = vpop.f32.mrb[0].mxu0
    %v3161 = vadd.f32 %v3118, %v3160
    %v3162 = vpop.f32.mrb[0].mxu0
    %v3163 = vadd.f32 %v3120, %v3162
    %3164 = vdwg.mxu0
    %v3165 = vadd.f32 %v3157, %v2109
    %v3166 = vadd.f32 %v3159, %v2110
    %v3167 = vadd.f32 %v3161, %v2111
    %v3168 = vadd.f32 %v3163, %v2112
    %v3169 = vadd.f32 %v3165, %v3166
    %3170 = vadd.xlane.f32.xlu0 %v3169
    %v3171 = vpop.xlane.xlu0 %3170
    %v3172 = vadd.f32 %v3167, %v3168
    %3173 = vadd.xlane.f32.xlu0 %v3172
    %v3174 = vpop.xlane.xlu0 %3173
    %v3175 = vmul.f32 %v3171, %v2054
    %v3176 = vmul.f32 %v3174, %v2054
    %v3177 = vsub.f32 %v3165, %v3175
    %v3178 = vsub.f32 %v3166, %v3175
    %v3179 = vsub.f32 %v3167, %v3176
    %v3180 = vsub.f32 %v3168, %v3176
    %v3181 = vmul.f32 %v3177, %v3177
    %v3182 = vmul.f32 %v3178, %v3178
    %v3183 = vmul.f32 %v3179, %v3179
    %v3184 = vmul.f32 %v3180, %v3180
    %v3185 = vadd.f32 %v3181, %v3182
    %3186 = vadd.xlane.f32.xlu0 %v3185
    %v3187 = vpop.xlane.xlu0 %3186
    %v3188 = vadd.f32 %v3183, %v3184
    %3189 = vadd.xlane.f32.xlu0 %v3188
    %v3190 = vpop.xlane.xlu0 %3189
    %v3191 = vmul.f32 %v3187, %v2054
    %v3192 = vmul.f32 %v3190, %v2054
    %v3193 = vadd.f32 %v3191, 1e-05
    %v3194 = vadd.f32 %v3192, 1e-05
    %v3195 = vrsqrt.pop %v3193
    %v3196 = vrsqrt.pop %v3194
    %v3197 = vmul.f32 %v3177, %v3195
    %v3198 = vmul.f32 %v3178, %v3195
    %v3199 = vmul.f32 %v3179, %v3196
    %v3200 = vmul.f32 %v3180, %v3196
    %v3201 = vld [vmem:[%s12] sm:$0x3]
    %v3203 = vlaneseq
    %v3204 = vshrl.u32 %v3203, 7
    %v3205 = vsub.s32 0, %v3204
    %v3206 = vrot.slane %v3201, %v3205
    %v3207 = vlaneseq
    %v3208 = vshrl.u32 %v3207, 7
    %v3209 = vsub.s32 1, %v3208
    %v3210 = vrot.slane %v3201, %v3209
    %v3213 = vmul.f32 %v3197, %v3206
    %v3214 = vmul.f32 %v3198, %v3210
    %v3215 = vmul.f32 %v3199, %v3206
    %v3216 = vmul.f32 %v3200, %v3210
    %v3217 = vld [vmem:[%s13] sm:$0x3]
    %v3219 = vlaneseq
    %v3220 = vshrl.u32 %v3219, 7
    %v3221 = vsub.s32 0, %v3220
    %v3222 = vrot.slane %v3217, %v3221
    %v3223 = vlaneseq
    %v3224 = vshrl.u32 %v3223, 7
    %v3225 = vsub.s32 1, %v3224
    %v3226 = vrot.slane %v3217, %v3225
    %v3229 = vadd.f32 %v3213, %v3222
    %v3230 = vadd.f32 %v3214, %v3226
    %v3231 = vadd.f32 %v3215, %v3222
    %v3232 = vadd.f32 %v3216, %v3226
    %3233 = vst [vmem:[#allocation13] sm:$0xff] %v3229
    %3234 = vst [vmem:[#allocation13 + $0x8] sm:$0xff] %v3230
    %3235 = vst [vmem:[#allocation13 + $0x10] sm:$0xff] %v3231
    %3236 = vst [vmem:[#allocation13 + $0x18] sm:$0xff] %v3232
    // Predicated region
    $region82: #{tpu_custom_call.1} parent=1 // pred_check
      _
    $region83: #{tpu_custom_call.1} parent=1 // pred_check_branch
      %3238 = sbr.rel (0) target = $region85
    $region84: #{tpu_custom_call.1} parent=1 // pred_region
      %s3240 = ssub.s32 512, 512
      %3241 = vsyncadd [#allocation4], %s3240
      %s3242 = sshll.u32 [#allocation13], 4
      %s3243 = int_to_ptr.vmem [resolvable:$true] %s3242
      %3248 = dma.vmem_to_hbm [thread:$0]  %s3243, 512, %s14, [#allocation4], 256, 256, 16
    $region85: #{tpu_custom_call.1} parent=1 // pred_fallthru
      _
    // Predicated region
    $region86: #{tpu_custom_call.1} parent=1 // pred_check
      _
    $region87: #{tpu_custom_call.1} parent=1 // pred_check_branch
      %3250 = sbr.rel (0) target = $region89
    $region88: #{tpu_custom_call.1} parent=1 // pred_region
      %3251 = dma.done [#allocation4], 512
    $region89: #{tpu_custom_call.1} parent=1 // pred_fallthru
      _
    %3252 = vsyncpa [#allocation3], 1
    %3253 = vsyncpa [#allocation6], 1
    %3254 = vsyncpa [#allocation9], 1
    %3255 = vsyncpa [#allocation12], 1
    %3256 = vsyncpa [#allocation4], 1

</llo_original>
